<compile_context>
chip_gen: v5e
topology: v5e:2x2
jax: 0.10.0
libtpu: 0.0.40
codegen_flags: <defaults>
</compile_context>

<pallas_src>
import functools

import jax
import jax.numpy as jnp
from jax.experimental import pallas as pl
from jax.experimental.pallas import tpu as pltpu


def _sae_kernel(x_ref, w_enc_ref, b_enc_ref, w_dec_ref, b_dec_ref,
                xrec_ref, acts_ref, l2_part_ref, l1_part_ref,
                acc_ref, *, matmul_dtype):
    h = pl.program_id(1)
    nh = pl.num_programs(1)

    x = x_ref[...].astype(jnp.float32)                  # (tb, D)
    b_dec = b_dec_ref[...]                              # (1, D) fp32 (loaded once per step)

    x_cent = x - b_dec                                  # fp32 elementwise (VPU)

    # Encoder tile: (tb, D) @ (D, th) on the MXU, fp32 accumulation; fp32 bias + ReLU.
    pre = jnp.dot(x_cent.astype(matmul_dtype), w_enc_ref[...],
                  preferred_element_type=jnp.float32) + b_enc_ref[...]
    acts = jnp.maximum(pre, 0.0)                        # (tb, th) fp32, >= 0

    acts_ref[...] = acts.astype(acts_ref.dtype)
    # Lane-dense per-(i,h) L1 partial: sublane-only reduce in-kernel; acts are
    # post-ReLU (>= 0) so no abs() is needed. Cross-lane sum happens outside.
    l1_part_ref[0] = jnp.sum(acts, axis=0, keepdims=True)          # (1, th)

    # Decoder partial: accumulate (tb, th) @ (th, D) into the fp32 scratch.
    @pl.when(h == 0)
    def _():
        acc_ref[...] = jnp.zeros_like(acc_ref)

    acc_ref[...] += jnp.dot(acts.astype(matmul_dtype), w_dec_ref[...],
                            preferred_element_type=jnp.float32)

    @pl.when(h == nh - 1)
    def _():
        x_rec = acc_ref[...] + b_dec                    # (tb, D) fp32
        xrec_ref[...] = x_rec.astype(xrec_ref.dtype)
        diff = x_rec - x
        l2_part_ref[0] = jnp.sum(diff * diff, axis=0, keepdims=True)  # (1, D)


def _vmem_capacity_bytes():
    """Physical VMEM per TensorCore; conservative fallback if the query fails."""
    try:
        return int(pltpu.get_tpu_info().vmem_capacity_bytes)
    except Exception:
        return 64 << 20     # v7x per-core capacity == the safe lower bound


def autoencoder_forward(x, w_enc, b_enc, w_dec, b_dec, *, l1_coeff,
                        tb=256, th=512, compute_dtype=jnp.bfloat16,
                        out_dtype=None):
    """SAE forward pass as a batch- and dict-tiled Pallas kernel.

    x:     (B, act_size)
    w_enc: (act_size, d_hidden)    b_enc: (d_hidden,)
    w_dec: (d_hidden, act_size)    b_dec: (act_size,)
    compute_dtype: MXU operand dtype (default bf16; accumulation is always fp32).
                   Pass jnp.float32 to match the PyTorch fp32 module exactly.
    out_dtype:     storage dtype for x_reconstruct / acts (default: x.dtype).
    Returns (loss, x_reconstruct, acts, l2_loss, l1_loss); losses are fp32 scalars.
    """
    B, D = x.shape
    H = w_enc.shape[1]

    tb = min(tb, B)
    th = min(th, H)
    assert B % tb == 0 and tb % 8 == 0, "batch tile must divide B and be a multiple of 8"
    assert H % th == 0 and (th % 128 == 0 or th == H), \
        "dict tile must divide d_hidden and be lane-aligned (multiple of 128)"
    n_b, n_h = B // tb, H // th

    matmul_dtype = jnp.dtype(compute_dtype)
    out_dtype = jnp.dtype(out_dtype) if out_dtype is not None else x.dtype

    # Cast weights once at the call boundary (halves weight DMA / VMEM for bf16);
    # biases and all elementwise math stay fp32 (v5e VPU/EUP have no bf16 path).
    w_enc_c = w_enc.astype(matmul_dtype)
    w_dec_c = w_dec.astype(matmul_dtype)
    b_enc2 = b_enc.reshape(1, H).astype(jnp.float32)
    b_dec2 = b_dec.reshape(1, D).astype(jnp.float32)

    kernel = functools.partial(_sae_kernel, matmul_dtype=matmul_dtype)

    out_shapes = (
        jax.ShapeDtypeStruct((B, D), out_dtype),             # x_reconstruct
        jax.ShapeDtypeStruct((B, H), out_dtype),             # acts
        jax.ShapeDtypeStruct((n_b, 1, D), jnp.float32),      # per-batch-tile L2 partials
        jax.ShapeDtypeStruct((n_b, 1, H), jnp.float32),      # per-(batch,dict)-tile L1 partials
    )

    w_isz = matmul_dtype.itemsize
    x_isz = x.dtype.itemsize
    o_isz = out_dtype.itemsize
    # Per-buffer sizes counted once; factor 2 == default double-buffered pipelining.
    vmem_needed = (
        2 * tb * D * x_isz            # x tile
        + 2 * D * th * w_isz          # W_enc tile
        + 2 * th * 4                  # b_enc tile
        + 2 * th * D * w_isz          # W_dec tile
        + 2 * D * 4                   # b_dec
        + 2 * tb * D * o_isz          # x_reconstruct tile
        + 2 * tb * th * o_isz         # acts tile
        + 2 * (D + th) * 4            # loss partial tiles
        + tb * D * 4                  # fp32 decoder accumulator (scratch, single copy)
    )
    vmem_cap = _vmem_capacity_bytes()
    vmem_limit = int(min(max(vmem_needed + (4 << 20), 32 << 20),
                         vmem_cap - (8 << 20)))

    cost = pl.CostEstimate(
        flops=4 * B * D * H,                                   # two matmuls, 2*B*D*H each
        transcendentals=0,
        bytes_accessed=(B * D * x_isz                          # x (read once per batch tile)
                        + n_b * (2 * D * H * w_isz + (D + H) * 4)  # weights/biases per batch tile
                        + B * D * o_isz + B * H * o_isz        # outputs
                        + n_b * (D + H) * 4),                  # loss partials
    )

    xrec, acts, l2_parts, l1_parts = pl.pallas_call(
        kernel,
        out_shape=out_shapes,
        grid_spec=pltpu.PrefetchScalarGridSpec(
            num_scalar_prefetch=0,
            grid=(n_b, n_h),                                   # reduction (dict) axis last
            in_specs=[
                pl.BlockSpec((tb, D), lambda i, h: (i, 0)),    # x (constant over h -> no re-DMA)
                pl.BlockSpec((D, th), lambda i, h: (0, h)),    # W_enc tile
                pl.BlockSpec((1, th), lambda i, h: (0, h)),    # b_enc tile
                pl.BlockSpec((th, D), lambda i, h: (h, 0)),    # W_dec tile
                pl.BlockSpec((1, D), lambda i, h: (0, 0)),     # b_dec (grid-invariant)
            ],
            out_specs=[
                pl.BlockSpec((tb, D), lambda i, h: (i, 0)),       # x_reconstruct (written at last h)
                pl.BlockSpec((tb, th), lambda i, h: (i, h)),      # acts
                pl.BlockSpec((1, 1, D), lambda i, h: (i, 0, 0)),  # L2 partials (written at last h)
                pl.BlockSpec((1, 1, th), lambda i, h: (i, 0, h)),  # L1 partials
            ],
            scratch_shapes=[pltpu.VMEM((tb, D), jnp.float32)],    # decoder accumulator
        ),
        compiler_params=pltpu.CompilerParams(
            dimension_semantics=("parallel", "arbitrary"),  # batch megacore-shardable; dict is a reduction
            vmem_limit_bytes=vmem_limit,
        ),
        cost_estimate=cost,
    )(x, w_enc_c, b_enc2, w_dec_c, b_dec2)

    # Finish the (tiny) scalar reductions outside the kernel.
    l2 = jnp.sum(l2_parts) / jnp.float32(B)            # sum(-1).mean(0)
    l1 = jnp.float32(l1_coeff) * jnp.sum(l1_parts)
    loss = l2 + l1
    return loss, xrec, acts, l2, l1


def init_params(key, act_size, d_hidden, dtype=jnp.float32):
    """Synthetic init mirroring the PyTorch __init__ shapes.

    W_enc/W_dec ~ kaiming_uniform-style U(-bound, bound); W_dec row-normalized; biases zero.
    """
    k1, k2 = jax.random.split(key)
    bound_enc = (2.0 ** 0.5) * (3.0 / d_hidden) ** 0.5
    bound_dec = (2.0 ** 0.5) * (3.0 / act_size) ** 0.5
    w_enc = jax.random.uniform(k1, (act_size, d_hidden), dtype,
                               minval=-bound_enc, maxval=bound_enc)
    w_dec = jax.random.uniform(k2, (d_hidden, act_size), dtype,
                               minval=-bound_dec, maxval=bound_dec)
    w_dec = w_dec / jnp.linalg.norm(w_dec, axis=-1, keepdims=True)
    b_enc = jnp.zeros((d_hidden,), dtype)
    b_dec = jnp.zeros((act_size,), dtype)
    return w_enc, b_enc, w_dec, b_dec


def _reference(x, w_enc, b_enc, w_dec, b_dec, l1_coeff, compute_dtype=None):
    mm = jnp.dtype(compute_dtype) if compute_dtype is not None else jnp.dtype(w_enc.dtype)
    xf = x.astype(jnp.float32)
    x_cent = xf - b_dec.astype(jnp.float32)
    pre = jnp.dot(x_cent.astype(mm), w_enc.astype(mm),
                  preferred_element_type=jnp.float32) + b_enc.astype(jnp.float32)
    acts = jnp.maximum(pre, 0.0)
    x_rec = jnp.dot(acts.astype(mm), w_dec.astype(mm),
                    preferred_element_type=jnp.float32) + b_dec.astype(jnp.float32)
    l2 = jnp.mean(jnp.sum((x_rec - xf) ** 2, -1), 0)
    l1 = l1_coeff * jnp.sum(acts)
    return l2 + l1, x_rec.astype(x.dtype), acts.astype(x.dtype), l2, l1


if __name__ == "__main__":
    # Small but MXU-/lane-aligned sizes exercising both grid axes:
    # batch=512 (2 batch tiles of 256), act_size=256, dict=1024 (2 dict tiles of 512).
    B, ACT_SIZE, D_HIDDEN = 512, 256, 1024
    L1_COEFF = 3e-4

    key = jax.random.PRNGKey(0)
    kx, kp = jax.random.split(key)
    x = jax.random.normal(kx, (B, ACT_SIZE), jnp.float32)
    w_enc, b_enc, w_dec, b_dec = init_params(kp, ACT_SIZE, D_HIDDEN)

    # --- fp32 MXU-operand path (matches the module with enc_dtype='fp32') ---
    loss, x_rec, acts, l2, l1 = autoencoder_forward(
        x, w_enc, b_enc, w_dec, b_dec, l1_coeff=L1_COEFF,
        tb=256, th=512, compute_dtype=jnp.float32)
    jax.block_until_ready((loss, x_rec, acts, l2, l1))

    r_loss, r_xrec, r_acts, r_l2, r_l1 = _reference(x, w_enc, b_enc, w_dec, b_dec, L1_COEFF)
    # Tolerances absorb MXU-pass / XLA default-precision differences for fp32 matmuls.
    assert jnp.allclose(x_rec, r_xrec, atol=5e-2, rtol=5e-2)
    assert jnp.allclose(acts, r_acts, atol=5e-2, rtol=5e-2)
    assert jnp.allclose(l2, r_l2, rtol=3e-2, atol=1e-1)
    assert jnp.allclose(l1, r_l1, rtol=3e-2, atol=1e-1)
    assert jnp.allclose(loss, r_loss, rtol=3e-2, atol=1e-1)

    # --- default path: bf16 MXU operands, fp32 accumulation (halves weight DMA/VMEM) ---
    loss_bf, x_rec_bf, acts_bf, l2_bf, l1_bf = autoencoder_forward(
        x, w_enc, b_enc, w_dec, b_dec, l1_coeff=L1_COEFF)
    jax.block_until_ready((loss_bf, x_rec_bf, acts_bf, l2_bf, l1_bf))
    rb_loss, *_ = _reference(x, w_enc, b_enc, w_dec, b_dec, L1_COEFF,
                             compute_dtype=jnp.bfloat16)
    assert bool(jnp.isfinite(loss_bf))
    assert abs(float(loss_bf) - float(rb_loss)) <= 5e-2 * abs(float(rb_loss)) + 1.0

    print("KERNEL_OK")
</pallas_src>

<mosaic_0001>
module attributes {stable_mosaic.version = 11 : i64} {
  func.func @_sae_kernel(%arg0: i32, %arg1: i32, %arg2: memref<256x256xf32, #tpu.memory_space<vmem>>, %arg3: memref<256x512xf32, #tpu.memory_space<vmem>>, %arg4: memref<1x512xf32, #tpu.memory_space<vmem>>, %arg5: memref<512x256xf32, #tpu.memory_space<vmem>>, %arg6: memref<1x256xf32, #tpu.memory_space<vmem>>, %arg7: memref<256x256xf32, #tpu.memory_space<vmem>>, %arg8: memref<256x512xf32, #tpu.memory_space<vmem>>, %arg9: memref<1x1x256xf32, #tpu.memory_space<vmem>>, %arg10: memref<1x1x512xf32, #tpu.memory_space<vmem>>, %arg11: memref<256x256xf32, #tpu.memory_space<vmem>>) attributes {dimension_semantics = [#tpu.dimension_semantics<parallel>, #tpu.dimension_semantics<arbitrary>], iteration_bounds = array<i64: 2, 2>, scalar_prefetch = 0 : i64, scratch_operands = 1 : i64, tpu.core_type = #tpu.core_type<tc>, window_params = [{transform_indices = @transform_0, window_bounds = array<i64: 256, 256>}, {transform_indices = @transform_1, window_bounds = array<i64: 256, 512>}, {transform_indices = @transform_2, window_bounds = array<i64: 1, 512>}, {transform_indices = @transform_3, window_bounds = array<i64: 512, 256>}, {pipeline_mode = #tpu.pipeline_mode<synchronous>, transform_indices = @transform_4, window_bounds = array<i64: 1, 256>}, {transform_indices = @transform_5, window_bounds = array<i64: 256, 256>}, {transform_indices = @transform_6, window_bounds = array<i64: 256, 512>}, {transform_indices = @transform_7, window_bounds = array<i64: 1, 1, 256>}, {transform_indices = @transform_8, window_bounds = array<i64: 1, 1, 512>}]} {
    %c0 = arith.constant 0 : index
    %c0_0 = arith.constant 0 : index
    %0 = vector.load %arg2[%c0, %c0_0] : memref<256x256xf32, #tpu.memory_space<vmem>>, vector<256x256xf32>
    %c0_1 = arith.constant 0 : index
    %c0_2 = arith.constant 0 : index
    %1 = vector.load %arg6[%c0_1, %c0_2] : memref<1x256xf32, #tpu.memory_space<vmem>>, vector<1x256xf32>
    %2 = vector.broadcast %1 : vector<1x256xf32> to vector<256x256xf32>
    %3 = arith.subf %0, %2 : vector<256x256xf32>
    %c0_3 = arith.constant 0 : index
    %c0_4 = arith.constant 0 : index
    %4 = vector.load %arg3[%c0_3, %c0_4] : memref<256x512xf32, #tpu.memory_space<vmem>>, vector<256x512xf32>
    %cst = arith.constant dense<0.000000e+00> : vector<256x512xf32>
    %5 = tpu.matmul %3, %4, %cst {dimension_numbers = #tpu.dot_dimension_numbers<[1], [0], [0], [1], [0, 0, 1, 1], [], []>} : vector<256x256xf32>, vector<256x512xf32>, vector<256x512xf32> -> vector<256x512xf32>
    %c0_5 = arith.constant 0 : index
    %c0_6 = arith.constant 0 : index
    %6 = vector.load %arg4[%c0_5, %c0_6] : memref<1x512xf32, #tpu.memory_space<vmem>>, vector<1x512xf32>
    %7 = vector.broadcast %6 : vector<1x512xf32> to vector<256x512xf32>
    %8 = arith.addf %5, %7 : vector<256x512xf32>
    %cst_7 = arith.constant 0.000000e+00 : f32
    %9 = vector.broadcast %cst_7 : f32 to vector<256x512xf32>
    %10 = arith.maximumf %8, %9 : vector<256x512xf32>
    %c0_8 = arith.constant 0 : index
    %c0_9 = arith.constant 0 : index
    %11 = vector.load %arg8[%c0_8, %c0_9] : memref<256x512xf32, #tpu.memory_space<vmem>>, vector<256x512xf32>
    tpu.vector_store %arg8[%c0_8, %c0_9], %10 {strides = array<i32>} : memref<256x512xf32, #tpu.memory_space<vmem>>, vector<256x512xf32>,
    %cst_10 = arith.constant dense<0.000000e+00> : vector<512xf32>
    %12 = vector.multi_reduction <add>, %10, %cst_10 [0] : vector<256x512xf32> to vector<512xf32>
    %13 = vector.shape_cast %12 : vector<512xf32> to vector<1x512xf32>
    %c0_11 = arith.constant 0 : index
    %c0_12 = arith.constant 0 : index
    %c0_13 = arith.constant 0 : index
    %14 = vector.load %arg10[%c0_11, %c0_12, %c0_13] : memref<1x1x512xf32, #tpu.memory_space<vmem>>, vector<1x1x512xf32>
    %15 = vector.shape_cast %14 : vector<1x1x512xf32> to vector<1x512xf32>
    %16 = vector.shape_cast %13 : vector<1x512xf32> to vector<1x1x512xf32>
    tpu.vector_store %arg10[%c0_11, %c0_12, %c0_13], %16 {strides = array<i32>} : memref<1x1x512xf32, #tpu.memory_space<vmem>>, vector<1x1x512xf32>,
    %c0_i32 = arith.constant 0 : i32
    %17 = arith.cmpi eq, %arg1, %c0_i32 : i32
    %18 = arith.extui %17 : i1 to i32
    %c0_i32_14 = arith.constant 0 : i32
    %19 = arith.cmpi ne, %18, %c0_i32_14 : i32
    scf.if %19 {
      %cst_23 = arith.constant 0.000000e+00 : f32
      %28 = vector.broadcast %cst_23 : f32 to vector<256x256xf32>
      %c0_24 = arith.constant 0 : index
      %c0_25 = arith.constant 0 : index
      %29 = vector.load %arg11[%c0_24, %c0_25] : memref<256x256xf32, #tpu.memory_space<vmem>>, vector<256x256xf32>
      tpu.vector_store %arg11[%c0_24, %c0_25], %28 {strides = array<i32>} : memref<256x256xf32, #tpu.memory_space<vmem>>, vector<256x256xf32>,
    } else {
    }
    %c0_15 = arith.constant 0 : index
    %c0_16 = arith.constant 0 : index
    %20 = vector.load %arg11[%c0_15, %c0_16] : memref<256x256xf32, #tpu.memory_space<vmem>>, vector<256x256xf32>
    %c0_17 = arith.constant 0 : index
    %c0_18 = arith.constant 0 : index
    %21 = vector.load %arg5[%c0_17, %c0_18] : memref<512x256xf32, #tpu.memory_space<vmem>>, vector<512x256xf32>
    %cst_19 = arith.constant dense<0.000000e+00> : vector<256x256xf32>
    %22 = tpu.matmul %10, %21, %cst_19 {dimension_numbers = #tpu.dot_dimension_numbers<[1], [0], [0], [1], [0, 0, 1, 1], [], []>} : vector<256x512xf32>, vector<512x256xf32>, vector<256x256xf32> -> vector<256x256xf32>
    %23 = arith.addf %20, %22 : vector<256x256xf32>
    %c0_20 = arith.constant 0 : index
    %c0_21 = arith.constant 0 : index
    %24 = vector.load %arg11[%c0_20, %c0_21] : memref<256x256xf32, #tpu.memory_space<vmem>>, vector<256x256xf32>
    tpu.vector_store %arg11[%c0_20, %c0_21], %23 {strides = array<i32>} : memref<256x256xf32, #tpu.memory_space<vmem>>, vector<256x256xf32>,
    %c1_i32 = arith.constant 1 : i32
    %25 = arith.cmpi eq, %arg1, %c1_i32 : i32
    %26 = arith.extui %25 : i1 to i32
    %c0_i32_22 = arith.constant 0 : i32
    %27 = arith.cmpi ne, %26, %c0_i32_22 : i32
    scf.if %27 {
      %c0_23 = arith.constant 0 : index
      %c0_24 = arith.constant 0 : index
      %28 = vector.load %arg11[%c0_23, %c0_24] : memref<256x256xf32, #tpu.memory_space<vmem>>, vector<256x256xf32>
      %29 = vector.broadcast %1 : vector<1x256xf32> to vector<256x256xf32>
      %30 = arith.addf %28, %29 : vector<256x256xf32>
      %c0_25 = arith.constant 0 : index
      %c0_26 = arith.constant 0 : index
      %31 = vector.load %arg7[%c0_25, %c0_26] : memref<256x256xf32, #tpu.memory_space<vmem>>, vector<256x256xf32>
      tpu.vector_store %arg7[%c0_25, %c0_26], %30 {strides = array<i32>} : memref<256x256xf32, #tpu.memory_space<vmem>>, vector<256x256xf32>,
      %32 = arith.subf %30, %0 : vector<256x256xf32>
      %33 = arith.mulf %32, %32 : vector<256x256xf32>
      %cst_27 = arith.constant dense<0.000000e+00> : vector<256xf32>
      %34 = vector.multi_reduction <add>, %33, %cst_27 [0] : vector<256x256xf32> to vector<256xf32>
      %35 = vector.shape_cast %34 : vector<256xf32> to vector<1x256xf32>
      %c0_28 = arith.constant 0 : index
      %c0_29 = arith.constant 0 : index
      %c0_30 = arith.constant 0 : index
      %36 = vector.load %arg9[%c0_28, %c0_29, %c0_30] : memref<1x1x256xf32, #tpu.memory_space<vmem>>, vector<1x1x256xf32>
      %37 = vector.shape_cast %36 : vector<1x1x256xf32> to vector<1x256xf32>
      %38 = vector.shape_cast %35 : vector<1x256xf32> to vector<1x1x256xf32>
      tpu.vector_store %arg9[%c0_28, %c0_29, %c0_30], %38 {strides = array<i32>} : memref<1x1x256xf32, #tpu.memory_space<vmem>>, vector<1x1x256xf32>,
    } else {
    }
    return
  }
  func.func @transform_0(%arg0: i32, %arg1: i32) -> (i32, i32) {
    %c0_i32 = arith.constant 0 : i32
    %c0_i32_0 = arith.constant 0 : i32
    return %arg0, %c0_i32 : i32, i32
  }
  func.func @transform_1(%arg0: i32, %arg1: i32) -> (i32, i32) {
    %c0_i32 = arith.constant 0 : i32
    %c0_i32_0 = arith.constant 0 : i32
    return %c0_i32, %arg1 : i32, i32
  }
  func.func @transform_2(%arg0: i32, %arg1: i32) -> (i32, i32) {
    %c0_i32 = arith.constant 0 : i32
    %c0_i32_0 = arith.constant 0 : i32
    return %c0_i32, %arg1 : i32, i32
  }
  func.func @transform_3(%arg0: i32, %arg1: i32) -> (i32, i32) {
    %c0_i32 = arith.constant 0 : i32
    %c0_i32_0 = arith.constant 0 : i32
    return %arg1, %c0_i32 : i32, i32
  }
  func.func @transform_4(%arg0: i32, %arg1: i32) -> (i32, i32) {
    %c0_i32 = arith.constant 0 : i32
    %c0_i32_0 = arith.constant 0 : i32
    %c0_i32_1 = arith.constant 0 : i32
    return %c0_i32, %c0_i32_0 : i32, i32
  }
  func.func @transform_5(%arg0: i32, %arg1: i32) -> (i32, i32) {
    %c0_i32 = arith.constant 0 : i32
    %c0_i32_0 = arith.constant 0 : i32
    return %arg0, %c0_i32 : i32, i32
  }
  func.func @transform_6(%arg0: i32, %arg1: i32) -> (i32, i32) {
    %c0_i32 = arith.constant 0 : i32
    return %arg0, %arg1 : i32, i32
  }
  func.func @transform_7(%arg0: i32, %arg1: i32) -> (i32, i32, i32) {
    %c0_i32 = arith.constant 0 : i32
    %c0_i32_0 = arith.constant 0 : i32
    %c0_i32_1 = arith.constant 0 : i32
    return %arg0, %c0_i32, %c0_i32_0 : i32, i32, i32
  }
  func.func @transform_8(%arg0: i32, %arg1: i32) -> (i32, i32, i32) {
    %c0_i32 = arith.constant 0 : i32
    %c0_i32_0 = arith.constant 0 : i32
    return %arg0, %c0_i32, %arg1 : i32, i32, i32
  }
}

</mosaic_0001>

<llo_original>
// kernel: tpu_custom_call.1
$region0: #{tpu_custom_call.1}
  #allocation0 [shape = 'u32[]', space=smem, size = 0x4, offset = 0x4, fixed_abs, tag = 'smem constant byte address 0x4 - core index']
  #allocation1 [shape = 'u32[72,128]{1,0:T(1,128)}', space=vmem, size = 0x9000, scoped, tag = 'internal scratch']
  #allocation2 [shape = 'f32[256,256]{1,0:T(8,128)}', space=vmem, size = 0x40000, scoped, tag = 'scratch operand']
  %s0 = inlined_call_operand.hbm [shape: f32[512,256], index: 0, kind: input, shape index: {}]
  %s1 = inlined_call_operand.hbm [shape: f32[256,1024], index: 1, kind: input, shape index: {}]
  %s2 = inlined_call_operand.hbm [shape: f32[1,1024], index: 2, kind: input, shape index: {}]
  %s3 = inlined_call_operand.hbm [shape: f32[1024,256], index: 3, kind: input, shape index: {}]
  %s4 = inlined_call_operand.hbm [shape: f32[1,256], index: 4, kind: input, shape index: {}]
  %s5 = inlined_call_operand.hbm [shape: f32[512,256], index: 5, kind: output, shape index: {0}]
  %s6 = inlined_call_operand.hbm [shape: f32[512,1024], index: 6, kind: output, shape index: {1}]
  %s7 = inlined_call_operand.hbm [shape: f32[2,1,256], index: 7, kind: output, shape index: {2}]
  %s8 = inlined_call_operand.hbm [shape: f32[2,1,1024], index: 8, kind: output, shape index: {3}]
  %9 = xla_tuple %s5, %s6, %s7, %s8
  %s10 = sld [smem:[#allocation0]]
  $region105: #{tpu_custom_call.1} parent=0
    _
  %s12 = ssub.s32 1, %s10
  %s13 = scalar_select 0, %s12, %s10
  $region1: #{tpu_custom_call.1} parent=0
    #allocation3 [shape = 'u8[524288]{0}', space=vmem, size = 0x80000, scoped, tag = 'input window, operand 0']
    #allocation4 [shape = 's32[2]{0}', space=sflag, size = 0x8, scoped, tag = 'scoped memory for tpu_custom_call.1']
    #allocation5 [shape = 's32[2]{0}', space=sflag, size = 0x8, scoped, tag = 'scoped memory for tpu_custom_call.1']
    #allocation6 [shape = 'u8[1048576]{0}', space=vmem, size = 0x100000, scoped, tag = 'input window, operand 1']
    #allocation7 [shape = 's32[2]{0}', space=sflag, size = 0x8, scoped, tag = 'scoped memory for tpu_custom_call.1']
    #allocation8 [shape = 'u8[4096]{0}', space=vmem, size = 0x1000, scoped, tag = 'input window, operand 2']
    #allocation9 [shape = 'u8[1048576]{0}', space=vmem, size = 0x100000, scoped, tag = 'input window, operand 3']
    #allocation10 [shape = 's32[2]{0}', space=sflag, size = 0x8, scoped, tag = 'scoped memory for tpu_custom_call.1']
    #allocation11 [shape = 'u8[1024]{0}', space=vmem, size = 0x400, scoped, tag = 'input window, operand 4, single buffered']
    #allocation12 [shape = 'u8[524288]{0}', space=vmem, size = 0x80000, scoped, tag = 'output window, operand 0']
    #allocation13 [shape = 'u8[1048576]{0}', space=vmem, size = 0x100000, scoped, tag = 'output window, operand 1']
    #allocation14 [shape = 's32[2]{0}', space=sflag, size = 0x8, scoped, tag = 'scoped memory for tpu_custom_call.1']
    #allocation15 [shape = 'u8[2048]{0}', space=vmem, size = 0x800, scoped, tag = 'output window, operand 2']
    #allocation16 [shape = 'u8[4096]{0}', space=vmem, size = 0x1000, scoped, tag = 'output window, operand 3']
    #allocation17 [shape = 's32[2]{0}', space=sflag, size = 0x8, scoped, tag = 'scoped memory for tpu_custom_call.1']
    %14 = vsyncpa [#allocation4], 0
    %s15 = scalar_lea.sflag [#allocation4], 1
    %16 = vsyncpa %s15, 0
    %17 = vsyncpa [#allocation7], 0
    %s18 = scalar_lea.sflag [#allocation7], 1
    %19 = vsyncpa %s18, 0
    %20 = vsyncpa [#allocation10], 0
    %s21 = scalar_lea.sflag [#allocation10], 1
    %22 = vsyncpa %s21, 0
    %23 = vsyncpa [#allocation5], 0
    %s24 = scalar_lea.sflag [#allocation5], 1
    %25 = vsyncpa %s24, 0
    %26 = vsyncpa [#allocation14], 0
    %s27 = scalar_lea.sflag [#allocation14], 1
    %28 = vsyncpa %s27, 0
    %29 = vsyncpa [#allocation17], 0
    %s30 = scalar_lea.sflag [#allocation17], 1
    %31 = vsyncpa %s30, 0
    loop: start=0, step=1, limit=6
    $region2: #{tpu_custom_call.1} parent=1 // loop_pre_header
      _
    $region3: #{tpu_custom_call.1} parent=1 // loop_header
      %s33 = sphi 0, %s37
      %p34 = scmp.ge.s32.totalorder %s33, 6
      %s40 = sphi 0, %s52
      %s41 = sphi 0, %s48
      %s42 = sphi 0, %s40
      %s43 = sphi 0, %s41
      %s44 = sphi 0, %s42
      %s45 = sphi 0, %s43
      %s55 = sphi 0, %s57
      %s58 = sphi 0, %s55
      %s59 = sphi 0, %s58
      %s75 = sphi 0, %s59
      %s81 = sphi 0, %s83
      %s84 = sphi 0, %s81
      %s85 = sphi 0, %s84
      %s101 = sphi 0, %s85
      %s107 = sphi 0, %s109
      %s110 = sphi 0, %s107
      %s111 = sphi 0, %s110
      %s127 = sphi 0, %s111
      %s133 = sphi 0, %s135
      %s136 = sphi 0, %s133
      %s137 = sphi 0, %s136
      %s153 = sphi 0, %s137
      %s157 = sphi 0, %s157
      %s159 = sphi 0, %s157
      %s160 = sphi 0, %s159
      %s174 = sphi 0, %s160
      %s180 = sphi 0, %s182
      %s183 = sphi 0, %s180
      %s184 = sphi 0, %s183
      %s200 = sphi 0, %s184
      %s208 = sphi 0, %s210
      %s211 = sphi 0, %s208
      %s212 = sphi 0, %s211
      %s228 = sphi 0, %s212
      %s234 = sphi 0, %s236
      %s237 = sphi 0, %s234
      %s238 = sphi 0, %s237
      %s254 = sphi 0, %s238
      %s262 = sphi 0, %s264
      %s265 = sphi 0, %s262
      %s266 = sphi 0, %s265
      %s282 = sphi 0, %s266
    $region4: #{tpu_custom_call.1} parent=1 // loop_header_branch
      %36 = sbr.rel (%p34) target = $region8
    $region5: #{tpu_custom_call.1} parent=1 // loop_body
      %s38 = ssub.s32 %s33, 1
      %s39 = ssub.s32 %s33, 2
      %s46 = sadd.s32 1, %s41
      %p47 = scmp.ge.s32.totalorder %s46, 2
      %s48 = scalar_select %p47, 0, %s46
      %s49 = sadd.s32 1, %s40
      %s50 = scalar_select %p47, %s49, %s40
      %p51 = scmp.ge.s32.totalorder %s50, 2
      %s52 = scalar_select %p51, 0, %s50
      %s53 = ssub.s32 %s40, %s52
      %p54 = scmp.eq.s32.totalorder %s53, 0
      %s56 = sadd.s32 %s55, 1
      %s57 = scalar_select %p54, %s55, %s56
      %p60 = pneg %p54
      %p61 = scmp.eq.s32.totalorder %s33, 3
      %p62 = por %p60, %p61
      %p63 = scmp.ne.s32.totalorder %s55, %s58
      %p64 = scmp.eq.s32.totalorder %s33, 0
      %p65 = por %p63, %p64
      %p66 = scmp.ne.s32.totalorder %s55, %s58
      %p67 = scmp.eq.s32.totalorder %s38, 3
      %p68 = por %p66, %p67
      %p69 = scmp.ne.s32.totalorder %s58, %s59
      %p70 = scmp.eq.s32.totalorder %s38, 0
      %p71 = por %p69, %p70
      %p72 = scmp.ne.s32.totalorder %s58, %s59
      %p73 = scmp.eq.s32.totalorder %s39, 3
      %p74 = por %p72, %p73
      %p76 = scmp.ne.s32.totalorder %s59, %s75
      %p77 = scmp.eq.s32.totalorder %s39, 0
      %p78 = por %p76, %p77
      %s79 = ssub.s32 %s41, %s48
      %p80 = scmp.eq.s32.totalorder %s79, 0
      %s82 = sadd.s32 %s81, 1
      %s83 = scalar_select %p80, %s81, %s82
      %p86 = pneg %p80
      %p87 = scmp.eq.s32.totalorder %s33, 3
      %p88 = por %p86, %p87
      %p89 = scmp.ne.s32.totalorder %s81, %s84
      %p90 = scmp.eq.s32.totalorder %s33, 0
      %p91 = por %p89, %p90
      %p92 = scmp.ne.s32.totalorder %s81, %s84
      %p93 = scmp.eq.s32.totalorder %s38, 3
      %p94 = por %p92, %p93
      %p95 = scmp.ne.s32.totalorder %s84, %s85
      %p96 = scmp.eq.s32.totalorder %s38, 0
      %p97 = por %p95, %p96
      %p98 = scmp.ne.s32.totalorder %s84, %s85
      %p99 = scmp.eq.s32.totalorder %s39, 3
      %p100 = por %p98, %p99
      %p102 = scmp.ne.s32.totalorder %s85, %s101
      %p103 = scmp.eq.s32.totalorder %s39, 0
      %p104 = por %p102, %p103
      %s105 = ssub.s32 %s41, %s48
      %p106 = scmp.eq.s32.totalorder %s105, 0
      %s108 = sadd.s32 %s107, 1
      %s109 = scalar_select %p106, %s107, %s108
      %p112 = pneg %p106
      %p113 = scmp.eq.s32.totalorder %s33, 3
      %p114 = por %p112, %p113
      %p115 = scmp.ne.s32.totalorder %s107, %s110
      %p116 = scmp.eq.s32.totalorder %s33, 0
      %p117 = por %p115, %p116
      %p118 = scmp.ne.s32.totalorder %s107, %s110
      %p119 = scmp.eq.s32.totalorder %s38, 3
      %p120 = por %p118, %p119
      %p121 = scmp.ne.s32.totalorder %s110, %s111
      %p122 = scmp.eq.s32.totalorder %s38, 0
      %p123 = por %p121, %p122
      %p124 = scmp.ne.s32.totalorder %s110, %s111
      %p125 = scmp.eq.s32.totalorder %s39, 3
      %p126 = por %p124, %p125
      %p128 = scmp.ne.s32.totalorder %s111, %s127
      %p129 = scmp.eq.s32.totalorder %s39, 0
      %p130 = por %p128, %p129
      %s131 = ssub.s32 %s41, %s48
      %p132 = scmp.eq.s32.totalorder %s131, 0
      %s134 = sadd.s32 %s133, 1
      %s135 = scalar_select %p132, %s133, %s134
      %p138 = pneg %p132
      %p139 = scmp.eq.s32.totalorder %s33, 3
      %p140 = por %p138, %p139
      %p141 = scmp.ne.s32.totalorder %s133, %s136
      %p142 = scmp.eq.s32.totalorder %s33, 0
      %p143 = por %p141, %p142
      %p144 = scmp.ne.s32.totalorder %s133, %s136
      %p145 = scmp.eq.s32.totalorder %s38, 3
      %p146 = por %p144, %p145
      %p147 = scmp.ne.s32.totalorder %s136, %s137
      %p148 = scmp.eq.s32.totalorder %s38, 0
      %p149 = por %p147, %p148
      %p150 = scmp.ne.s32.totalorder %s136, %s137
      %p151 = scmp.eq.s32.totalorder %s39, 3
      %p152 = por %p150, %p151
      %p154 = scmp.ne.s32.totalorder %s137, %s153
      %p155 = scmp.eq.s32.totalorder %s39, 0
      %p156 = por %p154, %p155
      %s158 = sadd.s32 %s157, 1
      %p161 = scmp.eq.s32.totalorder %s33, 3
      %p162 = scmp.ne.s32.totalorder %s157, %s159
      %p163 = scmp.eq.s32.totalorder %s33, 0
      %p164 = por %p162, %p163
      %p165 = scmp.ne.s32.totalorder %s157, %s159
      %p166 = scmp.eq.s32.totalorder %s38, 3
      %p167 = por %p165, %p166
      %p168 = scmp.ne.s32.totalorder %s159, %s160
      %p169 = scmp.eq.s32.totalorder %s38, 0
      %p170 = por %p168, %p169
      %p171 = scmp.ne.s32.totalorder %s159, %s160
      %p172 = scmp.eq.s32.totalorder %s39, 3
      %p173 = por %p171, %p172
      %p175 = scmp.ne.s32.totalorder %s160, %s174
      %p176 = scmp.eq.s32.totalorder %s39, 0
      %p177 = por %p175, %p176
      %s178 = ssub.s32 %s40, %s52
      %p179 = scmp.eq.s32.totalorder %s178, 0
      %s181 = sadd.s32 %s180, 1
      %s182 = scalar_select %p179, %s180, %s181
      %p185 = pneg %p179
      %p186 = scmp.eq.s32.totalorder %s33, 3
      %p187 = por %p185, %p186
      %p188 = scmp.ne.s32.totalorder %s180, %s183
      %p189 = scmp.eq.s32.totalorder %s33, 0
      %p190 = por %p188, %p189
      %p191 = scmp.ne.s32.totalorder %s180, %s183
      %p192 = scmp.eq.s32.totalorder %s38, 3
      %p193 = por %p191, %p192
      %p194 = scmp.ne.s32.totalorder %s183, %s184
      %p195 = scmp.eq.s32.totalorder %s38, 0
      %p196 = por %p194, %p195
      %p197 = scmp.ne.s32.totalorder %s183, %s184
      %p198 = scmp.eq.s32.totalorder %s39, 3
      %p199 = por %p197, %p198
      %p201 = scmp.ne.s32.totalorder %s184, %s200
      %p202 = scmp.eq.s32.totalorder %s39, 0
      %p203 = por %p201, %p202
      %s204 = ssub.s32 %s40, %s52
      %s205 = ssub.s32 %s41, %s48
      %s206 = sor.u32 %s204, %s205
      %p207 = scmp.eq.s32.totalorder %s206, 0
      %s209 = sadd.s32 %s208, 1
      %s210 = scalar_select %p207, %s208, %s209
      %p213 = pneg %p207
      %p214 = scmp.eq.s32.totalorder %s33, 3
      %p215 = por %p213, %p214
      %p216 = scmp.ne.s32.totalorder %s208, %s211
      %p217 = scmp.eq.s32.totalorder %s33, 0
      %p218 = por %p216, %p217
      %p219 = scmp.ne.s32.totalorder %s208, %s211
      %p220 = scmp.eq.s32.totalorder %s38, 3
      %p221 = por %p219, %p220
      %p222 = scmp.ne.s32.totalorder %s211, %s212
      %p223 = scmp.eq.s32.totalorder %s38, 0
      %p224 = por %p222, %p223
      %p225 = scmp.ne.s32.totalorder %s211, %s212
      %p226 = scmp.eq.s32.totalorder %s39, 3
      %p227 = por %p225, %p226
      %p229 = scmp.ne.s32.totalorder %s212, %s228
      %p230 = scmp.eq.s32.totalorder %s39, 0
      %p231 = por %p229, %p230
      %s232 = ssub.s32 %s40, %s52
      %p233 = scmp.eq.s32.totalorder %s232, 0
      %s235 = sadd.s32 %s234, 1
      %s236 = scalar_select %p233, %s234, %s235
      %p239 = pneg %p233
      %p240 = scmp.eq.s32.totalorder %s33, 3
      %p241 = por %p239, %p240
      %p242 = scmp.ne.s32.totalorder %s234, %s237
      %p243 = scmp.eq.s32.totalorder %s33, 0
      %p244 = por %p242, %p243
      %p245 = scmp.ne.s32.totalorder %s234, %s237
      %p246 = scmp.eq.s32.totalorder %s38, 3
      %p247 = por %p245, %p246
      %p248 = scmp.ne.s32.totalorder %s237, %s238
      %p249 = scmp.eq.s32.totalorder %s38, 0
      %p250 = por %p248, %p249
      %p251 = scmp.ne.s32.totalorder %s237, %s238
      %p252 = scmp.eq.s32.totalorder %s39, 3
      %p253 = por %p251, %p252
      %p255 = scmp.ne.s32.totalorder %s238, %s254
      %p256 = scmp.eq.s32.totalorder %s39, 0
      %p257 = por %p255, %p256
      %s258 = ssub.s32 %s40, %s52
      %s259 = ssub.s32 %s41, %s48
      %s260 = sor.u32 %s258, %s259
      %p261 = scmp.eq.s32.totalorder %s260, 0
      %s263 = sadd.s32 %s262, 1
      %s264 = scalar_select %p261, %s262, %s263
      %p267 = pneg %p261
      %p268 = scmp.eq.s32.totalorder %s33, 3
      %p269 = por %p267, %p268
      %p270 = scmp.ne.s32.totalorder %s262, %s265
      %p271 = scmp.eq.s32.totalorder %s33, 0
      %p272 = por %p270, %p271
      %p273 = scmp.ne.s32.totalorder %s262, %s265
      %p274 = scmp.eq.s32.totalorder %s38, 3
      %p275 = por %p273, %p274
      %p276 = scmp.ne.s32.totalorder %s265, %s266
      %p277 = scmp.eq.s32.totalorder %s38, 0
      %p278 = por %p276, %p277
      %p279 = scmp.ne.s32.totalorder %s265, %s266
      %p280 = scmp.eq.s32.totalorder %s39, 3
      %p281 = por %p279, %p280
      %p283 = scmp.ne.s32.totalorder %s266, %s282
      %p284 = scmp.eq.s32.totalorder %s39, 0
      %p285 = por %p283, %p284
      %p286 = scmp.le.s32.totalorder 1, %s33
      %p287 = scmp.lt.s32.totalorder %s33, 5
      %p288 = pnand %p286, %p287
      %p289 = pneg %p288
      // Predicated region
      $region9: #{tpu_custom_call.1} parent=5 // pred_check
        _
      $region10: #{tpu_custom_call.1} parent=5 // pred_check_branch
        %291 = sbr.rel (%p288) target = $region12
      $region11: #{tpu_custom_call.1} parent=5 // pred_region
        %s292 = ssub.s32 %s33, 1
        // Predicated region
        $region13: #{tpu_custom_call.1} parent=11 // pred_check
          %p293 = pneg %p170
        $region14: #{tpu_custom_call.1} parent=11 // pred_check_branch
          %295 = sbr.rel (%p293) target = $region16
        $region15: #{tpu_custom_call.1} parent=11 // pred_region
          %297 = vsyncadd [#allocation10], 0
          %s299 = sshll.u32 %s4, 4
          %s300 = int_to_ptr.hbm [resolvable:$true] %s299
          %s301 = sshll.u32 [#allocation11], 4
          %s302 = int_to_ptr.vmem [resolvable:$true] %s301
          %304 = dma.hbm_to_vmem [thread:$0]  %s300, 32, %s302, [#allocation10]
        $region16: #{tpu_custom_call.1} parent=11 // pred_fallthru
          _
      $region12: #{tpu_custom_call.1} parent=5 // pred_fallthru
        _
      %p305 = scmp.lt.s32.totalorder %s33, 4
      // Predicated region
      $region17: #{tpu_custom_call.1} parent=5 // pred_check
        %p306 = pneg %p305
      $region18: #{tpu_custom_call.1} parent=5 // pred_check_branch
        %308 = sbr.rel (%p306) target = $region20
      $region19: #{tpu_custom_call.1} parent=5 // pred_region
        // Predicated region
        $region21: #{tpu_custom_call.1} parent=19 // pred_check
          %p309 = pneg %p65
        $region22: #{tpu_custom_call.1} parent=19 // pred_check_branch
          %311 = sbr.rel (%p309) target = $region24
        $region23: #{tpu_custom_call.1} parent=19 // pred_region
          %s312 = sand.u32 %s55, 1
          %s313 = scalar_lea.sflag [#allocation4], %s312
          %s314 = sand.u32 %s55, 1
          %s315 = smul.addr %s314, 512
          %s316 = scalar_lea.vmem [#allocation3], %s315
          %s317 = smul.u32 32, %s40
          %319 = vsyncadd %s313, 0
          %s320 = smul.addr %s317, 2
          %s321 = smul.addr %s320, 8
          %s322 = scalar_lea.hbm %s0, %s321
          %s323 = sshll.u32 %s322, 4
          %s324 = int_to_ptr.hbm [resolvable:$true] %s323
          %s325 = sshll.u32 %s316, 4
          %s326 = int_to_ptr.vmem [resolvable:$true] %s325
          %331 = dma.hbm_to_vmem [thread:$0]  %s324, 8192, %s326, %s313, 256, 256, 16
        $region24: #{tpu_custom_call.1} parent=19 // pred_fallthru
          _
        // Predicated region
        $region25: #{tpu_custom_call.1} parent=19 // pred_check
          %p332 = pneg %p91
        $region26: #{tpu_custom_call.1} parent=19 // pred_check_branch
          %334 = sbr.rel (%p332) target = $region28
        $region27: #{tpu_custom_call.1} parent=19 // pred_region
          %s335 = sand.u32 %s33, 1
          %s336 = scalar_lea.sflag [#allocation7], %s335
          %s337 = sand.u32 %s81, 1
          %s338 = smul.addr %s337, 1024
          %s339 = scalar_lea.vmem [#allocation6], %s338
          %s340 = smul.u32 4, %s41
          %342 = vsyncadd %s336, 0
          %s343 = smul.addr %s340, 8
          %s344 = scalar_lea.hbm %s1, %s343
          %s345 = sshll.u32 %s344, 4
          %s346 = int_to_ptr.hbm [resolvable:$true] %s345
          %s347 = sshll.u32 %s339, 4
          %s348 = int_to_ptr.vmem [resolvable:$true] %s347
          %353 = dma.hbm_to_vmem [thread:$0]  %s346, 16384, %s348, %s336, 1024, 512, 32
        $region28: #{tpu_custom_call.1} parent=19 // pred_fallthru
          _
        // Predicated region
        $region29: #{tpu_custom_call.1} parent=19 // pred_check
          %p354 = pneg %p117
        $region30: #{tpu_custom_call.1} parent=19 // pred_check_branch
          %356 = sbr.rel (%p354) target = $region32
        $region31: #{tpu_custom_call.1} parent=19 // pred_region
          %s357 = sand.u32 %s33, 1
          %s358 = scalar_lea.sflag [#allocation7], %s357
          %s359 = sand.u32 %s107, 1
          %s360 = smul.addr %s359, 4
          %s361 = scalar_lea.vmem [#allocation8], %s360
          %s362 = smul.u32 4, %s41
          %364 = vsyncadd %s358, 0
          %s365 = scalar_lea.hbm %s2, %s362
          %s367 = sshll.u32 %s365, 4
          %s368 = int_to_ptr.hbm [resolvable:$true] %s367
          %s369 = sshll.u32 %s361, 4
          %s370 = int_to_ptr.vmem [resolvable:$true] %s369
          %372 = dma.hbm_to_vmem [thread:$0]  %s368, 64, %s370, %s358
        $region32: #{tpu_custom_call.1} parent=19 // pred_fallthru
          _
        // Predicated region
        $region33: #{tpu_custom_call.1} parent=19 // pred_check
          %p373 = pneg %p143
        $region34: #{tpu_custom_call.1} parent=19 // pred_check_branch
          %375 = sbr.rel (%p373) target = $region36
        $region35: #{tpu_custom_call.1} parent=19 // pred_region
          %s376 = sand.u32 %s33, 1
          %s377 = scalar_lea.sflag [#allocation10], %s376
          %s378 = sand.u32 %s133, 1
          %s379 = smul.addr %s378, 1024
          %s380 = scalar_lea.vmem [#allocation9], %s379
          %s381 = smul.u32 64, %s41
          %383 = vsyncadd %s377, 0
          %s384 = smul.addr %s381, 2
          %s385 = smul.addr %s384, 8
          %s386 = scalar_lea.hbm %s3, %s385
          %s387 = sshll.u32 %s386, 4
          %s388 = int_to_ptr.hbm [resolvable:$true] %s387
          %s389 = sshll.u32 %s380, 4
          %s390 = int_to_ptr.vmem [resolvable:$true] %s389
          %395 = dma.hbm_to_vmem [thread:$0]  %s388, 16384, %s390, %s377, 256, 256, 16
        $region36: #{tpu_custom_call.1} parent=19 // pred_fallthru
          _
      $region20: #{tpu_custom_call.1} parent=5 // pred_fallthru
        _
      %p396 = scmp.le.s32.totalorder 1, %s33
      %p397 = scmp.lt.s32.totalorder %s33, 5
      %p398 = pnand %p396, %p397
      %p399 = pneg %p398
      // Predicated region
      $region37: #{tpu_custom_call.1} parent=5 // pred_check
        _
      $region38: #{tpu_custom_call.1} parent=5 // pred_check_branch
        %401 = sbr.rel (%p398) target = $region40
      $region39: #{tpu_custom_call.1} parent=5 // pred_region
        %s402 = ssub.s32 %s33, 1
        %s403 = sand.u32 %s58, 1
        %s404 = scalar_lea.sflag [#allocation4], %s403
        %s405 = sand.u32 %s58, 1
        %s406 = smul.addr %s405, 512
        %s407 = scalar_lea.vmem [#allocation3], %s406
        // Predicated region
        $region41: #{tpu_custom_call.1} parent=39 // pred_check
          %p408 = pneg %p71
        $region42: #{tpu_custom_call.1} parent=39 // pred_check_branch
          %410 = sbr.rel (%p408) target = $region44
        $region43: #{tpu_custom_call.1} parent=39 // pred_region
          %412 = dma.done %s404, 8192
        $region44: #{tpu_custom_call.1} parent=39 // pred_fallthru
          _
        %s413 = sand.u32 %s38, 1
        %s414 = scalar_lea.sflag [#allocation7], %s413
        %s415 = sand.u32 %s84, 1
        %s416 = smul.addr %s415, 1024
        %s417 = scalar_lea.vmem [#allocation6], %s416
        // Predicated region
        $region45: #{tpu_custom_call.1} parent=39 // pred_check
          %p418 = pneg %p97
        $region46: #{tpu_custom_call.1} parent=39 // pred_check_branch
          %420 = sbr.rel (%p418) target = $region48
        $region47: #{tpu_custom_call.1} parent=39 // pred_region
          %422 = dma.done %s414, 16384
        $region48: #{tpu_custom_call.1} parent=39 // pred_fallthru
          _
        %s423 = sand.u32 %s38, 1
        %s424 = scalar_lea.sflag [#allocation7], %s423
        %s425 = sand.u32 %s110, 1
        %s426 = smul.addr %s425, 4
        %s427 = scalar_lea.vmem [#allocation8], %s426
        // Predicated region
        $region49: #{tpu_custom_call.1} parent=39 // pred_check
          %p428 = pneg %p123
        $region50: #{tpu_custom_call.1} parent=39 // pred_check_branch
          %430 = sbr.rel (%p428) target = $region52
        $region51: #{tpu_custom_call.1} parent=39 // pred_region
          %432 = dma.done %s424, 64
        $region52: #{tpu_custom_call.1} parent=39 // pred_fallthru
          _
        %s433 = sand.u32 %s38, 1
        %s434 = scalar_lea.sflag [#allocation10], %s433
        %s435 = sand.u32 %s136, 1
        %s436 = smul.addr %s435, 1024
        %s437 = scalar_lea.vmem [#allocation9], %s436
        // Predicated region
        $region53: #{tpu_custom_call.1} parent=39 // pred_check
          %p438 = pneg %p149
        $region54: #{tpu_custom_call.1} parent=39 // pred_check_branch
          %440 = sbr.rel (%p438) target = $region56
        $region55: #{tpu_custom_call.1} parent=39 // pred_region
          %442 = dma.done %s434, 16384
        $region56: #{tpu_custom_call.1} parent=39 // pred_fallthru
          _
        // Predicated region
        $region57: #{tpu_custom_call.1} parent=39 // pred_check
          %p443 = pneg %p170
        $region58: #{tpu_custom_call.1} parent=39 // pred_check_branch
          %445 = sbr.rel (%p443) target = $region60
        $region59: #{tpu_custom_call.1} parent=39 // pred_region
          %447 = dma.done [#allocation10], 32
        $region60: #{tpu_custom_call.1} parent=39 // pred_fallthru
          _
        %s448 = sand.u32 %s58, 1
        %s449 = scalar_lea.sflag [#allocation4], %s448
        %s450 = sand.u32 %s58, 1
        %s451 = smul.addr %s450, 512
        %s452 = scalar_lea.vmem [#allocation3], %s451
        %p453 = pneg %p71
        %p454 = pneg %p68
        %s455 = sand.u32 %s38, 1
        %s456 = scalar_lea.sflag [#allocation7], %s455
        %s457 = sand.u32 %s84, 1
        %s458 = smul.addr %s457, 1024
        %s459 = scalar_lea.vmem [#allocation6], %s458
        %p460 = pneg %p97
        %p461 = pneg %p94
        %s462 = sand.u32 %s38, 1
        %s463 = scalar_lea.sflag [#allocation7], %s462
        %s464 = sand.u32 %s110, 1
        %s465 = smul.addr %s464, 4
        %s466 = scalar_lea.vmem [#allocation8], %s465
        %p467 = pneg %p123
        %p468 = pneg %p120
        %s469 = sand.u32 %s38, 1
        %s470 = scalar_lea.sflag [#allocation10], %s469
        %s471 = sand.u32 %s136, 1
        %s472 = smul.addr %s471, 1024
        %s473 = scalar_lea.vmem [#allocation9], %s472
        %p474 = pneg %p149
        %p475 = pneg %p146
        %p476 = pneg %p170
        %p477 = pneg %p167
        %p478 = pneg %p196
        %p479 = pneg %p193
        %s480 = sand.u32 %s183, 1
        %s481 = scalar_lea.sflag [#allocation5], %s480
        %s482 = sand.u32 %s183, 1
        %s483 = smul.addr %s482, 512
        %s484 = scalar_lea.vmem [#allocation12], %s483
        %p485 = pneg %p224
        %p486 = pneg %p221
        %s487 = sand.u32 %s38, 1
        %s488 = scalar_lea.sflag [#allocation14], %s487
        %s489 = sand.u32 %s211, 1
        %s490 = smul.addr %s489, 1024
        %s491 = scalar_lea.vmem [#allocation13], %s490
        %p492 = pneg %p250
        %p493 = pneg %p247
        %s494 = sand.u32 %s38, 1
        %s495 = scalar_lea.sflag [#allocation14], %s494
        %s496 = sand.u32 %s237, 1
        %s497 = smul.addr %s496, 2
        %s498 = scalar_lea.vmem [#allocation15], %s497
        %p499 = pneg %p278
        %p500 = pneg %p275
        %s501 = sand.u32 %s265, 1
        %s502 = scalar_lea.sflag [#allocation17], %s501
        %s503 = sand.u32 %s265, 1
        %s504 = smul.addr %s503, 4
        %s505 = scalar_lea.vmem [#allocation16], %s504
        %s506 = smul.u32 32, %s42
        %s507 = smul.u32 4, %s43
        %s508 = smul.u32 4, %s43
        %s509 = smul.u32 64, %s43
        %s510 = smul.u32 32, %s42
        %s511 = smul.u32 32, %s42
        %s512 = smul.u32 4, %s43
        %s513 = smul.u32 4, %s43
        %v514 = vld [vmem:[%s407] sm:$0xff]
        %v515 = vld [vmem:[%s407 + $0x8] sm:$0xff]
        %v516 = vld [vmem:[%s407 + $0x10] sm:$0xff]
        %v517 = vld [vmem:[%s407 + $0x18] sm:$0xff]
        %v518 = vld [vmem:[%s407 + $0x20] sm:$0xff]
        %v519 = vld [vmem:[%s407 + $0x28] sm:$0xff]
        %v520 = vld [vmem:[%s407 + $0x30] sm:$0xff]
        %v521 = vld [vmem:[%s407 + $0x38] sm:$0xff]
        %v522 = vld [vmem:[%s407 + $0x40] sm:$0xff]
        %v523 = vld [vmem:[%s407 + $0x48] sm:$0xff]
        %v524 = vld [vmem:[%s407 + $0x50] sm:$0xff]
        %v525 = vld [vmem:[%s407 + $0x58] sm:$0xff]
        %v526 = vld [vmem:[%s407 + $0x60] sm:$0xff]
        %v527 = vld [vmem:[%s407 + $0x68] sm:$0xff]
        %v528 = vld [vmem:[%s407 + $0x70] sm:$0xff]
        %v529 = vld [vmem:[%s407 + $0x78] sm:$0xff]
        %v530 = vld [vmem:[%s407 + $0x80] sm:$0xff]
        %v531 = vld [vmem:[%s407 + $0x88] sm:$0xff]
        %v532 = vld [vmem:[%s407 + $0x90] sm:$0xff]
        %v533 = vld [vmem:[%s407 + $0x98] sm:$0xff]
        %v534 = vld [vmem:[%s407 + $0xa0] sm:$0xff]
        %v535 = vld [vmem:[%s407 + $0xa8] sm:$0xff]
        %v536 = vld [vmem:[%s407 + $0xb0] sm:$0xff]
        %v537 = vld [vmem:[%s407 + $0xb8] sm:$0xff]
        %v538 = vld [vmem:[%s407 + $0xc0] sm:$0xff]
        %v539 = vld [vmem:[%s407 + $0xc8] sm:$0xff]
        %v540 = vld [vmem:[%s407 + $0xd0] sm:$0xff]
        %v541 = vld [vmem:[%s407 + $0xd8] sm:$0xff]
        %v542 = vld [vmem:[%s407 + $0xe0] sm:$0xff]
        %v543 = vld [vmem:[%s407 + $0xe8] sm:$0xff]
        %v544 = vld [vmem:[%s407 + $0xf0] sm:$0xff]
        %v545 = vld [vmem:[%s407 + $0xf8] sm:$0xff]
        %v546 = vld [vmem:[%s407 + $0x100] sm:$0xff]
        %v547 = vld [vmem:[%s407 + $0x108] sm:$0xff]
        %v548 = vld [vmem:[%s407 + $0x110] sm:$0xff]
        %v549 = vld [vmem:[%s407 + $0x118] sm:$0xff]
        %v550 = vld [vmem:[%s407 + $0x120] sm:$0xff]
        %v551 = vld [vmem:[%s407 + $0x128] sm:$0xff]
        %v552 = vld [vmem:[%s407 + $0x130] sm:$0xff]
        %v553 = vld [vmem:[%s407 + $0x138] sm:$0xff]
        %v554 = vld [vmem:[%s407 + $0x140] sm:$0xff]
        %v555 = vld [vmem:[%s407 + $0x148] sm:$0xff]
        %v556 = vld [vmem:[%s407 + $0x150] sm:$0xff]
        %v557 = vld [vmem:[%s407 + $0x158] sm:$0xff]
        %v558 = vld [vmem:[%s407 + $0x160] sm:$0xff]
        %v559 = vld [vmem:[%s407 + $0x168] sm:$0xff]
        %v560 = vld [vmem:[%s407 + $0x170] sm:$0xff]
        %v561 = vld [vmem:[%s407 + $0x178] sm:$0xff]
        %v562 = vld [vmem:[%s407 + $0x180] sm:$0xff]
        %v563 = vld [vmem:[%s407 + $0x188] sm:$0xff]
        %v564 = vld [vmem:[%s407 + $0x190] sm:$0xff]
        %v565 = vld [vmem:[%s407 + $0x198] sm:$0xff]
        %v566 = vld [vmem:[%s407 + $0x1a0] sm:$0xff]
        %v567 = vld [vmem:[%s407 + $0x1a8] sm:$0xff]
        %v568 = vld [vmem:[%s407 + $0x1b0] sm:$0xff]
        %v569 = vld [vmem:[%s407 + $0x1b8] sm:$0xff]
        %v570 = vld [vmem:[%s407 + $0x1c0] sm:$0xff]
        %v571 = vld [vmem:[%s407 + $0x1c8] sm:$0xff]
        %v572 = vld [vmem:[%s407 + $0x1d0] sm:$0xff]
        %v573 = vld [vmem:[%s407 + $0x1d8] sm:$0xff]
        %v574 = vld [vmem:[%s407 + $0x1e0] sm:$0xff]
        %v575 = vld [vmem:[%s407 + $0x1e8] sm:$0xff]
        %v576 = vld [vmem:[%s407 + $0x1f0] sm:$0xff]
        %v577 = vld [vmem:[%s407 + $0x1f8] sm:$0xff]
        %v578 = vld [vmem:[#allocation11] sm:$0x3]
        %v580 = vperm.slane %v578, 0
        %v581 = vperm.slane %v578, 1
        %v584 = vsub.f32 %v514, %v580
        %v585 = vsub.f32 %v515, %v581
        %v586 = vsub.f32 %v516, %v580
        %v587 = vsub.f32 %v517, %v581
        %v588 = vsub.f32 %v518, %v580
        %v589 = vsub.f32 %v519, %v581
        %v590 = vsub.f32 %v520, %v580
        %v591 = vsub.f32 %v521, %v581
        %v592 = vsub.f32 %v522, %v580
        %v593 = vsub.f32 %v523, %v581
        %v594 = vsub.f32 %v524, %v580
        %v595 = vsub.f32 %v525, %v581
        %v596 = vsub.f32 %v526, %v580
        %v597 = vsub.f32 %v527, %v581
        %v598 = vsub.f32 %v528, %v580
        %v599 = vsub.f32 %v529, %v581
        %v600 = vsub.f32 %v530, %v580
        %v601 = vsub.f32 %v531, %v581
        %v602 = vsub.f32 %v532, %v580
        %v603 = vsub.f32 %v533, %v581
        %v604 = vsub.f32 %v534, %v580
        %v605 = vsub.f32 %v535, %v581
        %v606 = vsub.f32 %v536, %v580
        %v607 = vsub.f32 %v537, %v581
        %v608 = vsub.f32 %v538, %v580
        %v609 = vsub.f32 %v539, %v581
        %v610 = vsub.f32 %v540, %v580
        %v611 = vsub.f32 %v541, %v581
        %v612 = vsub.f32 %v542, %v580
        %v613 = vsub.f32 %v543, %v581
        %v614 = vsub.f32 %v544, %v580
        %v615 = vsub.f32 %v545, %v581
        %v616 = vsub.f32 %v546, %v580
        %v617 = vsub.f32 %v547, %v581
        %v618 = vsub.f32 %v548, %v580
        %v619 = vsub.f32 %v549, %v581
        %v620 = vsub.f32 %v550, %v580
        %v621 = vsub.f32 %v551, %v581
        %v622 = vsub.f32 %v552, %v580
        %v623 = vsub.f32 %v553, %v581
        %v624 = vsub.f32 %v554, %v580
        %v625 = vsub.f32 %v555, %v581
        %v626 = vsub.f32 %v556, %v580
        %v627 = vsub.f32 %v557, %v581
        %v628 = vsub.f32 %v558, %v580
        %v629 = vsub.f32 %v559, %v581
        %v630 = vsub.f32 %v560, %v580
        %v631 = vsub.f32 %v561, %v581
        %v632 = vsub.f32 %v562, %v580
        %v633 = vsub.f32 %v563, %v581
        %v634 = vsub.f32 %v564, %v580
        %v635 = vsub.f32 %v565, %v581
        %v636 = vsub.f32 %v566, %v580
        %v637 = vsub.f32 %v567, %v581
        %v638 = vsub.f32 %v568, %v580
        %v639 = vsub.f32 %v569, %v581
        %v640 = vsub.f32 %v570, %v580
        %v641 = vsub.f32 %v571, %v581
        %v642 = vsub.f32 %v572, %v580
        %v643 = vsub.f32 %v573, %v581
        %v644 = vsub.f32 %v574, %v580
        %v645 = vsub.f32 %v575, %v581
        %v646 = vsub.f32 %v576, %v580
        %v647 = vsub.f32 %v577, %v581
        %v648 = vld [vmem:[%s417] sm:$0xff]
        %v649 = vld [vmem:[%s417 + $0x8] sm:$0xff]
        %v650 = vld [vmem:[%s417 + $0x10] sm:$0xff]
        %v651 = vld [vmem:[%s417 + $0x18] sm:$0xff]
        %v652 = vld [vmem:[%s417 + $0x20] sm:$0xff]
        %v653 = vld [vmem:[%s417 + $0x28] sm:$0xff]
        %v654 = vld [vmem:[%s417 + $0x30] sm:$0xff]
        %v655 = vld [vmem:[%s417 + $0x38] sm:$0xff]
        %v656 = vld [vmem:[%s417 + $0x40] sm:$0xff]
        %v657 = vld [vmem:[%s417 + $0x48] sm:$0xff]
        %v658 = vld [vmem:[%s417 + $0x50] sm:$0xff]
        %v659 = vld [vmem:[%s417 + $0x58] sm:$0xff]
        %v660 = vld [vmem:[%s417 + $0x60] sm:$0xff]
        %v661 = vld [vmem:[%s417 + $0x68] sm:$0xff]
        %v662 = vld [vmem:[%s417 + $0x70] sm:$0xff]
        %v663 = vld [vmem:[%s417 + $0x78] sm:$0xff]
        %v664 = vld [vmem:[%s417 + $0x80] sm:$0xff]
        %v665 = vld [vmem:[%s417 + $0x88] sm:$0xff]
        %v666 = vld [vmem:[%s417 + $0x90] sm:$0xff]
        %v667 = vld [vmem:[%s417 + $0x98] sm:$0xff]
        %v668 = vld [vmem:[%s417 + $0xa0] sm:$0xff]
        %v669 = vld [vmem:[%s417 + $0xa8] sm:$0xff]
        %v670 = vld [vmem:[%s417 + $0xb0] sm:$0xff]
        %v671 = vld [vmem:[%s417 + $0xb8] sm:$0xff]
        %v672 = vld [vmem:[%s417 + $0xc0] sm:$0xff]
        %v673 = vld [vmem:[%s417 + $0xc8] sm:$0xff]
        %v674 = vld [vmem:[%s417 + $0xd0] sm:$0xff]
        %v675 = vld [vmem:[%s417 + $0xd8] sm:$0xff]
        %v676 = vld [vmem:[%s417 + $0xe0] sm:$0xff]
        %v677 = vld [vmem:[%s417 + $0xe8] sm:$0xff]
        %v678 = vld [vmem:[%s417 + $0xf0] sm:$0xff]
        %v679 = vld [vmem:[%s417 + $0xf8] sm:$0xff]
        %v680 = vld [vmem:[%s417 + $0x100] sm:$0xff]
        %v681 = vld [vmem:[%s417 + $0x108] sm:$0xff]
        %v682 = vld [vmem:[%s417 + $0x110] sm:$0xff]
        %v683 = vld [vmem:[%s417 + $0x118] sm:$0xff]
        %v684 = vld [vmem:[%s417 + $0x120] sm:$0xff]
        %v685 = vld [vmem:[%s417 + $0x128] sm:$0xff]
        %v686 = vld [vmem:[%s417 + $0x130] sm:$0xff]
        %v687 = vld [vmem:[%s417 + $0x138] sm:$0xff]
        %v688 = vld [vmem:[%s417 + $0x140] sm:$0xff]
        %v689 = vld [vmem:[%s417 + $0x148] sm:$0xff]
        %v690 = vld [vmem:[%s417 + $0x150] sm:$0xff]
        %v691 = vld [vmem:[%s417 + $0x158] sm:$0xff]
        %v692 = vld [vmem:[%s417 + $0x160] sm:$0xff]
        %v693 = vld [vmem:[%s417 + $0x168] sm:$0xff]
        %v694 = vld [vmem:[%s417 + $0x170] sm:$0xff]
        %v695 = vld [vmem:[%s417 + $0x178] sm:$0xff]
        %v696 = vld [vmem:[%s417 + $0x180] sm:$0xff]
        %v697 = vld [vmem:[%s417 + $0x188] sm:$0xff]
        %v698 = vld [vmem:[%s417 + $0x190] sm:$0xff]
        %v699 = vld [vmem:[%s417 + $0x198] sm:$0xff]
        %v700 = vld [vmem:[%s417 + $0x1a0] sm:$0xff]
        %v701 = vld [vmem:[%s417 + $0x1a8] sm:$0xff]
        %v702 = vld [vmem:[%s417 + $0x1b0] sm:$0xff]
        %v703 = vld [vmem:[%s417 + $0x1b8] sm:$0xff]
        %v704 = vld [vmem:[%s417 + $0x1c0] sm:$0xff]
        %v705 = vld [vmem:[%s417 + $0x1c8] sm:$0xff]
        %v706 = vld [vmem:[%s417 + $0x1d0] sm:$0xff]
        %v707 = vld [vmem:[%s417 + $0x1d8] sm:$0xff]
        %v708 = vld [vmem:[%s417 + $0x1e0] sm:$0xff]
        %v709 = vld [vmem:[%s417 + $0x1e8] sm:$0xff]
        %v710 = vld [vmem:[%s417 + $0x1f0] sm:$0xff]
        %v711 = vld [vmem:[%s417 + $0x1f8] sm:$0xff]
        %v712 = vld [vmem:[%s417 + $0x200] sm:$0xff]
        %v713 = vld [vmem:[%s417 + $0x208] sm:$0xff]
        %v714 = vld [vmem:[%s417 + $0x210] sm:$0xff]
        %v715 = vld [vmem:[%s417 + $0x218] sm:$0xff]
        %v716 = vld [vmem:[%s417 + $0x220] sm:$0xff]
        %v717 = vld [vmem:[%s417 + $0x228] sm:$0xff]
        %v718 = vld [vmem:[%s417 + $0x230] sm:$0xff]
        %v719 = vld [vmem:[%s417 + $0x238] sm:$0xff]
        %v720 = vld [vmem:[%s417 + $0x240] sm:$0xff]
        %v721 = vld [vmem:[%s417 + $0x248] sm:$0xff]
        %v722 = vld [vmem:[%s417 + $0x250] sm:$0xff]
        %v723 = vld [vmem:[%s417 + $0x258] sm:$0xff]
        %v724 = vld [vmem:[%s417 + $0x260] sm:$0xff]
        %v725 = vld [vmem:[%s417 + $0x268] sm:$0xff]
        %v726 = vld [vmem:[%s417 + $0x270] sm:$0xff]
        %v727 = vld [vmem:[%s417 + $0x278] sm:$0xff]
        %v728 = vld [vmem:[%s417 + $0x280] sm:$0xff]
        %v729 = vld [vmem:[%s417 + $0x288] sm:$0xff]
        %v730 = vld [vmem:[%s417 + $0x290] sm:$0xff]
        %v731 = vld [vmem:[%s417 + $0x298] sm:$0xff]
        %v732 = vld [vmem:[%s417 + $0x2a0] sm:$0xff]
        %v733 = vld [vmem:[%s417 + $0x2a8] sm:$0xff]
        %v734 = vld [vmem:[%s417 + $0x2b0] sm:$0xff]
        %v735 = vld [vmem:[%s417 + $0x2b8] sm:$0xff]
        %v736 = vld [vmem:[%s417 + $0x2c0] sm:$0xff]
        %v737 = vld [vmem:[%s417 + $0x2c8] sm:$0xff]
        %v738 = vld [vmem:[%s417 + $0x2d0] sm:$0xff]
        %v739 = vld [vmem:[%s417 + $0x2d8] sm:$0xff]
        %v740 = vld [vmem:[%s417 + $0x2e0] sm:$0xff]
        %v741 = vld [vmem:[%s417 + $0x2e8] sm:$0xff]
        %v742 = vld [vmem:[%s417 + $0x2f0] sm:$0xff]
        %v743 = vld [vmem:[%s417 + $0x2f8] sm:$0xff]
        %v744 = vld [vmem:[%s417 + $0x300] sm:$0xff]
        %v745 = vld [vmem:[%s417 + $0x308] sm:$0xff]
        %v746 = vld [vmem:[%s417 + $0x310] sm:$0xff]
        %v747 = vld [vmem:[%s417 + $0x318] sm:$0xff]
        %v748 = vld [vmem:[%s417 + $0x320] sm:$0xff]
        %v749 = vld [vmem:[%s417 + $0x328] sm:$0xff]
        %v750 = vld [vmem:[%s417 + $0x330] sm:$0xff]
        %v751 = vld [vmem:[%s417 + $0x338] sm:$0xff]
        %v752 = vld [vmem:[%s417 + $0x340] sm:$0xff]
        %v753 = vld [vmem:[%s417 + $0x348] sm:$0xff]
        %v754 = vld [vmem:[%s417 + $0x350] sm:$0xff]
        %v755 = vld [vmem:[%s417 + $0x358] sm:$0xff]
        %v756 = vld [vmem:[%s417 + $0x360] sm:$0xff]
        %v757 = vld [vmem:[%s417 + $0x368] sm:$0xff]
        %v758 = vld [vmem:[%s417 + $0x370] sm:$0xff]
        %v759 = vld [vmem:[%s417 + $0x378] sm:$0xff]
        %v760 = vld [vmem:[%s417 + $0x380] sm:$0xff]
        %v761 = vld [vmem:[%s417 + $0x388] sm:$0xff]
        %v762 = vld [vmem:[%s417 + $0x390] sm:$0xff]
        %v763 = vld [vmem:[%s417 + $0x398] sm:$0xff]
        %v764 = vld [vmem:[%s417 + $0x3a0] sm:$0xff]
        %v765 = vld [vmem:[%s417 + $0x3a8] sm:$0xff]
        %v766 = vld [vmem:[%s417 + $0x3b0] sm:$0xff]
        %v767 = vld [vmem:[%s417 + $0x3b8] sm:$0xff]
        %v768 = vld [vmem:[%s417 + $0x3c0] sm:$0xff]
        %v769 = vld [vmem:[%s417 + $0x3c8] sm:$0xff]
        %v770 = vld [vmem:[%s417 + $0x3d0] sm:$0xff]
        %v771 = vld [vmem:[%s417 + $0x3d8] sm:$0xff]
        %v772 = vld [vmem:[%s417 + $0x3e0] sm:$0xff]
        %v773 = vld [vmem:[%s417 + $0x3e8] sm:$0xff]
        %v774 = vld [vmem:[%s417 + $0x3f0] sm:$0xff]
        %v775 = vld [vmem:[%s417 + $0x3f8] sm:$0xff]
        %v776 = vld [vmem:[%s427] sm:$0xf]
        %v778 = vperm.slane %v776, 0
        %v779 = vperm.slane %v776, 1
        %v780 = vperm.slane %v776, 2
        %v781 = vperm.slane %v776, 3
        %786 = vmatpush.msra.mxu0 %v708
        %787 = vmatpush.msra.mxu0 %v704
        %788 = vmatpush.msra.mxu0 %v700
        %789 = vmatpush.msra.mxu0 %v696
        %790 = vmatpush.msra.mxu0 %v692
        %791 = vmatpush.msra.mxu0 %v688
        %792 = vmatpush.msra.mxu0 %v684
        %793 = vmatpush.msra.mxu0 %v680
        %794 = vmatpush.msra.mxu0 %v676
        %795 = vmatpush.msra.mxu0 %v672
        %796 = vmatpush.msra.mxu0 %v668
        %797 = vmatpush.msra.mxu0 %v664
        %798 = vmatpush.msra.mxu0 %v660
        %799 = vmatpush.msra.mxu0 %v656
        %800 = vmatpush.msra.mxu0 %v652
        %801 = vmatpush.msra.mxu0 %v648
        %802 = vmatmul.f32.gmra.mxu0 %v584
        %v803 = vpop.f32.mrf.mxu0
        %v804 = vadd.f32 %v778, %v803
        %805 = vmatmul.f32.gmra.mxu0 %v586
        %v806 = vpop.f32.mrf.mxu0
        %v807 = vadd.f32 %v778, %v806
        %808 = vmatmul.f32.gmra.mxu0 %v588
        %v809 = vpop.f32.mrf.mxu0
        %v810 = vadd.f32 %v778, %v809
        %811 = vmatmul.f32.gmra.mxu0 %v590
        %v812 = vpop.f32.mrf.mxu0
        %v813 = vadd.f32 %v778, %v812
        %814 = vmatmul.f32.gmra.mxu0 %v592
        %v815 = vpop.f32.mrf.mxu0
        %v816 = vadd.f32 %v778, %v815
        %817 = vmatmul.f32.gmra.mxu0 %v594
        %v818 = vpop.f32.mrf.mxu0
        %v819 = vadd.f32 %v778, %v818
        %820 = vmatmul.f32.gmra.mxu0 %v596
        %v821 = vpop.f32.mrf.mxu0
        %v822 = vadd.f32 %v778, %v821
        %823 = vmatmul.f32.gmra.mxu0 %v598
        %v824 = vpop.f32.mrf.mxu0
        %v825 = vadd.f32 %v778, %v824
        %826 = vmatmul.f32.gmra.mxu0 %v600
        %v827 = vpop.f32.mrf.mxu0
        %v828 = vadd.f32 %v778, %v827
        %829 = vmatmul.f32.gmra.mxu0 %v602
        %v830 = vpop.f32.mrf.mxu0
        %v831 = vadd.f32 %v778, %v830
        %832 = vmatmul.f32.gmra.mxu0 %v604
        %v833 = vpop.f32.mrf.mxu0
        %v834 = vadd.f32 %v778, %v833
        %835 = vmatmul.f32.gmra.mxu0 %v606
        %v836 = vpop.f32.mrf.mxu0
        %v837 = vadd.f32 %v778, %v836
        %838 = vmatmul.f32.gmra.mxu0 %v608
        %v839 = vpop.f32.mrf.mxu0
        %v840 = vadd.f32 %v778, %v839
        %841 = vmatmul.f32.gmra.mxu0 %v610
        %v842 = vpop.f32.mrf.mxu0
        %v843 = vadd.f32 %v778, %v842
        %844 = vmatmul.f32.gmra.mxu0 %v612
        %v845 = vpop.f32.mrf.mxu0
        %v846 = vadd.f32 %v778, %v845
        %847 = vmatmul.f32.gmra.mxu0 %v614
        %v848 = vpop.f32.mrf.mxu0
        %v849 = vadd.f32 %v778, %v848
        %850 = vmatmul.f32.gmra.mxu0 %v616
        %v851 = vpop.f32.mrf.mxu0
        %v852 = vadd.f32 %v778, %v851
        %853 = vmatmul.f32.gmra.mxu0 %v618
        %v854 = vpop.f32.mrf.mxu0
        %v855 = vadd.f32 %v778, %v854
        %856 = vmatmul.f32.gmra.mxu0 %v620
        %v857 = vpop.f32.mrf.mxu0
        %v858 = vadd.f32 %v778, %v857
        %859 = vmatmul.f32.gmra.mxu0 %v622
        %v860 = vpop.f32.mrf.mxu0
        %v861 = vadd.f32 %v778, %v860
        %862 = vmatmul.f32.gmra.mxu0 %v624
        %v863 = vpop.f32.mrf.mxu0
        %v864 = vadd.f32 %v778, %v863
        %865 = vmatmul.f32.gmra.mxu0 %v626
        %v866 = vpop.f32.mrf.mxu0
        %v867 = vadd.f32 %v778, %v866
        %868 = vmatmul.f32.gmra.mxu0 %v628
        %v869 = vpop.f32.mrf.mxu0
        %v870 = vadd.f32 %v778, %v869
        %871 = vmatmul.f32.gmra.mxu0 %v630
        %v872 = vpop.f32.mrf.mxu0
        %v873 = vadd.f32 %v778, %v872
        %874 = vmatmul.f32.gmra.mxu0 %v632
        %v875 = vpop.f32.mrf.mxu0
        %v876 = vadd.f32 %v778, %v875
        %877 = vmatmul.f32.gmra.mxu0 %v634
        %v878 = vpop.f32.mrf.mxu0
        %v879 = vadd.f32 %v778, %v878
        %880 = vmatmul.f32.gmra.mxu0 %v636
        %v881 = vpop.f32.mrf.mxu0
        %v882 = vadd.f32 %v778, %v881
        %883 = vmatmul.f32.gmra.mxu0 %v638
        %v884 = vpop.f32.mrf.mxu0
        %v885 = vadd.f32 %v778, %v884
        %886 = vmatmul.f32.gmra.mxu0 %v640
        %v887 = vpop.f32.mrf.mxu0
        %v888 = vadd.f32 %v778, %v887
        %889 = vmatmul.f32.gmra.mxu0 %v642
        %v890 = vpop.f32.mrf.mxu0
        %v891 = vadd.f32 %v778, %v890
        %892 = vmatmul.f32.gmra.mxu0 %v644
        %v893 = vpop.f32.mrf.mxu0
        %v894 = vadd.f32 %v778, %v893
        %895 = vmatmul.f32.gmra.mxu0 %v646
        %v896 = vpop.f32.mrf.mxu0
        %v897 = vadd.f32 %v778, %v896
        %898 = vdwg.mxu0
        %899 = vmatpush.msra.mxu0 %v772
        %900 = vmatpush.msra.mxu0 %v768
        %901 = vmatpush.msra.mxu0 %v764
        %902 = vmatpush.msra.mxu0 %v760
        %903 = vmatpush.msra.mxu0 %v756
        %904 = vmatpush.msra.mxu0 %v752
        %905 = vmatpush.msra.mxu0 %v748
        %906 = vmatpush.msra.mxu0 %v744
        %907 = vmatpush.msra.mxu0 %v740
        %908 = vmatpush.msra.mxu0 %v736
        %909 = vmatpush.msra.mxu0 %v732
        %910 = vmatpush.msra.mxu0 %v728
        %911 = vmatpush.msra.mxu0 %v724
        %912 = vmatpush.msra.mxu0 %v720
        %913 = vmatpush.msra.mxu0 %v716
        %914 = vmatpush.msra.mxu0 %v712
        %915 = vmatmul.f32.gmra.mxu0 %v585
        %v916 = vpop.f32.mrf.mxu0
        %v917 = vadd.f32 %v804, %v916
        %918 = vmatmul.f32.gmra.mxu0 %v587
        %v919 = vpop.f32.mrf.mxu0
        %v920 = vadd.f32 %v807, %v919
        %921 = vmatmul.f32.gmra.mxu0 %v589
        %v922 = vpop.f32.mrf.mxu0
        %v923 = vadd.f32 %v810, %v922
        %924 = vmatmul.f32.gmra.mxu0 %v591
        %v925 = vpop.f32.mrf.mxu0
        %v926 = vadd.f32 %v813, %v925
        %927 = vmatmul.f32.gmra.mxu0 %v593
        %v928 = vpop.f32.mrf.mxu0
        %v929 = vadd.f32 %v816, %v928
        %930 = vmatmul.f32.gmra.mxu0 %v595
        %v931 = vpop.f32.mrf.mxu0
        %v932 = vadd.f32 %v819, %v931
        %933 = vmatmul.f32.gmra.mxu0 %v597
        %v934 = vpop.f32.mrf.mxu0
        %v935 = vadd.f32 %v822, %v934
        %936 = vmatmul.f32.gmra.mxu0 %v599
        %v937 = vpop.f32.mrf.mxu0
        %v938 = vadd.f32 %v825, %v937
        %939 = vmatmul.f32.gmra.mxu0 %v601
        %v940 = vpop.f32.mrf.mxu0
        %v941 = vadd.f32 %v828, %v940
        %942 = vmatmul.f32.gmra.mxu0 %v603
        %v943 = vpop.f32.mrf.mxu0
        %v944 = vadd.f32 %v831, %v943
        %945 = vmatmul.f32.gmra.mxu0 %v605
        %v946 = vpop.f32.mrf.mxu0
        %v947 = vadd.f32 %v834, %v946
        %948 = vmatmul.f32.gmra.mxu0 %v607
        %v949 = vpop.f32.mrf.mxu0
        %v950 = vadd.f32 %v837, %v949
        %951 = vmatmul.f32.gmra.mxu0 %v609
        %v952 = vpop.f32.mrf.mxu0
        %v953 = vadd.f32 %v840, %v952
        %954 = vmatmul.f32.gmra.mxu0 %v611
        %v955 = vpop.f32.mrf.mxu0
        %v956 = vadd.f32 %v843, %v955
        %957 = vmatmul.f32.gmra.mxu0 %v613
        %v958 = vpop.f32.mrf.mxu0
        %v959 = vadd.f32 %v846, %v958
        %960 = vmatmul.f32.gmra.mxu0 %v615
        %v961 = vpop.f32.mrf.mxu0
        %v962 = vadd.f32 %v849, %v961
        %963 = vmatmul.f32.gmra.mxu0 %v617
        %v964 = vpop.f32.mrf.mxu0
        %v965 = vadd.f32 %v852, %v964
        %966 = vmatmul.f32.gmra.mxu0 %v619
        %v967 = vpop.f32.mrf.mxu0
        %v968 = vadd.f32 %v855, %v967
        %969 = vmatmul.f32.gmra.mxu0 %v621
        %v970 = vpop.f32.mrf.mxu0
        %v971 = vadd.f32 %v858, %v970
        %972 = vmatmul.f32.gmra.mxu0 %v623
        %v973 = vpop.f32.mrf.mxu0
        %v974 = vadd.f32 %v861, %v973
        %975 = vmatmul.f32.gmra.mxu0 %v625
        %v976 = vpop.f32.mrf.mxu0
        %v977 = vadd.f32 %v864, %v976
        %978 = vmatmul.f32.gmra.mxu0 %v627
        %v979 = vpop.f32.mrf.mxu0
        %v980 = vadd.f32 %v867, %v979
        %981 = vmatmul.f32.gmra.mxu0 %v629
        %v982 = vpop.f32.mrf.mxu0
        %v983 = vadd.f32 %v870, %v982
        %984 = vmatmul.f32.gmra.mxu0 %v631
        %v985 = vpop.f32.mrf.mxu0
        %v986 = vadd.f32 %v873, %v985
        %987 = vmatmul.f32.gmra.mxu0 %v633
        %v988 = vpop.f32.mrf.mxu0
        %v989 = vadd.f32 %v876, %v988
        %990 = vmatmul.f32.gmra.mxu0 %v635
        %v991 = vpop.f32.mrf.mxu0
        %v992 = vadd.f32 %v879, %v991
        %993 = vmatmul.f32.gmra.mxu0 %v637
        %v994 = vpop.f32.mrf.mxu0
        %v995 = vadd.f32 %v882, %v994
        %996 = vmatmul.f32.gmra.mxu0 %v639
        %v997 = vpop.f32.mrf.mxu0
        %v998 = vadd.f32 %v885, %v997
        %999 = vmatmul.f32.gmra.mxu0 %v641
        %v1000 = vpop.f32.mrf.mxu0
        %v1001 = vadd.f32 %v888, %v1000
        %1002 = vmatmul.f32.gmra.mxu0 %v643
        %v1003 = vpop.f32.mrf.mxu0
        %v1004 = vadd.f32 %v891, %v1003
        %1005 = vmatmul.f32.gmra.mxu0 %v645
        %v1006 = vpop.f32.mrf.mxu0
        %v1007 = vadd.f32 %v894, %v1006
        %1008 = vmatmul.f32.gmra.mxu0 %v647
        %v1009 = vpop.f32.mrf.mxu0
        %v1010 = vadd.f32 %v897, %v1009
        %1011 = vdwg.mxu0
        %1012 = vmatpush.msra.mxu0 %v709
        %1013 = vmatpush.msra.mxu0 %v705
        %1014 = vmatpush.msra.mxu0 %v701
        %1015 = vmatpush.msra.mxu0 %v697
        %1016 = vmatpush.msra.mxu0 %v693
        %1017 = vmatpush.msra.mxu0 %v689
        %1018 = vmatpush.msra.mxu0 %v685
        %1019 = vmatpush.msra.mxu0 %v681
        %1020 = vmatpush.msra.mxu0 %v677
        %1021 = vmatpush.msra.mxu0 %v673
        %1022 = vmatpush.msra.mxu0 %v669
        %1023 = vmatpush.msra.mxu0 %v665
        %1024 = vmatpush.msra.mxu0 %v661
        %1025 = vmatpush.msra.mxu0 %v657
        %1026 = vmatpush.msra.mxu0 %v653
        %1027 = vmatpush.msra.mxu0 %v649
        %1028 = vmatmul.f32.gmra.mxu0 %v584
        %v1029 = vpop.f32.mrf.mxu0
        %v1030 = vadd.f32 %v779, %v1029
        %1031 = vmatmul.f32.gmra.mxu0 %v586
        %v1032 = vpop.f32.mrf.mxu0
        %v1033 = vadd.f32 %v779, %v1032
        %1034 = vmatmul.f32.gmra.mxu0 %v588
        %v1035 = vpop.f32.mrf.mxu0
        %v1036 = vadd.f32 %v779, %v1035
        %1037 = vmatmul.f32.gmra.mxu0 %v590
        %v1038 = vpop.f32.mrf.mxu0
        %v1039 = vadd.f32 %v779, %v1038
        %1040 = vmatmul.f32.gmra.mxu0 %v592
        %v1041 = vpop.f32.mrf.mxu0
        %v1042 = vadd.f32 %v779, %v1041
        %1043 = vmatmul.f32.gmra.mxu0 %v594
        %v1044 = vpop.f32.mrf.mxu0
        %v1045 = vadd.f32 %v779, %v1044
        %1046 = vmatmul.f32.gmra.mxu0 %v596
        %v1047 = vpop.f32.mrf.mxu0
        %v1048 = vadd.f32 %v779, %v1047
        %1049 = vmatmul.f32.gmra.mxu0 %v598
        %v1050 = vpop.f32.mrf.mxu0
        %v1051 = vadd.f32 %v779, %v1050
        %1052 = vmatmul.f32.gmra.mxu0 %v600
        %v1053 = vpop.f32.mrf.mxu0
        %v1054 = vadd.f32 %v779, %v1053
        %1055 = vmatmul.f32.gmra.mxu0 %v602
        %v1056 = vpop.f32.mrf.mxu0
        %v1057 = vadd.f32 %v779, %v1056
        %1058 = vmatmul.f32.gmra.mxu0 %v604
        %v1059 = vpop.f32.mrf.mxu0
        %v1060 = vadd.f32 %v779, %v1059
        %1061 = vmatmul.f32.gmra.mxu0 %v606
        %v1062 = vpop.f32.mrf.mxu0
        %v1063 = vadd.f32 %v779, %v1062
        %1064 = vmatmul.f32.gmra.mxu0 %v608
        %v1065 = vpop.f32.mrf.mxu0
        %v1066 = vadd.f32 %v779, %v1065
        %1067 = vmatmul.f32.gmra.mxu0 %v610
        %v1068 = vpop.f32.mrf.mxu0
        %v1069 = vadd.f32 %v779, %v1068
        %1070 = vmatmul.f32.gmra.mxu0 %v612
        %v1071 = vpop.f32.mrf.mxu0
        %v1072 = vadd.f32 %v779, %v1071
        %1073 = vmatmul.f32.gmra.mxu0 %v614
        %v1074 = vpop.f32.mrf.mxu0
        %v1075 = vadd.f32 %v779, %v1074
        %1076 = vmatmul.f32.gmra.mxu0 %v616
        %v1077 = vpop.f32.mrf.mxu0
        %v1078 = vadd.f32 %v779, %v1077
        %1079 = vmatmul.f32.gmra.mxu0 %v618
        %v1080 = vpop.f32.mrf.mxu0
        %v1081 = vadd.f32 %v779, %v1080
        %1082 = vmatmul.f32.gmra.mxu0 %v620
        %v1083 = vpop.f32.mrf.mxu0
        %v1084 = vadd.f32 %v779, %v1083
        %1085 = vmatmul.f32.gmra.mxu0 %v622
        %v1086 = vpop.f32.mrf.mxu0
        %v1087 = vadd.f32 %v779, %v1086
        %1088 = vmatmul.f32.gmra.mxu0 %v624
        %v1089 = vpop.f32.mrf.mxu0
        %v1090 = vadd.f32 %v779, %v1089
        %1091 = vmatmul.f32.gmra.mxu0 %v626
        %v1092 = vpop.f32.mrf.mxu0
        %v1093 = vadd.f32 %v779, %v1092
        %1094 = vmatmul.f32.gmra.mxu0 %v628
        %v1095 = vpop.f32.mrf.mxu0
        %v1096 = vadd.f32 %v779, %v1095
        %1097 = vmatmul.f32.gmra.mxu0 %v630
        %v1098 = vpop.f32.mrf.mxu0
        %v1099 = vadd.f32 %v779, %v1098
        %1100 = vmatmul.f32.gmra.mxu0 %v632
        %v1101 = vpop.f32.mrf.mxu0
        %v1102 = vadd.f32 %v779, %v1101
        %1103 = vmatmul.f32.gmra.mxu0 %v634
        %v1104 = vpop.f32.mrf.mxu0
        %v1105 = vadd.f32 %v779, %v1104
        %1106 = vmatmul.f32.gmra.mxu0 %v636
        %v1107 = vpop.f32.mrf.mxu0
        %v1108 = vadd.f32 %v779, %v1107
        %1109 = vmatmul.f32.gmra.mxu0 %v638
        %v1110 = vpop.f32.mrf.mxu0
        %v1111 = vadd.f32 %v779, %v1110
        %1112 = vmatmul.f32.gmra.mxu0 %v640
        %v1113 = vpop.f32.mrf.mxu0
        %v1114 = vadd.f32 %v779, %v1113
        %1115 = vmatmul.f32.gmra.mxu0 %v642
        %v1116 = vpop.f32.mrf.mxu0
        %v1117 = vadd.f32 %v779, %v1116
        %1118 = vmatmul.f32.gmra.mxu0 %v644
        %v1119 = vpop.f32.mrf.mxu0
        %v1120 = vadd.f32 %v779, %v1119
        %1121 = vmatmul.f32.gmra.mxu0 %v646
        %v1122 = vpop.f32.mrf.mxu0
        %v1123 = vadd.f32 %v779, %v1122
        %1124 = vdwg.mxu0
        %1125 = vmatpush.msra.mxu0 %v773
        %1126 = vmatpush.msra.mxu0 %v769
        %1127 = vmatpush.msra.mxu0 %v765
        %1128 = vmatpush.msra.mxu0 %v761
        %1129 = vmatpush.msra.mxu0 %v757
        %1130 = vmatpush.msra.mxu0 %v753
        %1131 = vmatpush.msra.mxu0 %v749
        %1132 = vmatpush.msra.mxu0 %v745
        %1133 = vmatpush.msra.mxu0 %v741
        %1134 = vmatpush.msra.mxu0 %v737
        %1135 = vmatpush.msra.mxu0 %v733
        %1136 = vmatpush.msra.mxu0 %v729
        %1137 = vmatpush.msra.mxu0 %v725
        %1138 = vmatpush.msra.mxu0 %v721
        %1139 = vmatpush.msra.mxu0 %v717
        %1140 = vmatpush.msra.mxu0 %v713
        %1141 = vmatmul.f32.gmra.mxu0 %v585
        %v1142 = vpop.f32.mrf.mxu0
        %v1143 = vadd.f32 %v1030, %v1142
        %1144 = vmatmul.f32.gmra.mxu0 %v587
        %v1145 = vpop.f32.mrf.mxu0
        %v1146 = vadd.f32 %v1033, %v1145
        %1147 = vmatmul.f32.gmra.mxu0 %v589
        %v1148 = vpop.f32.mrf.mxu0
        %v1149 = vadd.f32 %v1036, %v1148
        %1150 = vmatmul.f32.gmra.mxu0 %v591
        %v1151 = vpop.f32.mrf.mxu0
        %v1152 = vadd.f32 %v1039, %v1151
        %1153 = vmatmul.f32.gmra.mxu0 %v593
        %v1154 = vpop.f32.mrf.mxu0
        %v1155 = vadd.f32 %v1042, %v1154
        %1156 = vmatmul.f32.gmra.mxu0 %v595
        %v1157 = vpop.f32.mrf.mxu0
        %v1158 = vadd.f32 %v1045, %v1157
        %1159 = vmatmul.f32.gmra.mxu0 %v597
        %v1160 = vpop.f32.mrf.mxu0
        %v1161 = vadd.f32 %v1048, %v1160
        %1162 = vmatmul.f32.gmra.mxu0 %v599
        %v1163 = vpop.f32.mrf.mxu0
        %v1164 = vadd.f32 %v1051, %v1163
        %1165 = vmatmul.f32.gmra.mxu0 %v601
        %v1166 = vpop.f32.mrf.mxu0
        %v1167 = vadd.f32 %v1054, %v1166
        %1168 = vmatmul.f32.gmra.mxu0 %v603
        %v1169 = vpop.f32.mrf.mxu0
        %v1170 = vadd.f32 %v1057, %v1169
        %1171 = vmatmul.f32.gmra.mxu0 %v605
        %v1172 = vpop.f32.mrf.mxu0
        %v1173 = vadd.f32 %v1060, %v1172
        %1174 = vmatmul.f32.gmra.mxu0 %v607
        %v1175 = vpop.f32.mrf.mxu0
        %v1176 = vadd.f32 %v1063, %v1175
        %1177 = vmatmul.f32.gmra.mxu0 %v609
        %v1178 = vpop.f32.mrf.mxu0
        %v1179 = vadd.f32 %v1066, %v1178
        %1180 = vmatmul.f32.gmra.mxu0 %v611
        %v1181 = vpop.f32.mrf.mxu0
        %v1182 = vadd.f32 %v1069, %v1181
        %1183 = vmatmul.f32.gmra.mxu0 %v613
        %v1184 = vpop.f32.mrf.mxu0
        %v1185 = vadd.f32 %v1072, %v1184
        %1186 = vmatmul.f32.gmra.mxu0 %v615
        %v1187 = vpop.f32.mrf.mxu0
        %v1188 = vadd.f32 %v1075, %v1187
        %1189 = vmatmul.f32.gmra.mxu0 %v617
        %v1190 = vpop.f32.mrf.mxu0
        %v1191 = vadd.f32 %v1078, %v1190
        %1192 = vmatmul.f32.gmra.mxu0 %v619
        %v1193 = vpop.f32.mrf.mxu0
        %v1194 = vadd.f32 %v1081, %v1193
        %1195 = vmatmul.f32.gmra.mxu0 %v621
        %v1196 = vpop.f32.mrf.mxu0
        %v1197 = vadd.f32 %v1084, %v1196
        %1198 = vmatmul.f32.gmra.mxu0 %v623
        %v1199 = vpop.f32.mrf.mxu0
        %v1200 = vadd.f32 %v1087, %v1199
        %1201 = vmatmul.f32.gmra.mxu0 %v625
        %v1202 = vpop.f32.mrf.mxu0
        %v1203 = vadd.f32 %v1090, %v1202
        %1204 = vmatmul.f32.gmra.mxu0 %v627
        %v1205 = vpop.f32.mrf.mxu0
        %v1206 = vadd.f32 %v1093, %v1205
        %1207 = vmatmul.f32.gmra.mxu0 %v629
        %v1208 = vpop.f32.mrf.mxu0
        %v1209 = vadd.f32 %v1096, %v1208
        %1210 = vmatmul.f32.gmra.mxu0 %v631
        %v1211 = vpop.f32.mrf.mxu0
        %v1212 = vadd.f32 %v1099, %v1211
        %1213 = vmatmul.f32.gmra.mxu0 %v633
        %v1214 = vpop.f32.mrf.mxu0
        %v1215 = vadd.f32 %v1102, %v1214
        %1216 = vmatmul.f32.gmra.mxu0 %v635
        %v1217 = vpop.f32.mrf.mxu0
        %v1218 = vadd.f32 %v1105, %v1217
        %1219 = vmatmul.f32.gmra.mxu0 %v637
        %v1220 = vpop.f32.mrf.mxu0
        %v1221 = vadd.f32 %v1108, %v1220
        %1222 = vmatmul.f32.gmra.mxu0 %v639
        %v1223 = vpop.f32.mrf.mxu0
        %v1224 = vadd.f32 %v1111, %v1223
        %1225 = vmatmul.f32.gmra.mxu0 %v641
        %v1226 = vpop.f32.mrf.mxu0
        %v1227 = vadd.f32 %v1114, %v1226
        %1228 = vmatmul.f32.gmra.mxu0 %v643
        %v1229 = vpop.f32.mrf.mxu0
        %v1230 = vadd.f32 %v1117, %v1229
        %1231 = vmatmul.f32.gmra.mxu0 %v645
        %v1232 = vpop.f32.mrf.mxu0
        %v1233 = vadd.f32 %v1120, %v1232
        %1234 = vmatmul.f32.gmra.mxu0 %v647
        %v1235 = vpop.f32.mrf.mxu0
        %v1236 = vadd.f32 %v1123, %v1235
        %1237 = vdwg.mxu0
        %1238 = vmatpush.msra.mxu0 %v710
        %1239 = vmatpush.msra.mxu0 %v706
        %1240 = vmatpush.msra.mxu0 %v702
        %1241 = vmatpush.msra.mxu0 %v698
        %1242 = vmatpush.msra.mxu0 %v694
        %1243 = vmatpush.msra.mxu0 %v690
        %1244 = vmatpush.msra.mxu0 %v686
        %1245 = vmatpush.msra.mxu0 %v682
        %1246 = vmatpush.msra.mxu0 %v678
        %1247 = vmatpush.msra.mxu0 %v674
        %1248 = vmatpush.msra.mxu0 %v670
        %1249 = vmatpush.msra.mxu0 %v666
        %1250 = vmatpush.msra.mxu0 %v662
        %1251 = vmatpush.msra.mxu0 %v658
        %1252 = vmatpush.msra.mxu0 %v654
        %1253 = vmatpush.msra.mxu0 %v650
        %1254 = vmatmul.f32.gmra.mxu0 %v584
        %v1255 = vpop.f32.mrf.mxu0
        %v1256 = vadd.f32 %v780, %v1255
        %1257 = vmatmul.f32.gmra.mxu0 %v586
        %v1258 = vpop.f32.mrf.mxu0
        %v1259 = vadd.f32 %v780, %v1258
        %1260 = vmatmul.f32.gmra.mxu0 %v588
        %v1261 = vpop.f32.mrf.mxu0
        %v1262 = vadd.f32 %v780, %v1261
        %1263 = vmatmul.f32.gmra.mxu0 %v590
        %v1264 = vpop.f32.mrf.mxu0
        %v1265 = vadd.f32 %v780, %v1264
        %1266 = vmatmul.f32.gmra.mxu0 %v592
        %v1267 = vpop.f32.mrf.mxu0
        %v1268 = vadd.f32 %v780, %v1267
        %1269 = vmatmul.f32.gmra.mxu0 %v594
        %v1270 = vpop.f32.mrf.mxu0
        %v1271 = vadd.f32 %v780, %v1270
        %1272 = vmatmul.f32.gmra.mxu0 %v596
        %v1273 = vpop.f32.mrf.mxu0
        %v1274 = vadd.f32 %v780, %v1273
        %1275 = vmatmul.f32.gmra.mxu0 %v598
        %v1276 = vpop.f32.mrf.mxu0
        %v1277 = vadd.f32 %v780, %v1276
        %1278 = vmatmul.f32.gmra.mxu0 %v600
        %v1279 = vpop.f32.mrf.mxu0
        %v1280 = vadd.f32 %v780, %v1279
        %1281 = vmatmul.f32.gmra.mxu0 %v602
        %v1282 = vpop.f32.mrf.mxu0
        %v1283 = vadd.f32 %v780, %v1282
        %1284 = vmatmul.f32.gmra.mxu0 %v604
        %v1285 = vpop.f32.mrf.mxu0
        %v1286 = vadd.f32 %v780, %v1285
        %1287 = vmatmul.f32.gmra.mxu0 %v606
        %v1288 = vpop.f32.mrf.mxu0
        %v1289 = vadd.f32 %v780, %v1288
        %1290 = vmatmul.f32.gmra.mxu0 %v608
        %v1291 = vpop.f32.mrf.mxu0
        %v1292 = vadd.f32 %v780, %v1291
        %1293 = vmatmul.f32.gmra.mxu0 %v610
        %v1294 = vpop.f32.mrf.mxu0
        %v1295 = vadd.f32 %v780, %v1294
        %1296 = vmatmul.f32.gmra.mxu0 %v612
        %v1297 = vpop.f32.mrf.mxu0
        %v1298 = vadd.f32 %v780, %v1297
        %1299 = vmatmul.f32.gmra.mxu0 %v614
        %v1300 = vpop.f32.mrf.mxu0
        %v1301 = vadd.f32 %v780, %v1300
        %1302 = vmatmul.f32.gmra.mxu0 %v616
        %v1303 = vpop.f32.mrf.mxu0
        %v1304 = vadd.f32 %v780, %v1303
        %1305 = vmatmul.f32.gmra.mxu0 %v618
        %v1306 = vpop.f32.mrf.mxu0
        %v1307 = vadd.f32 %v780, %v1306
        %1308 = vmatmul.f32.gmra.mxu0 %v620
        %v1309 = vpop.f32.mrf.mxu0
        %v1310 = vadd.f32 %v780, %v1309
        %1311 = vmatmul.f32.gmra.mxu0 %v622
        %v1312 = vpop.f32.mrf.mxu0
        %v1313 = vadd.f32 %v780, %v1312
        %1314 = vmatmul.f32.gmra.mxu0 %v624
        %v1315 = vpop.f32.mrf.mxu0
        %v1316 = vadd.f32 %v780, %v1315
        %1317 = vmatmul.f32.gmra.mxu0 %v626
        %v1318 = vpop.f32.mrf.mxu0
        %v1319 = vadd.f32 %v780, %v1318
        %1320 = vmatmul.f32.gmra.mxu0 %v628
        %v1321 = vpop.f32.mrf.mxu0
        %v1322 = vadd.f32 %v780, %v1321
        %1323 = vmatmul.f32.gmra.mxu0 %v630
        %v1324 = vpop.f32.mrf.mxu0
        %v1325 = vadd.f32 %v780, %v1324
        %1326 = vmatmul.f32.gmra.mxu0 %v632
        %v1327 = vpop.f32.mrf.mxu0
        %v1328 = vadd.f32 %v780, %v1327
        %1329 = vmatmul.f32.gmra.mxu0 %v634
        %v1330 = vpop.f32.mrf.mxu0
        %v1331 = vadd.f32 %v780, %v1330
        %1332 = vmatmul.f32.gmra.mxu0 %v636
        %v1333 = vpop.f32.mrf.mxu0
        %v1334 = vadd.f32 %v780, %v1333
        %1335 = vmatmul.f32.gmra.mxu0 %v638
        %v1336 = vpop.f32.mrf.mxu0
        %v1337 = vadd.f32 %v780, %v1336
        %1338 = vmatmul.f32.gmra.mxu0 %v640
        %v1339 = vpop.f32.mrf.mxu0
        %v1340 = vadd.f32 %v780, %v1339
        %1341 = vmatmul.f32.gmra.mxu0 %v642
        %v1342 = vpop.f32.mrf.mxu0
        %v1343 = vadd.f32 %v780, %v1342
        %1344 = vmatmul.f32.gmra.mxu0 %v644
        %v1345 = vpop.f32.mrf.mxu0
        %v1346 = vadd.f32 %v780, %v1345
        %1347 = vmatmul.f32.gmra.mxu0 %v646
        %v1348 = vpop.f32.mrf.mxu0
        %v1349 = vadd.f32 %v780, %v1348
        %1350 = vdwg.mxu0
        %1351 = vmatpush.msra.mxu0 %v774
        %1352 = vmatpush.msra.mxu0 %v770
        %1353 = vmatpush.msra.mxu0 %v766
        %1354 = vmatpush.msra.mxu0 %v762
        %1355 = vmatpush.msra.mxu0 %v758
        %1356 = vmatpush.msra.mxu0 %v754
        %1357 = vmatpush.msra.mxu0 %v750
        %1358 = vmatpush.msra.mxu0 %v746
        %1359 = vmatpush.msra.mxu0 %v742
        %1360 = vmatpush.msra.mxu0 %v738
        %1361 = vmatpush.msra.mxu0 %v734
        %1362 = vmatpush.msra.mxu0 %v730
        %1363 = vmatpush.msra.mxu0 %v726
        %1364 = vmatpush.msra.mxu0 %v722
        %1365 = vmatpush.msra.mxu0 %v718
        %1366 = vmatpush.msra.mxu0 %v714
        %1367 = vmatmul.f32.gmra.mxu0 %v585
        %v1368 = vpop.f32.mrf.mxu0
        %v1369 = vadd.f32 %v1256, %v1368
        %1370 = vmatmul.f32.gmra.mxu0 %v587
        %v1371 = vpop.f32.mrf.mxu0
        %v1372 = vadd.f32 %v1259, %v1371
        %1373 = vmatmul.f32.gmra.mxu0 %v589
        %v1374 = vpop.f32.mrf.mxu0
        %v1375 = vadd.f32 %v1262, %v1374
        %1376 = vmatmul.f32.gmra.mxu0 %v591
        %v1377 = vpop.f32.mrf.mxu0
        %v1378 = vadd.f32 %v1265, %v1377
        %1379 = vmatmul.f32.gmra.mxu0 %v593
        %v1380 = vpop.f32.mrf.mxu0
        %v1381 = vadd.f32 %v1268, %v1380
        %1382 = vmatmul.f32.gmra.mxu0 %v595
        %v1383 = vpop.f32.mrf.mxu0
        %v1384 = vadd.f32 %v1271, %v1383
        %1385 = vmatmul.f32.gmra.mxu0 %v597
        %v1386 = vpop.f32.mrf.mxu0
        %v1387 = vadd.f32 %v1274, %v1386
        %1388 = vmatmul.f32.gmra.mxu0 %v599
        %v1389 = vpop.f32.mrf.mxu0
        %v1390 = vadd.f32 %v1277, %v1389
        %1391 = vmatmul.f32.gmra.mxu0 %v601
        %v1392 = vpop.f32.mrf.mxu0
        %v1393 = vadd.f32 %v1280, %v1392
        %1394 = vmatmul.f32.gmra.mxu0 %v603
        %v1395 = vpop.f32.mrf.mxu0
        %v1396 = vadd.f32 %v1283, %v1395
        %1397 = vmatmul.f32.gmra.mxu0 %v605
        %v1398 = vpop.f32.mrf.mxu0
        %v1399 = vadd.f32 %v1286, %v1398
        %1400 = vmatmul.f32.gmra.mxu0 %v607
        %v1401 = vpop.f32.mrf.mxu0
        %v1402 = vadd.f32 %v1289, %v1401
        %1403 = vmatmul.f32.gmra.mxu0 %v609
        %v1404 = vpop.f32.mrf.mxu0
        %v1405 = vadd.f32 %v1292, %v1404
        %1406 = vmatmul.f32.gmra.mxu0 %v611
        %v1407 = vpop.f32.mrf.mxu0
        %v1408 = vadd.f32 %v1295, %v1407
        %1409 = vmatmul.f32.gmra.mxu0 %v613
        %v1410 = vpop.f32.mrf.mxu0
        %v1411 = vadd.f32 %v1298, %v1410
        %1412 = vmatmul.f32.gmra.mxu0 %v615
        %v1413 = vpop.f32.mrf.mxu0
        %v1414 = vadd.f32 %v1301, %v1413
        %1415 = vmatmul.f32.gmra.mxu0 %v617
        %v1416 = vpop.f32.mrf.mxu0
        %v1417 = vadd.f32 %v1304, %v1416
        %1418 = vmatmul.f32.gmra.mxu0 %v619
        %v1419 = vpop.f32.mrf.mxu0
        %v1420 = vadd.f32 %v1307, %v1419
        %1421 = vmatmul.f32.gmra.mxu0 %v621
        %v1422 = vpop.f32.mrf.mxu0
        %v1423 = vadd.f32 %v1310, %v1422
        %1424 = vmatmul.f32.gmra.mxu0 %v623
        %v1425 = vpop.f32.mrf.mxu0
        %v1426 = vadd.f32 %v1313, %v1425
        %1427 = vmatmul.f32.gmra.mxu0 %v625
        %v1428 = vpop.f32.mrf.mxu0
        %v1429 = vadd.f32 %v1316, %v1428
        %1430 = vmatmul.f32.gmra.mxu0 %v627
        %v1431 = vpop.f32.mrf.mxu0
        %v1432 = vadd.f32 %v1319, %v1431
        %1433 = vmatmul.f32.gmra.mxu0 %v629
        %v1434 = vpop.f32.mrf.mxu0
        %v1435 = vadd.f32 %v1322, %v1434
        %1436 = vmatmul.f32.gmra.mxu0 %v631
        %v1437 = vpop.f32.mrf.mxu0
        %v1438 = vadd.f32 %v1325, %v1437
        %1439 = vmatmul.f32.gmra.mxu0 %v633
        %v1440 = vpop.f32.mrf.mxu0
        %v1441 = vadd.f32 %v1328, %v1440
        %1442 = vmatmul.f32.gmra.mxu0 %v635
        %v1443 = vpop.f32.mrf.mxu0
        %v1444 = vadd.f32 %v1331, %v1443
        %1445 = vmatmul.f32.gmra.mxu0 %v637
        %v1446 = vpop.f32.mrf.mxu0
        %v1447 = vadd.f32 %v1334, %v1446
        %1448 = vmatmul.f32.gmra.mxu0 %v639
        %v1449 = vpop.f32.mrf.mxu0
        %v1450 = vadd.f32 %v1337, %v1449
        %1451 = vmatmul.f32.gmra.mxu0 %v641
        %v1452 = vpop.f32.mrf.mxu0
        %v1453 = vadd.f32 %v1340, %v1452
        %1454 = vmatmul.f32.gmra.mxu0 %v643
        %v1455 = vpop.f32.mrf.mxu0
        %v1456 = vadd.f32 %v1343, %v1455
        %1457 = vmatmul.f32.gmra.mxu0 %v645
        %v1458 = vpop.f32.mrf.mxu0
        %v1459 = vadd.f32 %v1346, %v1458
        %1460 = vmatmul.f32.gmra.mxu0 %v647
        %v1461 = vpop.f32.mrf.mxu0
        %v1462 = vadd.f32 %v1349, %v1461
        %1463 = vdwg.mxu0
        %1464 = vmatpush.msra.mxu0 %v711
        %1465 = vmatpush.msra.mxu0 %v707
        %1466 = vmatpush.msra.mxu0 %v703
        %1467 = vmatpush.msra.mxu0 %v699
        %1468 = vmatpush.msra.mxu0 %v695
        %1469 = vmatpush.msra.mxu0 %v691
        %1470 = vmatpush.msra.mxu0 %v687
        %1471 = vmatpush.msra.mxu0 %v683
        %1472 = vmatpush.msra.mxu0 %v679
        %1473 = vmatpush.msra.mxu0 %v675
        %1474 = vmatpush.msra.mxu0 %v671
        %1475 = vmatpush.msra.mxu0 %v667
        %1476 = vmatpush.msra.mxu0 %v663
        %1477 = vmatpush.msra.mxu0 %v659
        %1478 = vmatpush.msra.mxu0 %v655
        %1479 = vmatpush.msra.mxu0 %v651
        %1480 = vmatmul.f32.gmra.mxu0 %v584
        %v1481 = vpop.f32.mrf.mxu0
        %v1482 = vadd.f32 %v781, %v1481
        %1483 = vmatmul.f32.gmra.mxu0 %v586
        %v1484 = vpop.f32.mrf.mxu0
        %v1485 = vadd.f32 %v781, %v1484
        %1486 = vmatmul.f32.gmra.mxu0 %v588
        %v1487 = vpop.f32.mrf.mxu0
        %v1488 = vadd.f32 %v781, %v1487
        %1489 = vmatmul.f32.gmra.mxu0 %v590
        %v1490 = vpop.f32.mrf.mxu0
        %v1491 = vadd.f32 %v781, %v1490
        %1492 = vmatmul.f32.gmra.mxu0 %v592
        %v1493 = vpop.f32.mrf.mxu0
        %v1494 = vadd.f32 %v781, %v1493
        %1495 = vmatmul.f32.gmra.mxu0 %v594
        %v1496 = vpop.f32.mrf.mxu0
        %v1497 = vadd.f32 %v781, %v1496
        %1498 = vmatmul.f32.gmra.mxu0 %v596
        %v1499 = vpop.f32.mrf.mxu0
        %v1500 = vadd.f32 %v781, %v1499
        %1501 = vmatmul.f32.gmra.mxu0 %v598
        %v1502 = vpop.f32.mrf.mxu0
        %v1503 = vadd.f32 %v781, %v1502
        %1504 = vmatmul.f32.gmra.mxu0 %v600
        %v1505 = vpop.f32.mrf.mxu0
        %v1506 = vadd.f32 %v781, %v1505
        %1507 = vmatmul.f32.gmra.mxu0 %v602
        %v1508 = vpop.f32.mrf.mxu0
        %v1509 = vadd.f32 %v781, %v1508
        %1510 = vmatmul.f32.gmra.mxu0 %v604
        %v1511 = vpop.f32.mrf.mxu0
        %v1512 = vadd.f32 %v781, %v1511
        %1513 = vmatmul.f32.gmra.mxu0 %v606
        %v1514 = vpop.f32.mrf.mxu0
        %v1515 = vadd.f32 %v781, %v1514
        %1516 = vmatmul.f32.gmra.mxu0 %v608
        %v1517 = vpop.f32.mrf.mxu0
        %v1518 = vadd.f32 %v781, %v1517
        %1519 = vmatmul.f32.gmra.mxu0 %v610
        %v1520 = vpop.f32.mrf.mxu0
        %v1521 = vadd.f32 %v781, %v1520
        %1522 = vmatmul.f32.gmra.mxu0 %v612
        %v1523 = vpop.f32.mrf.mxu0
        %v1524 = vadd.f32 %v781, %v1523
        %1525 = vmatmul.f32.gmra.mxu0 %v614
        %v1526 = vpop.f32.mrf.mxu0
        %v1527 = vadd.f32 %v781, %v1526
        %1528 = vmatmul.f32.gmra.mxu0 %v616
        %v1529 = vpop.f32.mrf.mxu0
        %v1530 = vadd.f32 %v781, %v1529
        %1531 = vmatmul.f32.gmra.mxu0 %v618
        %v1532 = vpop.f32.mrf.mxu0
        %v1533 = vadd.f32 %v781, %v1532
        %1534 = vmatmul.f32.gmra.mxu0 %v620
        %v1535 = vpop.f32.mrf.mxu0
        %v1536 = vadd.f32 %v781, %v1535
        %1537 = vmatmul.f32.gmra.mxu0 %v622
        %v1538 = vpop.f32.mrf.mxu0
        %v1539 = vadd.f32 %v781, %v1538
        %1540 = vmatmul.f32.gmra.mxu0 %v624
        %v1541 = vpop.f32.mrf.mxu0
        %v1542 = vadd.f32 %v781, %v1541
        %1543 = vmatmul.f32.gmra.mxu0 %v626
        %v1544 = vpop.f32.mrf.mxu0
        %v1545 = vadd.f32 %v781, %v1544
        %1546 = vmatmul.f32.gmra.mxu0 %v628
        %v1547 = vpop.f32.mrf.mxu0
        %v1548 = vadd.f32 %v781, %v1547
        %1549 = vmatmul.f32.gmra.mxu0 %v630
        %v1550 = vpop.f32.mrf.mxu0
        %v1551 = vadd.f32 %v781, %v1550
        %1552 = vmatmul.f32.gmra.mxu0 %v632
        %v1553 = vpop.f32.mrf.mxu0
        %v1554 = vadd.f32 %v781, %v1553
        %1555 = vmatmul.f32.gmra.mxu0 %v634
        %v1556 = vpop.f32.mrf.mxu0
        %v1557 = vadd.f32 %v781, %v1556
        %1558 = vmatmul.f32.gmra.mxu0 %v636
        %v1559 = vpop.f32.mrf.mxu0
        %v1560 = vadd.f32 %v781, %v1559
        %1561 = vmatmul.f32.gmra.mxu0 %v638
        %v1562 = vpop.f32.mrf.mxu0
        %v1563 = vadd.f32 %v781, %v1562
        %1564 = vmatmul.f32.gmra.mxu0 %v640
        %v1565 = vpop.f32.mrf.mxu0
        %v1566 = vadd.f32 %v781, %v1565
        %1567 = vmatmul.f32.gmra.mxu0 %v642
        %v1568 = vpop.f32.mrf.mxu0
        %v1569 = vadd.f32 %v781, %v1568
        %1570 = vmatmul.f32.gmra.mxu0 %v644
        %v1571 = vpop.f32.mrf.mxu0
        %v1572 = vadd.f32 %v781, %v1571
        %1573 = vmatmul.f32.gmra.mxu0 %v646
        %v1574 = vpop.f32.mrf.mxu0
        %v1575 = vadd.f32 %v781, %v1574
        %1576 = vdwg.mxu0
        %1577 = vmatpush.msra.mxu0 %v775
        %1578 = vmatpush.msra.mxu0 %v771
        %1579 = vmatpush.msra.mxu0 %v767
        %1580 = vmatpush.msra.mxu0 %v763
        %1581 = vmatpush.msra.mxu0 %v759
        %1582 = vmatpush.msra.mxu0 %v755
        %1583 = vmatpush.msra.mxu0 %v751
        %1584 = vmatpush.msra.mxu0 %v747
        %1585 = vmatpush.msra.mxu0 %v743
        %1586 = vmatpush.msra.mxu0 %v739
        %1587 = vmatpush.msra.mxu0 %v735
        %1588 = vmatpush.msra.mxu0 %v731
        %1589 = vmatpush.msra.mxu0 %v727
        %1590 = vmatpush.msra.mxu0 %v723
        %1591 = vmatpush.msra.mxu0 %v719
        %1592 = vmatpush.msra.mxu0 %v715
        %1593 = vmatmul.f32.gmra.mxu0 %v585
        %v1594 = vpop.f32.mrf.mxu0
        %v1595 = vadd.f32 %v1482, %v1594
        %1596 = vmatmul.f32.gmra.mxu0 %v587
        %v1597 = vpop.f32.mrf.mxu0
        %v1598 = vadd.f32 %v1485, %v1597
        %1599 = vmatmul.f32.gmra.mxu0 %v589
        %v1600 = vpop.f32.mrf.mxu0
        %v1601 = vadd.f32 %v1488, %v1600
        %1602 = vmatmul.f32.gmra.mxu0 %v591
        %v1603 = vpop.f32.mrf.mxu0
        %v1604 = vadd.f32 %v1491, %v1603
        %1605 = vmatmul.f32.gmra.mxu0 %v593
        %v1606 = vpop.f32.mrf.mxu0
        %v1607 = vadd.f32 %v1494, %v1606
        %1608 = vmatmul.f32.gmra.mxu0 %v595
        %v1609 = vpop.f32.mrf.mxu0
        %v1610 = vadd.f32 %v1497, %v1609
        %1611 = vmatmul.f32.gmra.mxu0 %v597
        %v1612 = vpop.f32.mrf.mxu0
        %v1613 = vadd.f32 %v1500, %v1612
        %1614 = vmatmul.f32.gmra.mxu0 %v599
        %v1615 = vpop.f32.mrf.mxu0
        %v1616 = vadd.f32 %v1503, %v1615
        %1617 = vmatmul.f32.gmra.mxu0 %v601
        %v1618 = vpop.f32.mrf.mxu0
        %v1619 = vadd.f32 %v1506, %v1618
        %1620 = vmatmul.f32.gmra.mxu0 %v603
        %v1621 = vpop.f32.mrf.mxu0
        %v1622 = vadd.f32 %v1509, %v1621
        %1623 = vmatmul.f32.gmra.mxu0 %v605
        %v1624 = vpop.f32.mrf.mxu0
        %v1625 = vadd.f32 %v1512, %v1624
        %1626 = vmatmul.f32.gmra.mxu0 %v607
        %v1627 = vpop.f32.mrf.mxu0
        %v1628 = vadd.f32 %v1515, %v1627
        %1629 = vmatmul.f32.gmra.mxu0 %v609
        %v1630 = vpop.f32.mrf.mxu0
        %v1631 = vadd.f32 %v1518, %v1630
        %1632 = vmatmul.f32.gmra.mxu0 %v611
        %v1633 = vpop.f32.mrf.mxu0
        %v1634 = vadd.f32 %v1521, %v1633
        %1635 = vmatmul.f32.gmra.mxu0 %v613
        %v1636 = vpop.f32.mrf.mxu0
        %v1637 = vadd.f32 %v1524, %v1636
        %1638 = vmatmul.f32.gmra.mxu0 %v615
        %v1639 = vpop.f32.mrf.mxu0
        %v1640 = vadd.f32 %v1527, %v1639
        %1641 = vmatmul.f32.gmra.mxu0 %v617
        %v1642 = vpop.f32.mrf.mxu0
        %v1643 = vadd.f32 %v1530, %v1642
        %1644 = vmatmul.f32.gmra.mxu0 %v619
        %v1645 = vpop.f32.mrf.mxu0
        %v1646 = vadd.f32 %v1533, %v1645
        %1647 = vmatmul.f32.gmra.mxu0 %v621
        %v1648 = vpop.f32.mrf.mxu0
        %v1649 = vadd.f32 %v1536, %v1648
        %1650 = vmatmul.f32.gmra.mxu0 %v623
        %v1651 = vpop.f32.mrf.mxu0
        %v1652 = vadd.f32 %v1539, %v1651
        %1653 = vmatmul.f32.gmra.mxu0 %v625
        %v1654 = vpop.f32.mrf.mxu0
        %v1655 = vadd.f32 %v1542, %v1654
        %1656 = vmatmul.f32.gmra.mxu0 %v627
        %v1657 = vpop.f32.mrf.mxu0
        %v1658 = vadd.f32 %v1545, %v1657
        %1659 = vmatmul.f32.gmra.mxu0 %v629
        %v1660 = vpop.f32.mrf.mxu0
        %v1661 = vadd.f32 %v1548, %v1660
        %1662 = vmatmul.f32.gmra.mxu0 %v631
        %v1663 = vpop.f32.mrf.mxu0
        %v1664 = vadd.f32 %v1551, %v1663
        %1665 = vmatmul.f32.gmra.mxu0 %v633
        %v1666 = vpop.f32.mrf.mxu0
        %v1667 = vadd.f32 %v1554, %v1666
        %1668 = vmatmul.f32.gmra.mxu0 %v635
        %v1669 = vpop.f32.mrf.mxu0
        %v1670 = vadd.f32 %v1557, %v1669
        %1671 = vmatmul.f32.gmra.mxu0 %v637
        %v1672 = vpop.f32.mrf.mxu0
        %v1673 = vadd.f32 %v1560, %v1672
        %1674 = vmatmul.f32.gmra.mxu0 %v639
        %v1675 = vpop.f32.mrf.mxu0
        %v1676 = vadd.f32 %v1563, %v1675
        %1677 = vmatmul.f32.gmra.mxu0 %v641
        %v1678 = vpop.f32.mrf.mxu0
        %v1679 = vadd.f32 %v1566, %v1678
        %1680 = vmatmul.f32.gmra.mxu0 %v643
        %v1681 = vpop.f32.mrf.mxu0
        %v1682 = vadd.f32 %v1569, %v1681
        %1683 = vmatmul.f32.gmra.mxu0 %v645
        %v1684 = vpop.f32.mrf.mxu0
        %v1685 = vadd.f32 %v1572, %v1684
        %1686 = vmatmul.f32.gmra.mxu0 %v647
        %v1687 = vpop.f32.mrf.mxu0
        %v1688 = vadd.f32 %v1575, %v1687
        %1689 = vdwg.mxu0
        %v1690 = vmax.f32 %v917, 0.0
        %v1691 = vmax.f32 %v1143, 0.0
        %v1692 = vmax.f32 %v1369, 0.0
        %v1693 = vmax.f32 %v1595, 0.0
        %v1694 = vmax.f32 %v920, 0.0
        %v1695 = vmax.f32 %v1146, 0.0
        %v1696 = vmax.f32 %v1372, 0.0
        %v1697 = vmax.f32 %v1598, 0.0
        %v1698 = vmax.f32 %v923, 0.0
        %v1699 = vmax.f32 %v1149, 0.0
        %v1700 = vmax.f32 %v1375, 0.0
        %v1701 = vmax.f32 %v1601, 0.0
        %v1702 = vmax.f32 %v926, 0.0
        %v1703 = vmax.f32 %v1152, 0.0
        %v1704 = vmax.f32 %v1378, 0.0
        %v1705 = vmax.f32 %v1604, 0.0
        %v1706 = vmax.f32 %v929, 0.0
        %v1707 = vmax.f32 %v1155, 0.0
        %v1708 = vmax.f32 %v1381, 0.0
        %v1709 = vmax.f32 %v1607, 0.0
        %v1710 = vmax.f32 %v932, 0.0
        %v1711 = vmax.f32 %v1158, 0.0
        %v1712 = vmax.f32 %v1384, 0.0
        %v1713 = vmax.f32 %v1610, 0.0
        %v1714 = vmax.f32 %v935, 0.0
        %v1715 = vmax.f32 %v1161, 0.0
        %v1716 = vmax.f32 %v1387, 0.0
        %v1717 = vmax.f32 %v1613, 0.0
        %v1718 = vmax.f32 %v938, 0.0
        %v1719 = vmax.f32 %v1164, 0.0
        %v1720 = vmax.f32 %v1390, 0.0
        %v1721 = vmax.f32 %v1616, 0.0
        %v1722 = vmax.f32 %v941, 0.0
        %v1723 = vmax.f32 %v1167, 0.0
        %v1724 = vmax.f32 %v1393, 0.0
        %v1725 = vmax.f32 %v1619, 0.0
        %v1726 = vmax.f32 %v944, 0.0
        %v1727 = vmax.f32 %v1170, 0.0
        %v1728 = vmax.f32 %v1396, 0.0
        %v1729 = vmax.f32 %v1622, 0.0
        %v1730 = vmax.f32 %v947, 0.0
        %v1731 = vmax.f32 %v1173, 0.0
        %v1732 = vmax.f32 %v1399, 0.0
        %v1733 = vmax.f32 %v1625, 0.0
        %v1734 = vmax.f32 %v950, 0.0
        %v1735 = vmax.f32 %v1176, 0.0
        %v1736 = vmax.f32 %v1402, 0.0
        %v1737 = vmax.f32 %v1628, 0.0
        %v1738 = vmax.f32 %v953, 0.0
        %v1739 = vmax.f32 %v1179, 0.0
        %v1740 = vmax.f32 %v1405, 0.0
        %v1741 = vmax.f32 %v1631, 0.0
        %v1742 = vmax.f32 %v956, 0.0
        %v1743 = vmax.f32 %v1182, 0.0
        %v1744 = vmax.f32 %v1408, 0.0
        %v1745 = vmax.f32 %v1634, 0.0
        %v1746 = vmax.f32 %v959, 0.0
        %v1747 = vmax.f32 %v1185, 0.0
        %v1748 = vmax.f32 %v1411, 0.0
        %v1749 = vmax.f32 %v1637, 0.0
        %v1750 = vmax.f32 %v962, 0.0
        %v1751 = vmax.f32 %v1188, 0.0
        %v1752 = vmax.f32 %v1414, 0.0
        %v1753 = vmax.f32 %v1640, 0.0
        %v1754 = vmax.f32 %v965, 0.0
        %v1755 = vmax.f32 %v1191, 0.0
        %v1756 = vmax.f32 %v1417, 0.0
        %v1757 = vmax.f32 %v1643, 0.0
        %v1758 = vmax.f32 %v968, 0.0
        %v1759 = vmax.f32 %v1194, 0.0
        %v1760 = vmax.f32 %v1420, 0.0
        %v1761 = vmax.f32 %v1646, 0.0
        %v1762 = vmax.f32 %v971, 0.0
        %v1763 = vmax.f32 %v1197, 0.0
        %v1764 = vmax.f32 %v1423, 0.0
        %v1765 = vmax.f32 %v1649, 0.0
        %v1766 = vmax.f32 %v974, 0.0
        %v1767 = vmax.f32 %v1200, 0.0
        %v1768 = vmax.f32 %v1426, 0.0
        %v1769 = vmax.f32 %v1652, 0.0
        %v1770 = vmax.f32 %v977, 0.0
        %v1771 = vmax.f32 %v1203, 0.0
        %v1772 = vmax.f32 %v1429, 0.0
        %v1773 = vmax.f32 %v1655, 0.0
        %v1774 = vmax.f32 %v980, 0.0
        %v1775 = vmax.f32 %v1206, 0.0
        %v1776 = vmax.f32 %v1432, 0.0
        %v1777 = vmax.f32 %v1658, 0.0
        %v1778 = vmax.f32 %v983, 0.0
        %v1779 = vmax.f32 %v1209, 0.0
        %v1780 = vmax.f32 %v1435, 0.0
        %v1781 = vmax.f32 %v1661, 0.0
        %v1782 = vmax.f32 %v986, 0.0
        %v1783 = vmax.f32 %v1212, 0.0
        %v1784 = vmax.f32 %v1438, 0.0
        %v1785 = vmax.f32 %v1664, 0.0
        %v1786 = vmax.f32 %v989, 0.0
        %v1787 = vmax.f32 %v1215, 0.0
        %v1788 = vmax.f32 %v1441, 0.0
        %v1789 = vmax.f32 %v1667, 0.0
        %v1790 = vmax.f32 %v992, 0.0
        %v1791 = vmax.f32 %v1218, 0.0
        %v1792 = vmax.f32 %v1444, 0.0
        %v1793 = vmax.f32 %v1670, 0.0
        %v1794 = vmax.f32 %v995, 0.0
        %v1795 = vmax.f32 %v1221, 0.0
        %v1796 = vmax.f32 %v1447, 0.0
        %v1797 = vmax.f32 %v1673, 0.0
        %v1798 = vmax.f32 %v998, 0.0
        %v1799 = vmax.f32 %v1224, 0.0
        %v1800 = vmax.f32 %v1450, 0.0
        %v1801 = vmax.f32 %v1676, 0.0
        %v1802 = vmax.f32 %v1001, 0.0
        %v1803 = vmax.f32 %v1227, 0.0
        %v1804 = vmax.f32 %v1453, 0.0
        %v1805 = vmax.f32 %v1679, 0.0
        %v1806 = vmax.f32 %v1004, 0.0
        %v1807 = vmax.f32 %v1230, 0.0
        %v1808 = vmax.f32 %v1456, 0.0
        %v1809 = vmax.f32 %v1682, 0.0
        %v1810 = vmax.f32 %v1007, 0.0
        %v1811 = vmax.f32 %v1233, 0.0
        %v1812 = vmax.f32 %v1459, 0.0
        %v1813 = vmax.f32 %v1685, 0.0
        %v1814 = vmax.f32 %v1010, 0.0
        %v1815 = vmax.f32 %v1236, 0.0
        %v1816 = vmax.f32 %v1462, 0.0
        %v1817 = vmax.f32 %v1688, 0.0
        %1818 = vst [vmem:[%s491] sm:$0xff] %v1690
        %1819 = vst [vmem:[%s491 + $0x8] sm:$0xff] %v1691
        %1820 = vst [vmem:[%s491 + $0x10] sm:$0xff] %v1692
        %1821 = vst [vmem:[%s491 + $0x18] sm:$0xff] %v1693
        %1822 = vst [vmem:[%s491 + $0x20] sm:$0xff] %v1694
        %1823 = vst [vmem:[%s491 + $0x28] sm:$0xff] %v1695
        %1824 = vst [vmem:[%s491 + $0x30] sm:$0xff] %v1696
        %1825 = vst [vmem:[%s491 + $0x38] sm:$0xff] %v1697
        %1826 = vst [vmem:[%s491 + $0x40] sm:$0xff] %v1698
        %1827 = vst [vmem:[%s491 + $0x48] sm:$0xff] %v1699
        %1828 = vst [vmem:[%s491 + $0x50] sm:$0xff] %v1700
        %1829 = vst [vmem:[%s491 + $0x58] sm:$0xff] %v1701
        %1830 = vst [vmem:[%s491 + $0x60] sm:$0xff] %v1702
        %1831 = vst [vmem:[%s491 + $0x68] sm:$0xff] %v1703
        %1832 = vst [vmem:[%s491 + $0x70] sm:$0xff] %v1704
        %1833 = vst [vmem:[%s491 + $0x78] sm:$0xff] %v1705
        %1834 = vst [vmem:[%s491 + $0x80] sm:$0xff] %v1706
        %1835 = vst [vmem:[%s491 + $0x88] sm:$0xff] %v1707
        %1836 = vst [vmem:[%s491 + $0x90] sm:$0xff] %v1708
        %1837 = vst [vmem:[%s491 + $0x98] sm:$0xff] %v1709
        %1838 = vst [vmem:[%s491 + $0xa0] sm:$0xff] %v1710
        %1839 = vst [vmem:[%s491 + $0xa8] sm:$0xff] %v1711
        %1840 = vst [vmem:[%s491 + $0xb0] sm:$0xff] %v1712
        %1841 = vst [vmem:[%s491 + $0xb8] sm:$0xff] %v1713
        %1842 = vst [vmem:[%s491 + $0xc0] sm:$0xff] %v1714
        %1843 = vst [vmem:[%s491 + $0xc8] sm:$0xff] %v1715
        %1844 = vst [vmem:[%s491 + $0xd0] sm:$0xff] %v1716
        %1845 = vst [vmem:[%s491 + $0xd8] sm:$0xff] %v1717
        %1846 = vst [vmem:[%s491 + $0xe0] sm:$0xff] %v1718
        %1847 = vst [vmem:[%s491 + $0xe8] sm:$0xff] %v1719
        %1848 = vst [vmem:[%s491 + $0xf0] sm:$0xff] %v1720
        %1849 = vst [vmem:[%s491 + $0xf8] sm:$0xff] %v1721
        %1850 = vst [vmem:[%s491 + $0x100] sm:$0xff] %v1722
        %1851 = vst [vmem:[%s491 + $0x108] sm:$0xff] %v1723
        %1852 = vst [vmem:[%s491 + $0x110] sm:$0xff] %v1724
        %1853 = vst [vmem:[%s491 + $0x118] sm:$0xff] %v1725
        %1854 = vst [vmem:[%s491 + $0x120] sm:$0xff] %v1726
        %1855 = vst [vmem:[%s491 + $0x128] sm:$0xff] %v1727
        %1856 = vst [vmem:[%s491 + $0x130] sm:$0xff] %v1728
        %1857 = vst [vmem:[%s491 + $0x138] sm:$0xff] %v1729
        %1858 = vst [vmem:[%s491 + $0x140] sm:$0xff] %v1730
        %1859 = vst [vmem:[%s491 + $0x148] sm:$0xff] %v1731
        %1860 = vst [vmem:[%s491 + $0x150] sm:$0xff] %v1732
        %1861 = vst [vmem:[%s491 + $0x158] sm:$0xff] %v1733
        %1862 = vst [vmem:[%s491 + $0x160] sm:$0xff] %v1734
        %1863 = vst [vmem:[%s491 + $0x168] sm:$0xff] %v1735
        %1864 = vst [vmem:[%s491 + $0x170] sm:$0xff] %v1736
        %1865 = vst [vmem:[%s491 + $0x178] sm:$0xff] %v1737
        %1866 = vst [vmem:[%s491 + $0x180] sm:$0xff] %v1738
        %1867 = vst [vmem:[%s491 + $0x188] sm:$0xff] %v1739
        %1868 = vst [vmem:[%s491 + $0x190] sm:$0xff] %v1740
        %1869 = vst [vmem:[%s491 + $0x198] sm:$0xff] %v1741
        %1870 = vst [vmem:[%s491 + $0x1a0] sm:$0xff] %v1742
        %1871 = vst [vmem:[%s491 + $0x1a8] sm:$0xff] %v1743
        %1872 = vst [vmem:[%s491 + $0x1b0] sm:$0xff] %v1744
        %1873 = vst [vmem:[%s491 + $0x1b8] sm:$0xff] %v1745
        %1874 = vst [vmem:[%s491 + $0x1c0] sm:$0xff] %v1746
        %1875 = vst [vmem:[%s491 + $0x1c8] sm:$0xff] %v1747
        %1876 = vst [vmem:[%s491 + $0x1d0] sm:$0xff] %v1748
        %1877 = vst [vmem:[%s491 + $0x1d8] sm:$0xff] %v1749
        %1878 = vst [vmem:[%s491 + $0x1e0] sm:$0xff] %v1750
        %1879 = vst [vmem:[%s491 + $0x1e8] sm:$0xff] %v1751
        %1880 = vst [vmem:[%s491 + $0x1f0] sm:$0xff] %v1752
        %1881 = vst [vmem:[%s491 + $0x1f8] sm:$0xff] %v1753
        %1882 = vst [vmem:[%s491 + $0x200] sm:$0xff] %v1754
        %1883 = vst [vmem:[%s491 + $0x208] sm:$0xff] %v1755
        %1884 = vst [vmem:[%s491 + $0x210] sm:$0xff] %v1756
        %1885 = vst [vmem:[%s491 + $0x218] sm:$0xff] %v1757
        %1886 = vst [vmem:[%s491 + $0x220] sm:$0xff] %v1758
        %1887 = vst [vmem:[%s491 + $0x228] sm:$0xff] %v1759
        %1888 = vst [vmem:[%s491 + $0x230] sm:$0xff] %v1760
        %1889 = vst [vmem:[%s491 + $0x238] sm:$0xff] %v1761
        %1890 = vst [vmem:[%s491 + $0x240] sm:$0xff] %v1762
        %1891 = vst [vmem:[%s491 + $0x248] sm:$0xff] %v1763
        %1892 = vst [vmem:[%s491 + $0x250] sm:$0xff] %v1764
        %1893 = vst [vmem:[%s491 + $0x258] sm:$0xff] %v1765
        %1894 = vst [vmem:[%s491 + $0x260] sm:$0xff] %v1766
        %1895 = vst [vmem:[%s491 + $0x268] sm:$0xff] %v1767
        %1896 = vst [vmem:[%s491 + $0x270] sm:$0xff] %v1768
        %1897 = vst [vmem:[%s491 + $0x278] sm:$0xff] %v1769
        %1898 = vst [vmem:[%s491 + $0x280] sm:$0xff] %v1770
        %1899 = vst [vmem:[%s491 + $0x288] sm:$0xff] %v1771
        %1900 = vst [vmem:[%s491 + $0x290] sm:$0xff] %v1772
        %1901 = vst [vmem:[%s491 + $0x298] sm:$0xff] %v1773
        %1902 = vst [vmem:[%s491 + $0x2a0] sm:$0xff] %v1774
        %1903 = vst [vmem:[%s491 + $0x2a8] sm:$0xff] %v1775
        %1904 = vst [vmem:[%s491 + $0x2b0] sm:$0xff] %v1776
        %1905 = vst [vmem:[%s491 + $0x2b8] sm:$0xff] %v1777
        %1906 = vst [vmem:[%s491 + $0x2c0] sm:$0xff] %v1778
        %1907 = vst [vmem:[%s491 + $0x2c8] sm:$0xff] %v1779
        %1908 = vst [vmem:[%s491 + $0x2d0] sm:$0xff] %v1780
        %1909 = vst [vmem:[%s491 + $0x2d8] sm:$0xff] %v1781
        %1910 = vst [vmem:[%s491 + $0x2e0] sm:$0xff] %v1782
        %1911 = vst [vmem:[%s491 + $0x2e8] sm:$0xff] %v1783
        %1912 = vst [vmem:[%s491 + $0x2f0] sm:$0xff] %v1784
        %1913 = vst [vmem:[%s491 + $0x2f8] sm:$0xff] %v1785
        %1914 = vst [vmem:[%s491 + $0x300] sm:$0xff] %v1786
        %1915 = vst [vmem:[%s491 + $0x308] sm:$0xff] %v1787
        %1916 = vst [vmem:[%s491 + $0x310] sm:$0xff] %v1788
        %1917 = vst [vmem:[%s491 + $0x318] sm:$0xff] %v1789
        %1918 = vst [vmem:[%s491 + $0x320] sm:$0xff] %v1790
        %1919 = vst [vmem:[%s491 + $0x328] sm:$0xff] %v1791
        %1920 = vst [vmem:[%s491 + $0x330] sm:$0xff] %v1792
        %1921 = vst [vmem:[%s491 + $0x338] sm:$0xff] %v1793
        %1922 = vst [vmem:[%s491 + $0x340] sm:$0xff] %v1794
        %1923 = vst [vmem:[%s491 + $0x348] sm:$0xff] %v1795
        %1924 = vst [vmem:[%s491 + $0x350] sm:$0xff] %v1796
        %1925 = vst [vmem:[%s491 + $0x358] sm:$0xff] %v1797
        %1926 = vst [vmem:[%s491 + $0x360] sm:$0xff] %v1798
        %1927 = vst [vmem:[%s491 + $0x368] sm:$0xff] %v1799
        %1928 = vst [vmem:[%s491 + $0x370] sm:$0xff] %v1800
        %1929 = vst [vmem:[%s491 + $0x378] sm:$0xff] %v1801
        %1930 = vst [vmem:[%s491 + $0x380] sm:$0xff] %v1802
        %1931 = vst [vmem:[%s491 + $0x388] sm:$0xff] %v1803
        %1932 = vst [vmem:[%s491 + $0x390] sm:$0xff] %v1804
        %1933 = vst [vmem:[%s491 + $0x398] sm:$0xff] %v1805
        %1934 = vst [vmem:[%s491 + $0x3a0] sm:$0xff] %v1806
        %1935 = vst [vmem:[%s491 + $0x3a8] sm:$0xff] %v1807
        %1936 = vst [vmem:[%s491 + $0x3b0] sm:$0xff] %v1808
        %1937 = vst [vmem:[%s491 + $0x3b8] sm:$0xff] %v1809
        %1938 = vst [vmem:[%s491 + $0x3c0] sm:$0xff] %v1810
        %1939 = vst [vmem:[%s491 + $0x3c8] sm:$0xff] %v1811
        %1940 = vst [vmem:[%s491 + $0x3d0] sm:$0xff] %v1812
        %1941 = vst [vmem:[%s491 + $0x3d8] sm:$0xff] %v1813
        %1942 = vst [vmem:[%s491 + $0x3e0] sm:$0xff] %v1814
        %1943 = vst [vmem:[%s491 + $0x3e8] sm:$0xff] %v1815
        %1944 = vst [vmem:[%s491 + $0x3f0] sm:$0xff] %v1816
        %1945 = vst [vmem:[%s491 + $0x3f8] sm:$0xff] %v1817
        %v1946 = vadd.f32 %v1690, %v1694
        %v1947 = vadd.f32 %v1946, %v1698
        %v1948 = vadd.f32 %v1947, %v1702
        %v1949 = vadd.f32 %v1948, %v1706
        %v1950 = vadd.f32 %v1949, %v1710
        %v1951 = vadd.f32 %v1950, %v1714
        %v1952 = vadd.f32 %v1951, %v1718
        %v1953 = vadd.f32 %v1952, %v1722
        %v1954 = vadd.f32 %v1953, %v1726
        %v1955 = vadd.f32 %v1954, %v1730
        %v1956 = vadd.f32 %v1955, %v1734
        %v1957 = vadd.f32 %v1956, %v1738
        %v1958 = vadd.f32 %v1957, %v1742
        %v1959 = vadd.f32 %v1958, %v1746
        %v1960 = vadd.f32 %v1959, %v1750
        %v1961 = vadd.f32 %v1960, %v1754
        %v1962 = vadd.f32 %v1961, %v1758
        %v1963 = vadd.f32 %v1962, %v1762
        %v1964 = vadd.f32 %v1963, %v1766
        %v1965 = vadd.f32 %v1964, %v1770
        %v1966 = vadd.f32 %v1965, %v1774
        %v1967 = vadd.f32 %v1966, %v1778
        %v1968 = vadd.f32 %v1967, %v1782
        %v1969 = vadd.f32 %v1968, %v1786
        %v1970 = vadd.f32 %v1969, %v1790
        %v1971 = vadd.f32 %v1970, %v1794
        %v1972 = vadd.f32 %v1971, %v1798
        %v1973 = vadd.f32 %v1972, %v1802
        %v1974 = vadd.f32 %v1973, %v1806
        %v1975 = vadd.f32 %v1974, %v1810
        %v1976 = vadd.f32 %v1975, %v1814
        %v1977 = vrot.slane %v1976, 4
        %v1978 = vadd.f32 %v1976, %v1977
        %v1979 = vrot.slane %v1978, 2
        %v1980 = vadd.f32 %v1978, %v1979
        %v1981 = vrot.slane %v1980, 1
        %v1982 = vadd.f32 %v1980, %v1981
        %v1983 = vadd.f32 %v1691, %v1695
        %v1984 = vadd.f32 %v1983, %v1699
        %v1985 = vadd.f32 %v1984, %v1703
        %v1986 = vadd.f32 %v1985, %v1707
        %v1987 = vadd.f32 %v1986, %v1711
        %v1988 = vadd.f32 %v1987, %v1715
        %v1989 = vadd.f32 %v1988, %v1719
        %v1990 = vadd.f32 %v1989, %v1723
        %v1991 = vadd.f32 %v1990, %v1727
        %v1992 = vadd.f32 %v1991, %v1731
        %v1993 = vadd.f32 %v1992, %v1735
        %v1994 = vadd.f32 %v1993, %v1739
        %v1995 = vadd.f32 %v1994, %v1743
        %v1996 = vadd.f32 %v1995, %v1747
        %v1997 = vadd.f32 %v1996, %v1751
        %v1998 = vadd.f32 %v1997, %v1755
        %v1999 = vadd.f32 %v1998, %v1759
        %v2000 = vadd.f32 %v1999, %v1763
        %v2001 = vadd.f32 %v2000, %v1767
        %v2002 = vadd.f32 %v2001, %v1771
        %v2003 = vadd.f32 %v2002, %v1775
        %v2004 = vadd.f32 %v2003, %v1779
        %v2005 = vadd.f32 %v2004, %v1783
        %v2006 = vadd.f32 %v2005, %v1787
        %v2007 = vadd.f32 %v2006, %v1791
        %v2008 = vadd.f32 %v2007, %v1795
        %v2009 = vadd.f32 %v2008, %v1799
        %v2010 = vadd.f32 %v2009, %v1803
        %v2011 = vadd.f32 %v2010, %v1807
        %v2012 = vadd.f32 %v2011, %v1811
        %v2013 = vadd.f32 %v2012, %v1815
        %v2014 = vrot.slane %v2013, 4
        %v2015 = vadd.f32 %v2013, %v2014
        %v2016 = vrot.slane %v2015, 2
        %v2017 = vadd.f32 %v2015, %v2016
        %v2018 = vrot.slane %v2017, 1
        %v2019 = vadd.f32 %v2017, %v2018
        %v2020 = vadd.f32 %v1692, %v1696
        %v2021 = vadd.f32 %v2020, %v1700
        %v2022 = vadd.f32 %v2021, %v1704
        %v2023 = vadd.f32 %v2022, %v1708
        %v2024 = vadd.f32 %v2023, %v1712
        %v2025 = vadd.f32 %v2024, %v1716
        %v2026 = vadd.f32 %v2025, %v1720
        %v2027 = vadd.f32 %v2026, %v1724
        %v2028 = vadd.f32 %v2027, %v1728
        %v2029 = vadd.f32 %v2028, %v1732
        %v2030 = vadd.f32 %v2029, %v1736
        %v2031 = vadd.f32 %v2030, %v1740
        %v2032 = vadd.f32 %v2031, %v1744
        %v2033 = vadd.f32 %v2032, %v1748
        %v2034 = vadd.f32 %v2033, %v1752
        %v2035 = vadd.f32 %v2034, %v1756
        %v2036 = vadd.f32 %v2035, %v1760
        %v2037 = vadd.f32 %v2036, %v1764
        %v2038 = vadd.f32 %v2037, %v1768
        %v2039 = vadd.f32 %v2038, %v1772
        %v2040 = vadd.f32 %v2039, %v1776
        %v2041 = vadd.f32 %v2040, %v1780
        %v2042 = vadd.f32 %v2041, %v1784
        %v2043 = vadd.f32 %v2042, %v1788
        %v2044 = vadd.f32 %v2043, %v1792
        %v2045 = vadd.f32 %v2044, %v1796
        %v2046 = vadd.f32 %v2045, %v1800
        %v2047 = vadd.f32 %v2046, %v1804
        %v2048 = vadd.f32 %v2047, %v1808
        %v2049 = vadd.f32 %v2048, %v1812
        %v2050 = vadd.f32 %v2049, %v1816
        %v2051 = vrot.slane %v2050, 4
        %v2052 = vadd.f32 %v2050, %v2051
        %v2053 = vrot.slane %v2052, 2
        %v2054 = vadd.f32 %v2052, %v2053
        %v2055 = vrot.slane %v2054, 1
        %v2056 = vadd.f32 %v2054, %v2055
        %v2057 = vadd.f32 %v1693, %v1697
        %v2058 = vadd.f32 %v2057, %v1701
        %v2059 = vadd.f32 %v2058, %v1705
        %v2060 = vadd.f32 %v2059, %v1709
        %v2061 = vadd.f32 %v2060, %v1713
        %v2062 = vadd.f32 %v2061, %v1717
        %v2063 = vadd.f32 %v2062, %v1721
        %v2064 = vadd.f32 %v2063, %v1725
        %v2065 = vadd.f32 %v2064, %v1729
        %v2066 = vadd.f32 %v2065, %v1733
        %v2067 = vadd.f32 %v2066, %v1737
        %v2068 = vadd.f32 %v2067, %v1741
        %v2069 = vadd.f32 %v2068, %v1745
        %v2070 = vadd.f32 %v2069, %v1749
        %v2071 = vadd.f32 %v2070, %v1753
        %v2072 = vadd.f32 %v2071, %v1757
        %v2073 = vadd.f32 %v2072, %v1761
        %v2074 = vadd.f32 %v2073, %v1765
        %v2075 = vadd.f32 %v2074, %v1769
        %v2076 = vadd.f32 %v2075, %v1773
        %v2077 = vadd.f32 %v2076, %v1777
        %v2078 = vadd.f32 %v2077, %v1781
        %v2079 = vadd.f32 %v2078, %v1785
        %v2080 = vadd.f32 %v2079, %v1789
        %v2081 = vadd.f32 %v2080, %v1793
        %v2082 = vadd.f32 %v2081, %v1797
        %v2083 = vadd.f32 %v2082, %v1801
        %v2084 = vadd.f32 %v2083, %v1805
        %v2085 = vadd.f32 %v2084, %v1809
        %v2086 = vadd.f32 %v2085, %v1813
        %v2087 = vadd.f32 %v2086, %v1817
        %v2088 = vrot.slane %v2087, 4
        %v2089 = vadd.f32 %v2087, %v2088
        %v2090 = vrot.slane %v2089, 2
        %v2091 = vadd.f32 %v2089, %v2090
        %v2092 = vrot.slane %v2091, 1
        %v2093 = vadd.f32 %v2091, %v2092
        %v2098 = vrot.slane %v2019, 7
        %v2099 = vrot.slane %v2056, 6
        %v2100 = vrot.slane %v2093, 5
        %vm2101 = vcmask 1040384
        %v2102 = vsel %vm2101, %v1982, %v2098
        %vm2103 = vcmask 1042434
        %v2104 = vsel %vm2103, %v2099, %v2100
        %vm2105 = vcmask 1041408
        %v2106 = vsel %vm2105, %v2102, %v2104
        %v2108 = vlaneseq
        %vm2109 = vcmp.ge.s32.totalorder %v2108, 0
        %vm2110 = vcmp.lt.s32.totalorder %v2108, 512
        %vm2111 = vmand %vm2109, %vm2110
        %2112 = vst.msk [vmem:[%s505] sm:$0xf] %vm2111, %v2106
        %p2113 = scmp.eq.s32.totalorder %s43, 0
        // Predicated region
        $region61: #{tpu_custom_call.1} parent=39 // pred_check
          %p2114 = pneg %p2113
        $region62: #{tpu_custom_call.1} parent=39 // pred_check_branch
          %2116 = sbr.rel (%p2114) target = $region64
        $region63: #{tpu_custom_call.1} parent=39 // pred_region
          %2117 = vst [vmem:[#allocation2] sm:$0xff] 0.0
          %2118 = vst [vmem:[#allocation2 + $0x8] sm:$0xff] 0.0
          %2119 = vst [vmem:[#allocation2 + $0x10] sm:$0xff] 0.0
          %2120 = vst [vmem:[#allocation2 + $0x18] sm:$0xff] 0.0
          %2121 = vst [vmem:[#allocation2 + $0x20] sm:$0xff] 0.0
          %2122 = vst [vmem:[#allocation2 + $0x28] sm:$0xff] 0.0
          %2123 = vst [vmem:[#allocation2 + $0x30] sm:$0xff] 0.0
          %2124 = vst [vmem:[#allocation2 + $0x38] sm:$0xff] 0.0
          %2125 = vst [vmem:[#allocation2 + $0x40] sm:$0xff] 0.0
          %2126 = vst [vmem:[#allocation2 + $0x48] sm:$0xff] 0.0
          %2127 = vst [vmem:[#allocation2 + $0x50] sm:$0xff] 0.0
          %2128 = vst [vmem:[#allocation2 + $0x58] sm:$0xff] 0.0
          %2129 = vst [vmem:[#allocation2 + $0x60] sm:$0xff] 0.0
          %2130 = vst [vmem:[#allocation2 + $0x68] sm:$0xff] 0.0
          %2131 = vst [vmem:[#allocation2 + $0x70] sm:$0xff] 0.0
          %2132 = vst [vmem:[#allocation2 + $0x78] sm:$0xff] 0.0
          %2133 = vst [vmem:[#allocation2 + $0x80] sm:$0xff] 0.0
          %2134 = vst [vmem:[#allocation2 + $0x88] sm:$0xff] 0.0
          %2135 = vst [vmem:[#allocation2 + $0x90] sm:$0xff] 0.0
          %2136 = vst [vmem:[#allocation2 + $0x98] sm:$0xff] 0.0
          %2137 = vst [vmem:[#allocation2 + $0xa0] sm:$0xff] 0.0
          %2138 = vst [vmem:[#allocation2 + $0xa8] sm:$0xff] 0.0
          %2139 = vst [vmem:[#allocation2 + $0xb0] sm:$0xff] 0.0
          %2140 = vst [vmem:[#allocation2 + $0xb8] sm:$0xff] 0.0
          %2141 = vst [vmem:[#allocation2 + $0xc0] sm:$0xff] 0.0
          %2142 = vst [vmem:[#allocation2 + $0xc8] sm:$0xff] 0.0
          %2143 = vst [vmem:[#allocation2 + $0xd0] sm:$0xff] 0.0
          %2144 = vst [vmem:[#allocation2 + $0xd8] sm:$0xff] 0.0
          %2145 = vst [vmem:[#allocation2 + $0xe0] sm:$0xff] 0.0
          %2146 = vst [vmem:[#allocation2 + $0xe8] sm:$0xff] 0.0
          %2147 = vst [vmem:[#allocation2 + $0xf0] sm:$0xff] 0.0
          %2148 = vst [vmem:[#allocation2 + $0xf8] sm:$0xff] 0.0
          %2149 = vst [vmem:[#allocation2 + $0x100] sm:$0xff] 0.0
          %2150 = vst [vmem:[#allocation2 + $0x108] sm:$0xff] 0.0
          %2151 = vst [vmem:[#allocation2 + $0x110] sm:$0xff] 0.0
          %2152 = vst [vmem:[#allocation2 + $0x118] sm:$0xff] 0.0
          %2153 = vst [vmem:[#allocation2 + $0x120] sm:$0xff] 0.0
          %2154 = vst [vmem:[#allocation2 + $0x128] sm:$0xff] 0.0
          %2155 = vst [vmem:[#allocation2 + $0x130] sm:$0xff] 0.0
          %2156 = vst [vmem:[#allocation2 + $0x138] sm:$0xff] 0.0
          %2157 = vst [vmem:[#allocation2 + $0x140] sm:$0xff] 0.0
          %2158 = vst [vmem:[#allocation2 + $0x148] sm:$0xff] 0.0
          %2159 = vst [vmem:[#allocation2 + $0x150] sm:$0xff] 0.0
          %2160 = vst [vmem:[#allocation2 + $0x158] sm:$0xff] 0.0
          %2161 = vst [vmem:[#allocation2 + $0x160] sm:$0xff] 0.0
          %2162 = vst [vmem:[#allocation2 + $0x168] sm:$0xff] 0.0
          %2163 = vst [vmem:[#allocation2 + $0x170] sm:$0xff] 0.0
          %2164 = vst [vmem:[#allocation2 + $0x178] sm:$0xff] 0.0
          %2165 = vst [vmem:[#allocation2 + $0x180] sm:$0xff] 0.0
          %2166 = vst [vmem:[#allocation2 + $0x188] sm:$0xff] 0.0
          %2167 = vst [vmem:[#allocation2 + $0x190] sm:$0xff] 0.0
          %2168 = vst [vmem:[#allocation2 + $0x198] sm:$0xff] 0.0
          %2169 = vst [vmem:[#allocation2 + $0x1a0] sm:$0xff] 0.0
          %2170 = vst [vmem:[#allocation2 + $0x1a8] sm:$0xff] 0.0
          %2171 = vst [vmem:[#allocation2 + $0x1b0] sm:$0xff] 0.0
          %2172 = vst [vmem:[#allocation2 + $0x1b8] sm:$0xff] 0.0
          %2173 = vst [vmem:[#allocation2 + $0x1c0] sm:$0xff] 0.0
          %2174 = vst [vmem:[#allocation2 + $0x1c8] sm:$0xff] 0.0
          %2175 = vst [vmem:[#allocation2 + $0x1d0] sm:$0xff] 0.0
          %2176 = vst [vmem:[#allocation2 + $0x1d8] sm:$0xff] 0.0
          %2177 = vst [vmem:[#allocation2 + $0x1e0] sm:$0xff] 0.0
          %2178 = vst [vmem:[#allocation2 + $0x1e8] sm:$0xff] 0.0
          %2179 = vst [vmem:[#allocation2 + $0x1f0] sm:$0xff] 0.0
          %2180 = vst [vmem:[#allocation2 + $0x1f8] sm:$0xff] 0.0
        $region64: #{tpu_custom_call.1} parent=39 // pred_fallthru
          _
        %v2181 = vld [vmem:[#allocation2] sm:$0xff]
        %v2182 = vld [vmem:[#allocation2 + $0x8] sm:$0xff]
        %v2183 = vld [vmem:[#allocation2 + $0x10] sm:$0xff]
        %v2184 = vld [vmem:[#allocation2 + $0x18] sm:$0xff]
        %v2185 = vld [vmem:[#allocation2 + $0x20] sm:$0xff]
        %v2186 = vld [vmem:[#allocation2 + $0x28] sm:$0xff]
        %v2187 = vld [vmem:[#allocation2 + $0x30] sm:$0xff]
        %v2188 = vld [vmem:[#allocation2 + $0x38] sm:$0xff]
        %v2189 = vld [vmem:[#allocation2 + $0x40] sm:$0xff]
        %v2190 = vld [vmem:[#allocation2 + $0x48] sm:$0xff]
        %v2191 = vld [vmem:[#allocation2 + $0x50] sm:$0xff]
        %v2192 = vld [vmem:[#allocation2 + $0x58] sm:$0xff]
        %v2193 = vld [vmem:[#allocation2 + $0x60] sm:$0xff]
        %v2194 = vld [vmem:[#allocation2 + $0x68] sm:$0xff]
        %v2195 = vld [vmem:[#allocation2 + $0x70] sm:$0xff]
        %v2196 = vld [vmem:[#allocation2 + $0x78] sm:$0xff]
        %v2197 = vld [vmem:[#allocation2 + $0x80] sm:$0xff]
        %v2198 = vld [vmem:[#allocation2 + $0x88] sm:$0xff]
        %v2199 = vld [vmem:[#allocation2 + $0x90] sm:$0xff]
        %v2200 = vld [vmem:[#allocation2 + $0x98] sm:$0xff]
        %v2201 = vld [vmem:[#allocation2 + $0xa0] sm:$0xff]
        %v2202 = vld [vmem:[#allocation2 + $0xa8] sm:$0xff]
        %v2203 = vld [vmem:[#allocation2 + $0xb0] sm:$0xff]
        %v2204 = vld [vmem:[#allocation2 + $0xb8] sm:$0xff]
        %v2205 = vld [vmem:[#allocation2 + $0xc0] sm:$0xff]
        %v2206 = vld [vmem:[#allocation2 + $0xc8] sm:$0xff]
        %v2207 = vld [vmem:[#allocation2 + $0xd0] sm:$0xff]
        %v2208 = vld [vmem:[#allocation2 + $0xd8] sm:$0xff]
        %v2209 = vld [vmem:[#allocation2 + $0xe0] sm:$0xff]
        %v2210 = vld [vmem:[#allocation2 + $0xe8] sm:$0xff]
        %v2211 = vld [vmem:[#allocation2 + $0xf0] sm:$0xff]
        %v2212 = vld [vmem:[#allocation2 + $0xf8] sm:$0xff]
        %v2213 = vld [vmem:[#allocation2 + $0x100] sm:$0xff]
        %v2214 = vld [vmem:[#allocation2 + $0x108] sm:$0xff]
        %v2215 = vld [vmem:[#allocation2 + $0x110] sm:$0xff]
        %v2216 = vld [vmem:[#allocation2 + $0x118] sm:$0xff]
        %v2217 = vld [vmem:[#allocation2 + $0x120] sm:$0xff]
        %v2218 = vld [vmem:[#allocation2 + $0x128] sm:$0xff]
        %v2219 = vld [vmem:[#allocation2 + $0x130] sm:$0xff]
        %v2220 = vld [vmem:[#allocation2 + $0x138] sm:$0xff]
        %v2221 = vld [vmem:[#allocation2 + $0x140] sm:$0xff]
        %v2222 = vld [vmem:[#allocation2 + $0x148] sm:$0xff]
        %v2223 = vld [vmem:[#allocation2 + $0x150] sm:$0xff]
        %v2224 = vld [vmem:[#allocation2 + $0x158] sm:$0xff]
        %v2225 = vld [vmem:[#allocation2 + $0x160] sm:$0xff]
        %v2226 = vld [vmem:[#allocation2 + $0x168] sm:$0xff]
        %v2227 = vld [vmem:[#allocation2 + $0x170] sm:$0xff]
        %v2228 = vld [vmem:[#allocation2 + $0x178] sm:$0xff]
        %v2229 = vld [vmem:[#allocation2 + $0x180] sm:$0xff]
        %v2230 = vld [vmem:[#allocation2 + $0x188] sm:$0xff]
        %v2231 = vld [vmem:[#allocation2 + $0x190] sm:$0xff]
        %v2232 = vld [vmem:[#allocation2 + $0x198] sm:$0xff]
        %v2233 = vld [vmem:[#allocation2 + $0x1a0] sm:$0xff]
        %v2234 = vld [vmem:[#allocation2 + $0x1a8] sm:$0xff]
        %v2235 = vld [vmem:[#allocation2 + $0x1b0] sm:$0xff]
        %v2236 = vld [vmem:[#allocation2 + $0x1b8] sm:$0xff]
        %v2237 = vld [vmem:[#allocation2 + $0x1c0] sm:$0xff]
        %v2238 = vld [vmem:[#allocation2 + $0x1c8] sm:$0xff]
        %v2239 = vld [vmem:[#allocation2 + $0x1d0] sm:$0xff]
        %v2240 = vld [vmem:[#allocation2 + $0x1d8] sm:$0xff]
        %v2241 = vld [vmem:[#allocation2 + $0x1e0] sm:$0xff]
        %v2242 = vld [vmem:[#allocation2 + $0x1e8] sm:$0xff]
        %v2243 = vld [vmem:[#allocation2 + $0x1f0] sm:$0xff]
        %v2244 = vld [vmem:[#allocation2 + $0x1f8] sm:$0xff]
        %v2245 = vld [vmem:[%s437] sm:$0xff]
        %v2246 = vld [vmem:[%s437 + $0x8] sm:$0xff]
        %v2247 = vld [vmem:[%s437 + $0x10] sm:$0xff]
        %v2248 = vld [vmem:[%s437 + $0x18] sm:$0xff]
        %v2249 = vld [vmem:[%s437 + $0x20] sm:$0xff]
        %v2250 = vld [vmem:[%s437 + $0x28] sm:$0xff]
        %v2251 = vld [vmem:[%s437 + $0x30] sm:$0xff]
        %v2252 = vld [vmem:[%s437 + $0x38] sm:$0xff]
        %v2253 = vld [vmem:[%s437 + $0x40] sm:$0xff]
        %v2254 = vld [vmem:[%s437 + $0x48] sm:$0xff]
        %v2255 = vld [vmem:[%s437 + $0x50] sm:$0xff]
        %v2256 = vld [vmem:[%s437 + $0x58] sm:$0xff]
        %v2257 = vld [vmem:[%s437 + $0x60] sm:$0xff]
        %v2258 = vld [vmem:[%s437 + $0x68] sm:$0xff]
        %v2259 = vld [vmem:[%s437 + $0x70] sm:$0xff]
        %v2260 = vld [vmem:[%s437 + $0x78] sm:$0xff]
        %v2261 = vld [vmem:[%s437 + $0x80] sm:$0xff]
        %v2262 = vld [vmem:[%s437 + $0x88] sm:$0xff]
        %v2263 = vld [vmem:[%s437 + $0x90] sm:$0xff]
        %v2264 = vld [vmem:[%s437 + $0x98] sm:$0xff]
        %v2265 = vld [vmem:[%s437 + $0xa0] sm:$0xff]
        %v2266 = vld [vmem:[%s437 + $0xa8] sm:$0xff]
        %v2267 = vld [vmem:[%s437 + $0xb0] sm:$0xff]
        %v2268 = vld [vmem:[%s437 + $0xb8] sm:$0xff]
        %v2269 = vld [vmem:[%s437 + $0xc0] sm:$0xff]
        %v2270 = vld [vmem:[%s437 + $0xc8] sm:$0xff]
        %v2271 = vld [vmem:[%s437 + $0xd0] sm:$0xff]
        %v2272 = vld [vmem:[%s437 + $0xd8] sm:$0xff]
        %v2273 = vld [vmem:[%s437 + $0xe0] sm:$0xff]
        %v2274 = vld [vmem:[%s437 + $0xe8] sm:$0xff]
        %v2275 = vld [vmem:[%s437 + $0xf0] sm:$0xff]
        %v2276 = vld [vmem:[%s437 + $0xf8] sm:$0xff]
        %v2277 = vld [vmem:[%s437 + $0x100] sm:$0xff]
        %v2278 = vld [vmem:[%s437 + $0x108] sm:$0xff]
        %v2279 = vld [vmem:[%s437 + $0x110] sm:$0xff]
        %v2280 = vld [vmem:[%s437 + $0x118] sm:$0xff]
        %v2281 = vld [vmem:[%s437 + $0x120] sm:$0xff]
        %v2282 = vld [vmem:[%s437 + $0x128] sm:$0xff]
        %v2283 = vld [vmem:[%s437 + $0x130] sm:$0xff]
        %v2284 = vld [vmem:[%s437 + $0x138] sm:$0xff]
        %v2285 = vld [vmem:[%s437 + $0x140] sm:$0xff]
        %v2286 = vld [vmem:[%s437 + $0x148] sm:$0xff]
        %v2287 = vld [vmem:[%s437 + $0x150] sm:$0xff]
        %v2288 = vld [vmem:[%s437 + $0x158] sm:$0xff]
        %v2289 = vld [vmem:[%s437 + $0x160] sm:$0xff]
        %v2290 = vld [vmem:[%s437 + $0x168] sm:$0xff]
        %v2291 = vld [vmem:[%s437 + $0x170] sm:$0xff]
        %v2292 = vld [vmem:[%s437 + $0x178] sm:$0xff]
        %v2293 = vld [vmem:[%s437 + $0x180] sm:$0xff]
        %v2294 = vld [vmem:[%s437 + $0x188] sm:$0xff]
        %v2295 = vld [vmem:[%s437 + $0x190] sm:$0xff]
        %v2296 = vld [vmem:[%s437 + $0x198] sm:$0xff]
        %v2297 = vld [vmem:[%s437 + $0x1a0] sm:$0xff]
        %v2298 = vld [vmem:[%s437 + $0x1a8] sm:$0xff]
        %v2299 = vld [vmem:[%s437 + $0x1b0] sm:$0xff]
        %v2300 = vld [vmem:[%s437 + $0x1b8] sm:$0xff]
        %v2301 = vld [vmem:[%s437 + $0x1c0] sm:$0xff]
        %v2302 = vld [vmem:[%s437 + $0x1c8] sm:$0xff]
        %v2303 = vld [vmem:[%s437 + $0x1d0] sm:$0xff]
        %v2304 = vld [vmem:[%s437 + $0x1d8] sm:$0xff]
        %v2305 = vld [vmem:[%s437 + $0x1e0] sm:$0xff]
        %v2306 = vld [vmem:[%s437 + $0x1e8] sm:$0xff]
        %v2307 = vld [vmem:[%s437 + $0x1f0] sm:$0xff]
        %v2308 = vld [vmem:[%s437 + $0x1f8] sm:$0xff]
        %v2309 = vld [vmem:[%s437 + $0x200] sm:$0xff]
        %v2310 = vld [vmem:[%s437 + $0x208] sm:$0xff]
        %v2311 = vld [vmem:[%s437 + $0x210] sm:$0xff]
        %v2312 = vld [vmem:[%s437 + $0x218] sm:$0xff]
        %v2313 = vld [vmem:[%s437 + $0x220] sm:$0xff]
        %v2314 = vld [vmem:[%s437 + $0x228] sm:$0xff]
        %v2315 = vld [vmem:[%s437 + $0x230] sm:$0xff]
        %v2316 = vld [vmem:[%s437 + $0x238] sm:$0xff]
        %v2317 = vld [vmem:[%s437 + $0x240] sm:$0xff]
        %v2318 = vld [vmem:[%s437 + $0x248] sm:$0xff]
        %v2319 = vld [vmem:[%s437 + $0x250] sm:$0xff]
        %v2320 = vld [vmem:[%s437 + $0x258] sm:$0xff]
        %v2321 = vld [vmem:[%s437 + $0x260] sm:$0xff]
        %v2322 = vld [vmem:[%s437 + $0x268] sm:$0xff]
        %v2323 = vld [vmem:[%s437 + $0x270] sm:$0xff]
        %v2324 = vld [vmem:[%s437 + $0x278] sm:$0xff]
        %v2325 = vld [vmem:[%s437 + $0x280] sm:$0xff]
        %v2326 = vld [vmem:[%s437 + $0x288] sm:$0xff]
        %v2327 = vld [vmem:[%s437 + $0x290] sm:$0xff]
        %v2328 = vld [vmem:[%s437 + $0x298] sm:$0xff]
        %v2329 = vld [vmem:[%s437 + $0x2a0] sm:$0xff]
        %v2330 = vld [vmem:[%s437 + $0x2a8] sm:$0xff]
        %v2331 = vld [vmem:[%s437 + $0x2b0] sm:$0xff]
        %v2332 = vld [vmem:[%s437 + $0x2b8] sm:$0xff]
        %v2333 = vld [vmem:[%s437 + $0x2c0] sm:$0xff]
        %v2334 = vld [vmem:[%s437 + $0x2c8] sm:$0xff]
        %v2335 = vld [vmem:[%s437 + $0x2d0] sm:$0xff]
        %v2336 = vld [vmem:[%s437 + $0x2d8] sm:$0xff]
        %v2337 = vld [vmem:[%s437 + $0x2e0] sm:$0xff]
        %v2338 = vld [vmem:[%s437 + $0x2e8] sm:$0xff]
        %v2339 = vld [vmem:[%s437 + $0x2f0] sm:$0xff]
        %v2340 = vld [vmem:[%s437 + $0x2f8] sm:$0xff]
        %v2341 = vld [vmem:[%s437 + $0x300] sm:$0xff]
        %v2342 = vld [vmem:[%s437 + $0x308] sm:$0xff]
        %v2343 = vld [vmem:[%s437 + $0x310] sm:$0xff]
        %v2344 = vld [vmem:[%s437 + $0x318] sm:$0xff]
        %v2345 = vld [vmem:[%s437 + $0x320] sm:$0xff]
        %v2346 = vld [vmem:[%s437 + $0x328] sm:$0xff]
        %v2347 = vld [vmem:[%s437 + $0x330] sm:$0xff]
        %v2348 = vld [vmem:[%s437 + $0x338] sm:$0xff]
        %v2349 = vld [vmem:[%s437 + $0x340] sm:$0xff]
        %v2350 = vld [vmem:[%s437 + $0x348] sm:$0xff]
        %v2351 = vld [vmem:[%s437 + $0x350] sm:$0xff]
        %v2352 = vld [vmem:[%s437 + $0x358] sm:$0xff]
        %v2353 = vld [vmem:[%s437 + $0x360] sm:$0xff]
        %v2354 = vld [vmem:[%s437 + $0x368] sm:$0xff]
        %v2355 = vld [vmem:[%s437 + $0x370] sm:$0xff]
        %v2356 = vld [vmem:[%s437 + $0x378] sm:$0xff]
        %v2357 = vld [vmem:[%s437 + $0x380] sm:$0xff]
        %v2358 = vld [vmem:[%s437 + $0x388] sm:$0xff]
        %v2359 = vld [vmem:[%s437 + $0x390] sm:$0xff]
        %v2360 = vld [vmem:[%s437 + $0x398] sm:$0xff]
        %v2361 = vld [vmem:[%s437 + $0x3a0] sm:$0xff]
        %v2362 = vld [vmem:[%s437 + $0x3a8] sm:$0xff]
        %v2363 = vld [vmem:[%s437 + $0x3b0] sm:$0xff]
        %v2364 = vld [vmem:[%s437 + $0x3b8] sm:$0xff]
        %v2365 = vld [vmem:[%s437 + $0x3c0] sm:$0xff]
        %v2366 = vld [vmem:[%s437 + $0x3c8] sm:$0xff]
        %v2367 = vld [vmem:[%s437 + $0x3d0] sm:$0xff]
        %v2368 = vld [vmem:[%s437 + $0x3d8] sm:$0xff]
        %v2369 = vld [vmem:[%s437 + $0x3e0] sm:$0xff]
        %v2370 = vld [vmem:[%s437 + $0x3e8] sm:$0xff]
        %v2371 = vld [vmem:[%s437 + $0x3f0] sm:$0xff]
        %v2372 = vld [vmem:[%s437 + $0x3f8] sm:$0xff]
        %2373 = vmatpush.msra.mxu0 %v2275
        %2374 = vmatpush.msra.mxu0 %v2273
        %2375 = vmatpush.msra.mxu0 %v2271
        %2376 = vmatpush.msra.mxu0 %v2269
        %2377 = vmatpush.msra.mxu0 %v2267
        %2378 = vmatpush.msra.mxu0 %v2265
        %2379 = vmatpush.msra.mxu0 %v2263
        %2380 = vmatpush.msra.mxu0 %v2261
        %2381 = vmatpush.msra.mxu0 %v2259
        %2382 = vmatpush.msra.mxu0 %v2257
        %2383 = vmatpush.msra.mxu0 %v2255
        %2384 = vmatpush.msra.mxu0 %v2253
        %2385 = vmatpush.msra.mxu0 %v2251
        %2386 = vmatpush.msra.mxu0 %v2249
        %2387 = vmatpush.msra.mxu0 %v2247
        %2388 = vmatpush.msra.mxu0 %v2245
        %2389 = vmatmul.f32.gmra.mxu0 %v1690
        %v2390 = vpop.f32.mrf.mxu0
        %v2391 = vadd.f32 0.0, %v2390
        %2392 = vmatmul.f32.gmra.mxu0 %v1694
        %v2393 = vpop.f32.mrf.mxu0
        %v2394 = vadd.f32 0.0, %v2393
        %2395 = vmatmul.f32.gmra.mxu0 %v1698
        %v2396 = vpop.f32.mrf.mxu0
        %v2397 = vadd.f32 0.0, %v2396
        %2398 = vmatmul.f32.gmra.mxu0 %v1702
        %v2399 = vpop.f32.mrf.mxu0
        %v2400 = vadd.f32 0.0, %v2399
        %2401 = vmatmul.f32.gmra.mxu0 %v1706
        %v2402 = vpop.f32.mrf.mxu0
        %v2403 = vadd.f32 0.0, %v2402
        %2404 = vmatmul.f32.gmra.mxu0 %v1710
        %v2405 = vpop.f32.mrf.mxu0
        %v2406 = vadd.f32 0.0, %v2405
        %2407 = vmatmul.f32.gmra.mxu0 %v1714
        %v2408 = vpop.f32.mrf.mxu0
        %v2409 = vadd.f32 0.0, %v2408
        %2410 = vmatmul.f32.gmra.mxu0 %v1718
        %v2411 = vpop.f32.mrf.mxu0
        %v2412 = vadd.f32 0.0, %v2411
        %2413 = vmatmul.f32.gmra.mxu0 %v1722
        %v2414 = vpop.f32.mrf.mxu0
        %v2415 = vadd.f32 0.0, %v2414
        %2416 = vmatmul.f32.gmra.mxu0 %v1726
        %v2417 = vpop.f32.mrf.mxu0
        %v2418 = vadd.f32 0.0, %v2417
        %2419 = vmatmul.f32.gmra.mxu0 %v1730
        %v2420 = vpop.f32.mrf.mxu0
        %v2421 = vadd.f32 0.0, %v2420
        %2422 = vmatmul.f32.gmra.mxu0 %v1734
        %v2423 = vpop.f32.mrf.mxu0
        %v2424 = vadd.f32 0.0, %v2423
        %2425 = vmatmul.f32.gmra.mxu0 %v1738
        %v2426 = vpop.f32.mrf.mxu0
        %v2427 = vadd.f32 0.0, %v2426
        %2428 = vmatmul.f32.gmra.mxu0 %v1742
        %v2429 = vpop.f32.mrf.mxu0
        %v2430 = vadd.f32 0.0, %v2429
        %2431 = vmatmul.f32.gmra.mxu0 %v1746
        %v2432 = vpop.f32.mrf.mxu0
        %v2433 = vadd.f32 0.0, %v2432
        %2434 = vmatmul.f32.gmra.mxu0 %v1750
        %v2435 = vpop.f32.mrf.mxu0
        %v2436 = vadd.f32 0.0, %v2435
        %2437 = vmatmul.f32.gmra.mxu0 %v1754
        %v2438 = vpop.f32.mrf.mxu0
        %v2439 = vadd.f32 0.0, %v2438
        %2440 = vmatmul.f32.gmra.mxu0 %v1758
        %v2441 = vpop.f32.mrf.mxu0
        %v2442 = vadd.f32 0.0, %v2441
        %2443 = vmatmul.f32.gmra.mxu0 %v1762
        %v2444 = vpop.f32.mrf.mxu0
        %v2445 = vadd.f32 0.0, %v2444
        %2446 = vmatmul.f32.gmra.mxu0 %v1766
        %v2447 = vpop.f32.mrf.mxu0
        %v2448 = vadd.f32 0.0, %v2447
        %2449 = vmatmul.f32.gmra.mxu0 %v1770
        %v2450 = vpop.f32.mrf.mxu0
        %v2451 = vadd.f32 0.0, %v2450
        %2452 = vmatmul.f32.gmra.mxu0 %v1774
        %v2453 = vpop.f32.mrf.mxu0
        %v2454 = vadd.f32 0.0, %v2453
        %2455 = vmatmul.f32.gmra.mxu0 %v1778
        %v2456 = vpop.f32.mrf.mxu0
        %v2457 = vadd.f32 0.0, %v2456
        %2458 = vmatmul.f32.gmra.mxu0 %v1782
        %v2459 = vpop.f32.mrf.mxu0
        %v2460 = vadd.f32 0.0, %v2459
        %2461 = vmatmul.f32.gmra.mxu0 %v1786
        %v2462 = vpop.f32.mrf.mxu0
        %v2463 = vadd.f32 0.0, %v2462
        %2464 = vmatmul.f32.gmra.mxu0 %v1790
        %v2465 = vpop.f32.mrf.mxu0
        %v2466 = vadd.f32 0.0, %v2465
        %2467 = vmatmul.f32.gmra.mxu0 %v1794
        %v2468 = vpop.f32.mrf.mxu0
        %v2469 = vadd.f32 0.0, %v2468
        %2470 = vmatmul.f32.gmra.mxu0 %v1798
        %v2471 = vpop.f32.mrf.mxu0
        %v2472 = vadd.f32 0.0, %v2471
        %2473 = vmatmul.f32.gmra.mxu0 %v1802
        %v2474 = vpop.f32.mrf.mxu0
        %v2475 = vadd.f32 0.0, %v2474
        %2476 = vmatmul.f32.gmra.mxu0 %v1806
        %v2477 = vpop.f32.mrf.mxu0
        %v2478 = vadd.f32 0.0, %v2477
        %2479 = vmatmul.f32.gmra.mxu0 %v1810
        %v2480 = vpop.f32.mrf.mxu0
        %v2481 = vadd.f32 0.0, %v2480
        %2482 = vmatmul.f32.gmra.mxu0 %v1814
        %v2483 = vpop.f32.mrf.mxu0
        %v2484 = vadd.f32 0.0, %v2483
        %2485 = vdwg.mxu0
        %2486 = vmatpush.msra.mxu0 %v2307
        %2487 = vmatpush.msra.mxu0 %v2305
        %2488 = vmatpush.msra.mxu0 %v2303
        %2489 = vmatpush.msra.mxu0 %v2301
        %2490 = vmatpush.msra.mxu0 %v2299
        %2491 = vmatpush.msra.mxu0 %v2297
        %2492 = vmatpush.msra.mxu0 %v2295
        %2493 = vmatpush.msra.mxu0 %v2293
        %2494 = vmatpush.msra.mxu0 %v2291
        %2495 = vmatpush.msra.mxu0 %v2289
        %2496 = vmatpush.msra.mxu0 %v2287
        %2497 = vmatpush.msra.mxu0 %v2285
        %2498 = vmatpush.msra.mxu0 %v2283
        %2499 = vmatpush.msra.mxu0 %v2281
        %2500 = vmatpush.msra.mxu0 %v2279
        %2501 = vmatpush.msra.mxu0 %v2277
        %2502 = vmatmul.f32.gmra.mxu0 %v1691
        %v2503 = vpop.f32.mrf.mxu0
        %v2504 = vadd.f32 %v2391, %v2503
        %2505 = vmatmul.f32.gmra.mxu0 %v1695
        %v2506 = vpop.f32.mrf.mxu0
        %v2507 = vadd.f32 %v2394, %v2506
        %2508 = vmatmul.f32.gmra.mxu0 %v1699
        %v2509 = vpop.f32.mrf.mxu0
        %v2510 = vadd.f32 %v2397, %v2509
        %2511 = vmatmul.f32.gmra.mxu0 %v1703
        %v2512 = vpop.f32.mrf.mxu0
        %v2513 = vadd.f32 %v2400, %v2512
        %2514 = vmatmul.f32.gmra.mxu0 %v1707
        %v2515 = vpop.f32.mrf.mxu0
        %v2516 = vadd.f32 %v2403, %v2515
        %2517 = vmatmul.f32.gmra.mxu0 %v1711
        %v2518 = vpop.f32.mrf.mxu0
        %v2519 = vadd.f32 %v2406, %v2518
        %2520 = vmatmul.f32.gmra.mxu0 %v1715
        %v2521 = vpop.f32.mrf.mxu0
        %v2522 = vadd.f32 %v2409, %v2521
        %2523 = vmatmul.f32.gmra.mxu0 %v1719
        %v2524 = vpop.f32.mrf.mxu0
        %v2525 = vadd.f32 %v2412, %v2524
        %2526 = vmatmul.f32.gmra.mxu0 %v1723
        %v2527 = vpop.f32.mrf.mxu0
        %v2528 = vadd.f32 %v2415, %v2527
        %2529 = vmatmul.f32.gmra.mxu0 %v1727
        %v2530 = vpop.f32.mrf.mxu0
        %v2531 = vadd.f32 %v2418, %v2530
        %2532 = vmatmul.f32.gmra.mxu0 %v1731
        %v2533 = vpop.f32.mrf.mxu0
        %v2534 = vadd.f32 %v2421, %v2533
        %2535 = vmatmul.f32.gmra.mxu0 %v1735
        %v2536 = vpop.f32.mrf.mxu0
        %v2537 = vadd.f32 %v2424, %v2536
        %2538 = vmatmul.f32.gmra.mxu0 %v1739
        %v2539 = vpop.f32.mrf.mxu0
        %v2540 = vadd.f32 %v2427, %v2539
        %2541 = vmatmul.f32.gmra.mxu0 %v1743
        %v2542 = vpop.f32.mrf.mxu0
        %v2543 = vadd.f32 %v2430, %v2542
        %2544 = vmatmul.f32.gmra.mxu0 %v1747
        %v2545 = vpop.f32.mrf.mxu0
        %v2546 = vadd.f32 %v2433, %v2545
        %2547 = vmatmul.f32.gmra.mxu0 %v1751
        %v2548 = vpop.f32.mrf.mxu0
        %v2549 = vadd.f32 %v2436, %v2548
        %2550 = vmatmul.f32.gmra.mxu0 %v1755
        %v2551 = vpop.f32.mrf.mxu0
        %v2552 = vadd.f32 %v2439, %v2551
        %2553 = vmatmul.f32.gmra.mxu0 %v1759
        %v2554 = vpop.f32.mrf.mxu0
        %v2555 = vadd.f32 %v2442, %v2554
        %2556 = vmatmul.f32.gmra.mxu0 %v1763
        %v2557 = vpop.f32.mrf.mxu0
        %v2558 = vadd.f32 %v2445, %v2557
        %2559 = vmatmul.f32.gmra.mxu0 %v1767
        %v2560 = vpop.f32.mrf.mxu0
        %v2561 = vadd.f32 %v2448, %v2560
        %2562 = vmatmul.f32.gmra.mxu0 %v1771
        %v2563 = vpop.f32.mrf.mxu0
        %v2564 = vadd.f32 %v2451, %v2563
        %2565 = vmatmul.f32.gmra.mxu0 %v1775
        %v2566 = vpop.f32.mrf.mxu0
        %v2567 = vadd.f32 %v2454, %v2566
        %2568 = vmatmul.f32.gmra.mxu0 %v1779
        %v2569 = vpop.f32.mrf.mxu0
        %v2570 = vadd.f32 %v2457, %v2569
        %2571 = vmatmul.f32.gmra.mxu0 %v1783
        %v2572 = vpop.f32.mrf.mxu0
        %v2573 = vadd.f32 %v2460, %v2572
        %2574 = vmatmul.f32.gmra.mxu0 %v1787
        %v2575 = vpop.f32.mrf.mxu0
        %v2576 = vadd.f32 %v2463, %v2575
        %2577 = vmatmul.f32.gmra.mxu0 %v1791
        %v2578 = vpop.f32.mrf.mxu0
        %v2579 = vadd.f32 %v2466, %v2578
        %2580 = vmatmul.f32.gmra.mxu0 %v1795
        %v2581 = vpop.f32.mrf.mxu0
        %v2582 = vadd.f32 %v2469, %v2581
        %2583 = vmatmul.f32.gmra.mxu0 %v1799
        %v2584 = vpop.f32.mrf.mxu0
        %v2585 = vadd.f32 %v2472, %v2584
        %2586 = vmatmul.f32.gmra.mxu0 %v1803
        %v2587 = vpop.f32.mrf.mxu0
        %v2588 = vadd.f32 %v2475, %v2587
        %2589 = vmatmul.f32.gmra.mxu0 %v1807
        %v2590 = vpop.f32.mrf.mxu0
        %v2591 = vadd.f32 %v2478, %v2590
        %2592 = vmatmul.f32.gmra.mxu0 %v1811
        %v2593 = vpop.f32.mrf.mxu0
        %v2594 = vadd.f32 %v2481, %v2593
        %2595 = vmatmul.f32.gmra.mxu0 %v1815
        %v2596 = vpop.f32.mrf.mxu0
        %v2597 = vadd.f32 %v2484, %v2596
        %2598 = vdwg.mxu0
        %2599 = vmatpush.msra.mxu0 %v2339
        %2600 = vmatpush.msra.mxu0 %v2337
        %2601 = vmatpush.msra.mxu0 %v2335
        %2602 = vmatpush.msra.mxu0 %v2333
        %2603 = vmatpush.msra.mxu0 %v2331
        %2604 = vmatpush.msra.mxu0 %v2329
        %2605 = vmatpush.msra.mxu0 %v2327
        %2606 = vmatpush.msra.mxu0 %v2325
        %2607 = vmatpush.msra.mxu0 %v2323
        %2608 = vmatpush.msra.mxu0 %v2321
        %2609 = vmatpush.msra.mxu0 %v2319
        %2610 = vmatpush.msra.mxu0 %v2317
        %2611 = vmatpush.msra.mxu0 %v2315
        %2612 = vmatpush.msra.mxu0 %v2313
        %2613 = vmatpush.msra.mxu0 %v2311
        %2614 = vmatpush.msra.mxu0 %v2309
        %2615 = vmatmul.f32.gmra.mxu0 %v1692
        %v2616 = vpop.f32.mrf.mxu0
        %v2617 = vadd.f32 %v2504, %v2616
        %2618 = vmatmul.f32.gmra.mxu0 %v1696
        %v2619 = vpop.f32.mrf.mxu0
        %v2620 = vadd.f32 %v2507, %v2619
        %2621 = vmatmul.f32.gmra.mxu0 %v1700
        %v2622 = vpop.f32.mrf.mxu0
        %v2623 = vadd.f32 %v2510, %v2622
        %2624 = vmatmul.f32.gmra.mxu0 %v1704
        %v2625 = vpop.f32.mrf.mxu0
        %v2626 = vadd.f32 %v2513, %v2625
        %2627 = vmatmul.f32.gmra.mxu0 %v1708
        %v2628 = vpop.f32.mrf.mxu0
        %v2629 = vadd.f32 %v2516, %v2628
        %2630 = vmatmul.f32.gmra.mxu0 %v1712
        %v2631 = vpop.f32.mrf.mxu0
        %v2632 = vadd.f32 %v2519, %v2631
        %2633 = vmatmul.f32.gmra.mxu0 %v1716
        %v2634 = vpop.f32.mrf.mxu0
        %v2635 = vadd.f32 %v2522, %v2634
        %2636 = vmatmul.f32.gmra.mxu0 %v1720
        %v2637 = vpop.f32.mrf.mxu0
        %v2638 = vadd.f32 %v2525, %v2637
        %2639 = vmatmul.f32.gmra.mxu0 %v1724
        %v2640 = vpop.f32.mrf.mxu0
        %v2641 = vadd.f32 %v2528, %v2640
        %2642 = vmatmul.f32.gmra.mxu0 %v1728
        %v2643 = vpop.f32.mrf.mxu0
        %v2644 = vadd.f32 %v2531, %v2643
        %2645 = vmatmul.f32.gmra.mxu0 %v1732
        %v2646 = vpop.f32.mrf.mxu0
        %v2647 = vadd.f32 %v2534, %v2646
        %2648 = vmatmul.f32.gmra.mxu0 %v1736
        %v2649 = vpop.f32.mrf.mxu0
        %v2650 = vadd.f32 %v2537, %v2649
        %2651 = vmatmul.f32.gmra.mxu0 %v1740
        %v2652 = vpop.f32.mrf.mxu0
        %v2653 = vadd.f32 %v2540, %v2652
        %2654 = vmatmul.f32.gmra.mxu0 %v1744
        %v2655 = vpop.f32.mrf.mxu0
        %v2656 = vadd.f32 %v2543, %v2655
        %2657 = vmatmul.f32.gmra.mxu0 %v1748
        %v2658 = vpop.f32.mrf.mxu0
        %v2659 = vadd.f32 %v2546, %v2658
        %2660 = vmatmul.f32.gmra.mxu0 %v1752
        %v2661 = vpop.f32.mrf.mxu0
        %v2662 = vadd.f32 %v2549, %v2661
        %2663 = vmatmul.f32.gmra.mxu0 %v1756
        %v2664 = vpop.f32.mrf.mxu0
        %v2665 = vadd.f32 %v2552, %v2664
        %2666 = vmatmul.f32.gmra.mxu0 %v1760
        %v2667 = vpop.f32.mrf.mxu0
        %v2668 = vadd.f32 %v2555, %v2667
        %2669 = vmatmul.f32.gmra.mxu0 %v1764
        %v2670 = vpop.f32.mrf.mxu0
        %v2671 = vadd.f32 %v2558, %v2670
        %2672 = vmatmul.f32.gmra.mxu0 %v1768
        %v2673 = vpop.f32.mrf.mxu0
        %v2674 = vadd.f32 %v2561, %v2673
        %2675 = vmatmul.f32.gmra.mxu0 %v1772
        %v2676 = vpop.f32.mrf.mxu0
        %v2677 = vadd.f32 %v2564, %v2676
        %2678 = vmatmul.f32.gmra.mxu0 %v1776
        %v2679 = vpop.f32.mrf.mxu0
        %v2680 = vadd.f32 %v2567, %v2679
        %2681 = vmatmul.f32.gmra.mxu0 %v1780
        %v2682 = vpop.f32.mrf.mxu0
        %v2683 = vadd.f32 %v2570, %v2682
        %2684 = vmatmul.f32.gmra.mxu0 %v1784
        %v2685 = vpop.f32.mrf.mxu0
        %v2686 = vadd.f32 %v2573, %v2685
        %2687 = vmatmul.f32.gmra.mxu0 %v1788
        %v2688 = vpop.f32.mrf.mxu0
        %v2689 = vadd.f32 %v2576, %v2688
        %2690 = vmatmul.f32.gmra.mxu0 %v1792
        %v2691 = vpop.f32.mrf.mxu0
        %v2692 = vadd.f32 %v2579, %v2691
        %2693 = vmatmul.f32.gmra.mxu0 %v1796
        %v2694 = vpop.f32.mrf.mxu0
        %v2695 = vadd.f32 %v2582, %v2694
        %2696 = vmatmul.f32.gmra.mxu0 %v1800
        %v2697 = vpop.f32.mrf.mxu0
        %v2698 = vadd.f32 %v2585, %v2697
        %2699 = vmatmul.f32.gmra.mxu0 %v1804
        %v2700 = vpop.f32.mrf.mxu0
        %v2701 = vadd.f32 %v2588, %v2700
        %2702 = vmatmul.f32.gmra.mxu0 %v1808
        %v2703 = vpop.f32.mrf.mxu0
        %v2704 = vadd.f32 %v2591, %v2703
        %2705 = vmatmul.f32.gmra.mxu0 %v1812
        %v2706 = vpop.f32.mrf.mxu0
        %v2707 = vadd.f32 %v2594, %v2706
        %2708 = vmatmul.f32.gmra.mxu0 %v1816
        %v2709 = vpop.f32.mrf.mxu0
        %v2710 = vadd.f32 %v2597, %v2709
        %2711 = vdwg.mxu0
        %2712 = vmatpush.msra.mxu0 %v2371
        %2713 = vmatpush.msra.mxu0 %v2369
        %2714 = vmatpush.msra.mxu0 %v2367
        %2715 = vmatpush.msra.mxu0 %v2365
        %2716 = vmatpush.msra.mxu0 %v2363
        %2717 = vmatpush.msra.mxu0 %v2361
        %2718 = vmatpush.msra.mxu0 %v2359
        %2719 = vmatpush.msra.mxu0 %v2357
        %2720 = vmatpush.msra.mxu0 %v2355
        %2721 = vmatpush.msra.mxu0 %v2353
        %2722 = vmatpush.msra.mxu0 %v2351
        %2723 = vmatpush.msra.mxu0 %v2349
        %2724 = vmatpush.msra.mxu0 %v2347
        %2725 = vmatpush.msra.mxu0 %v2345
        %2726 = vmatpush.msra.mxu0 %v2343
        %2727 = vmatpush.msra.mxu0 %v2341
        %2728 = vmatmul.f32.gmra.mxu0 %v1693
        %v2729 = vpop.f32.mrf.mxu0
        %v2730 = vadd.f32 %v2617, %v2729
        %2731 = vmatmul.f32.gmra.mxu0 %v1697
        %v2732 = vpop.f32.mrf.mxu0
        %v2733 = vadd.f32 %v2620, %v2732
        %2734 = vmatmul.f32.gmra.mxu0 %v1701
        %v2735 = vpop.f32.mrf.mxu0
        %v2736 = vadd.f32 %v2623, %v2735
        %2737 = vmatmul.f32.gmra.mxu0 %v1705
        %v2738 = vpop.f32.mrf.mxu0
        %v2739 = vadd.f32 %v2626, %v2738
        %2740 = vmatmul.f32.gmra.mxu0 %v1709
        %v2741 = vpop.f32.mrf.mxu0
        %v2742 = vadd.f32 %v2629, %v2741
        %2743 = vmatmul.f32.gmra.mxu0 %v1713
        %v2744 = vpop.f32.mrf.mxu0
        %v2745 = vadd.f32 %v2632, %v2744
        %2746 = vmatmul.f32.gmra.mxu0 %v1717
        %v2747 = vpop.f32.mrf.mxu0
        %v2748 = vadd.f32 %v2635, %v2747
        %2749 = vmatmul.f32.gmra.mxu0 %v1721
        %v2750 = vpop.f32.mrf.mxu0
        %v2751 = vadd.f32 %v2638, %v2750
        %2752 = vmatmul.f32.gmra.mxu0 %v1725
        %v2753 = vpop.f32.mrf.mxu0
        %v2754 = vadd.f32 %v2641, %v2753
        %2755 = vmatmul.f32.gmra.mxu0 %v1729
        %v2756 = vpop.f32.mrf.mxu0
        %v2757 = vadd.f32 %v2644, %v2756
        %2758 = vmatmul.f32.gmra.mxu0 %v1733
        %v2759 = vpop.f32.mrf.mxu0
        %v2760 = vadd.f32 %v2647, %v2759
        %2761 = vmatmul.f32.gmra.mxu0 %v1737
        %v2762 = vpop.f32.mrf.mxu0
        %v2763 = vadd.f32 %v2650, %v2762
        %2764 = vmatmul.f32.gmra.mxu0 %v1741
        %v2765 = vpop.f32.mrf.mxu0
        %v2766 = vadd.f32 %v2653, %v2765
        %2767 = vmatmul.f32.gmra.mxu0 %v1745
        %v2768 = vpop.f32.mrf.mxu0
        %v2769 = vadd.f32 %v2656, %v2768
        %2770 = vmatmul.f32.gmra.mxu0 %v1749
        %v2771 = vpop.f32.mrf.mxu0
        %v2772 = vadd.f32 %v2659, %v2771
        %2773 = vmatmul.f32.gmra.mxu0 %v1753
        %v2774 = vpop.f32.mrf.mxu0
        %v2775 = vadd.f32 %v2662, %v2774
        %2776 = vmatmul.f32.gmra.mxu0 %v1757
        %v2777 = vpop.f32.mrf.mxu0
        %v2778 = vadd.f32 %v2665, %v2777
        %2779 = vmatmul.f32.gmra.mxu0 %v1761
        %v2780 = vpop.f32.mrf.mxu0
        %v2781 = vadd.f32 %v2668, %v2780
        %2782 = vmatmul.f32.gmra.mxu0 %v1765
        %v2783 = vpop.f32.mrf.mxu0
        %v2784 = vadd.f32 %v2671, %v2783
        %2785 = vmatmul.f32.gmra.mxu0 %v1769
        %v2786 = vpop.f32.mrf.mxu0
        %v2787 = vadd.f32 %v2674, %v2786
        %2788 = vmatmul.f32.gmra.mxu0 %v1773
        %v2789 = vpop.f32.mrf.mxu0
        %v2790 = vadd.f32 %v2677, %v2789
        %2791 = vmatmul.f32.gmra.mxu0 %v1777
        %v2792 = vpop.f32.mrf.mxu0
        %v2793 = vadd.f32 %v2680, %v2792
        %2794 = vmatmul.f32.gmra.mxu0 %v1781
        %v2795 = vpop.f32.mrf.mxu0
        %v2796 = vadd.f32 %v2683, %v2795
        %2797 = vmatmul.f32.gmra.mxu0 %v1785
        %v2798 = vpop.f32.mrf.mxu0
        %v2799 = vadd.f32 %v2686, %v2798
        %2800 = vmatmul.f32.gmra.mxu0 %v1789
        %v2801 = vpop.f32.mrf.mxu0
        %v2802 = vadd.f32 %v2689, %v2801
        %2803 = vmatmul.f32.gmra.mxu0 %v1793
        %v2804 = vpop.f32.mrf.mxu0
        %v2805 = vadd.f32 %v2692, %v2804
        %2806 = vmatmul.f32.gmra.mxu0 %v1797
        %v2807 = vpop.f32.mrf.mxu0
        %v2808 = vadd.f32 %v2695, %v2807
        %2809 = vmatmul.f32.gmra.mxu0 %v1801
        %v2810 = vpop.f32.mrf.mxu0
        %v2811 = vadd.f32 %v2698, %v2810
        %2812 = vmatmul.f32.gmra.mxu0 %v1805
        %v2813 = vpop.f32.mrf.mxu0
        %v2814 = vadd.f32 %v2701, %v2813
        %2815 = vmatmul.f32.gmra.mxu0 %v1809
        %v2816 = vpop.f32.mrf.mxu0
        %v2817 = vadd.f32 %v2704, %v2816
        %2818 = vmatmul.f32.gmra.mxu0 %v1813
        %v2819 = vpop.f32.mrf.mxu0
        %v2820 = vadd.f32 %v2707, %v2819
        %2821 = vmatmul.f32.gmra.mxu0 %v1817
        %v2822 = vpop.f32.mrf.mxu0
        %v2823 = vadd.f32 %v2710, %v2822
        %2824 = vdwg.mxu0
        %2825 = vmatpush.msra.mxu0 %v2276
        %2826 = vmatpush.msra.mxu0 %v2274
        %2827 = vmatpush.msra.mxu0 %v2272
        %2828 = vmatpush.msra.mxu0 %v2270
        %2829 = vmatpush.msra.mxu0 %v2268
        %2830 = vmatpush.msra.mxu0 %v2266
        %2831 = vmatpush.msra.mxu0 %v2264
        %2832 = vmatpush.msra.mxu0 %v2262
        %2833 = vmatpush.msra.mxu0 %v2260
        %2834 = vmatpush.msra.mxu0 %v2258
        %2835 = vmatpush.msra.mxu0 %v2256
        %2836 = vmatpush.msra.mxu0 %v2254
        %2837 = vmatpush.msra.mxu0 %v2252
        %2838 = vmatpush.msra.mxu0 %v2250
        %2839 = vmatpush.msra.mxu0 %v2248
        %2840 = vmatpush.msra.mxu0 %v2246
        %2841 = vmatmul.f32.gmra.mxu0 %v1690
        %v2842 = vpop.f32.mrf.mxu0
        %v2843 = vadd.f32 0.0, %v2842
        %2844 = vmatmul.f32.gmra.mxu0 %v1694
        %v2845 = vpop.f32.mrf.mxu0
        %v2846 = vadd.f32 0.0, %v2845
        %2847 = vmatmul.f32.gmra.mxu0 %v1698
        %v2848 = vpop.f32.mrf.mxu0
        %v2849 = vadd.f32 0.0, %v2848
        %2850 = vmatmul.f32.gmra.mxu0 %v1702
        %v2851 = vpop.f32.mrf.mxu0
        %v2852 = vadd.f32 0.0, %v2851
        %2853 = vmatmul.f32.gmra.mxu0 %v1706
        %v2854 = vpop.f32.mrf.mxu0
        %v2855 = vadd.f32 0.0, %v2854
        %2856 = vmatmul.f32.gmra.mxu0 %v1710
        %v2857 = vpop.f32.mrf.mxu0
        %v2858 = vadd.f32 0.0, %v2857
        %2859 = vmatmul.f32.gmra.mxu0 %v1714
        %v2860 = vpop.f32.mrf.mxu0
        %v2861 = vadd.f32 0.0, %v2860
        %2862 = vmatmul.f32.gmra.mxu0 %v1718
        %v2863 = vpop.f32.mrf.mxu0
        %v2864 = vadd.f32 0.0, %v2863
        %2865 = vmatmul.f32.gmra.mxu0 %v1722
        %v2866 = vpop.f32.mrf.mxu0
        %v2867 = vadd.f32 0.0, %v2866
        %2868 = vmatmul.f32.gmra.mxu0 %v1726
        %v2869 = vpop.f32.mrf.mxu0
        %v2870 = vadd.f32 0.0, %v2869
        %2871 = vmatmul.f32.gmra.mxu0 %v1730
        %v2872 = vpop.f32.mrf.mxu0
        %v2873 = vadd.f32 0.0, %v2872
        %2874 = vmatmul.f32.gmra.mxu0 %v1734
        %v2875 = vpop.f32.mrf.mxu0
        %v2876 = vadd.f32 0.0, %v2875
        %2877 = vmatmul.f32.gmra.mxu0 %v1738
        %v2878 = vpop.f32.mrf.mxu0
        %v2879 = vadd.f32 0.0, %v2878
        %2880 = vmatmul.f32.gmra.mxu0 %v1742
        %v2881 = vpop.f32.mrf.mxu0
        %v2882 = vadd.f32 0.0, %v2881
        %2883 = vmatmul.f32.gmra.mxu0 %v1746
        %v2884 = vpop.f32.mrf.mxu0
        %v2885 = vadd.f32 0.0, %v2884
        %2886 = vmatmul.f32.gmra.mxu0 %v1750
        %v2887 = vpop.f32.mrf.mxu0
        %v2888 = vadd.f32 0.0, %v2887
        %2889 = vmatmul.f32.gmra.mxu0 %v1754
        %v2890 = vpop.f32.mrf.mxu0
        %v2891 = vadd.f32 0.0, %v2890
        %2892 = vmatmul.f32.gmra.mxu0 %v1758
        %v2893 = vpop.f32.mrf.mxu0
        %v2894 = vadd.f32 0.0, %v2893
        %2895 = vmatmul.f32.gmra.mxu0 %v1762
        %v2896 = vpop.f32.mrf.mxu0
        %v2897 = vadd.f32 0.0, %v2896
        %2898 = vmatmul.f32.gmra.mxu0 %v1766
        %v2899 = vpop.f32.mrf.mxu0
        %v2900 = vadd.f32 0.0, %v2899
        %2901 = vmatmul.f32.gmra.mxu0 %v1770
        %v2902 = vpop.f32.mrf.mxu0
        %v2903 = vadd.f32 0.0, %v2902
        %2904 = vmatmul.f32.gmra.mxu0 %v1774
        %v2905 = vpop.f32.mrf.mxu0
        %v2906 = vadd.f32 0.0, %v2905
        %2907 = vmatmul.f32.gmra.mxu0 %v1778
        %v2908 = vpop.f32.mrf.mxu0
        %v2909 = vadd.f32 0.0, %v2908
        %2910 = vmatmul.f32.gmra.mxu0 %v1782
        %v2911 = vpop.f32.mrf.mxu0
        %v2912 = vadd.f32 0.0, %v2911
        %2913 = vmatmul.f32.gmra.mxu0 %v1786
        %v2914 = vpop.f32.mrf.mxu0
        %v2915 = vadd.f32 0.0, %v2914
        %2916 = vmatmul.f32.gmra.mxu0 %v1790
        %v2917 = vpop.f32.mrf.mxu0
        %v2918 = vadd.f32 0.0, %v2917
        %2919 = vmatmul.f32.gmra.mxu0 %v1794
        %v2920 = vpop.f32.mrf.mxu0
        %v2921 = vadd.f32 0.0, %v2920
        %2922 = vmatmul.f32.gmra.mxu0 %v1798
        %v2923 = vpop.f32.mrf.mxu0
        %v2924 = vadd.f32 0.0, %v2923
        %2925 = vmatmul.f32.gmra.mxu0 %v1802
        %v2926 = vpop.f32.mrf.mxu0
        %v2927 = vadd.f32 0.0, %v2926
        %2928 = vmatmul.f32.gmra.mxu0 %v1806
        %v2929 = vpop.f32.mrf.mxu0
        %v2930 = vadd.f32 0.0, %v2929
        %2931 = vmatmul.f32.gmra.mxu0 %v1810
        %v2932 = vpop.f32.mrf.mxu0
        %v2933 = vadd.f32 0.0, %v2932
        %2934 = vmatmul.f32.gmra.mxu0 %v1814
        %v2935 = vpop.f32.mrf.mxu0
        %v2936 = vadd.f32 0.0, %v2935
        %2937 = vdwg.mxu0
        %2938 = vmatpush.msra.mxu0 %v2308
        %2939 = vmatpush.msra.mxu0 %v2306
        %2940 = vmatpush.msra.mxu0 %v2304
        %2941 = vmatpush.msra.mxu0 %v2302
        %2942 = vmatpush.msra.mxu0 %v2300
        %2943 = vmatpush.msra.mxu0 %v2298
        %2944 = vmatpush.msra.mxu0 %v2296
        %2945 = vmatpush.msra.mxu0 %v2294
        %2946 = vmatpush.msra.mxu0 %v2292
        %2947 = vmatpush.msra.mxu0 %v2290
        %2948 = vmatpush.msra.mxu0 %v2288
        %2949 = vmatpush.msra.mxu0 %v2286
        %2950 = vmatpush.msra.mxu0 %v2284
        %2951 = vmatpush.msra.mxu0 %v2282
        %2952 = vmatpush.msra.mxu0 %v2280
        %2953 = vmatpush.msra.mxu0 %v2278
        %2954 = vmatmul.f32.gmra.mxu0 %v1691
        %v2955 = vpop.f32.mrf.mxu0
        %v2956 = vadd.f32 %v2843, %v2955
        %2957 = vmatmul.f32.gmra.mxu0 %v1695
        %v2958 = vpop.f32.mrf.mxu0
        %v2959 = vadd.f32 %v2846, %v2958
        %2960 = vmatmul.f32.gmra.mxu0 %v1699
        %v2961 = vpop.f32.mrf.mxu0
        %v2962 = vadd.f32 %v2849, %v2961
        %2963 = vmatmul.f32.gmra.mxu0 %v1703
        %v2964 = vpop.f32.mrf.mxu0
        %v2965 = vadd.f32 %v2852, %v2964
        %2966 = vmatmul.f32.gmra.mxu0 %v1707
        %v2967 = vpop.f32.mrf.mxu0
        %v2968 = vadd.f32 %v2855, %v2967
        %2969 = vmatmul.f32.gmra.mxu0 %v1711
        %v2970 = vpop.f32.mrf.mxu0
        %v2971 = vadd.f32 %v2858, %v2970
        %2972 = vmatmul.f32.gmra.mxu0 %v1715
        %v2973 = vpop.f32.mrf.mxu0
        %v2974 = vadd.f32 %v2861, %v2973
        %2975 = vmatmul.f32.gmra.mxu0 %v1719
        %v2976 = vpop.f32.mrf.mxu0
        %v2977 = vadd.f32 %v2864, %v2976
        %2978 = vmatmul.f32.gmra.mxu0 %v1723
        %v2979 = vpop.f32.mrf.mxu0
        %v2980 = vadd.f32 %v2867, %v2979
        %2981 = vmatmul.f32.gmra.mxu0 %v1727
        %v2982 = vpop.f32.mrf.mxu0
        %v2983 = vadd.f32 %v2870, %v2982
        %2984 = vmatmul.f32.gmra.mxu0 %v1731
        %v2985 = vpop.f32.mrf.mxu0
        %v2986 = vadd.f32 %v2873, %v2985
        %2987 = vmatmul.f32.gmra.mxu0 %v1735
        %v2988 = vpop.f32.mrf.mxu0
        %v2989 = vadd.f32 %v2876, %v2988
        %2990 = vmatmul.f32.gmra.mxu0 %v1739
        %v2991 = vpop.f32.mrf.mxu0
        %v2992 = vadd.f32 %v2879, %v2991
        %2993 = vmatmul.f32.gmra.mxu0 %v1743
        %v2994 = vpop.f32.mrf.mxu0
        %v2995 = vadd.f32 %v2882, %v2994
        %2996 = vmatmul.f32.gmra.mxu0 %v1747
        %v2997 = vpop.f32.mrf.mxu0
        %v2998 = vadd.f32 %v2885, %v2997
        %2999 = vmatmul.f32.gmra.mxu0 %v1751
        %v3000 = vpop.f32.mrf.mxu0
        %v3001 = vadd.f32 %v2888, %v3000
        %3002 = vmatmul.f32.gmra.mxu0 %v1755
        %v3003 = vpop.f32.mrf.mxu0
        %v3004 = vadd.f32 %v2891, %v3003
        %3005 = vmatmul.f32.gmra.mxu0 %v1759
        %v3006 = vpop.f32.mrf.mxu0
        %v3007 = vadd.f32 %v2894, %v3006
        %3008 = vmatmul.f32.gmra.mxu0 %v1763
        %v3009 = vpop.f32.mrf.mxu0
        %v3010 = vadd.f32 %v2897, %v3009
        %3011 = vmatmul.f32.gmra.mxu0 %v1767
        %v3012 = vpop.f32.mrf.mxu0
        %v3013 = vadd.f32 %v2900, %v3012
        %3014 = vmatmul.f32.gmra.mxu0 %v1771
        %v3015 = vpop.f32.mrf.mxu0
        %v3016 = vadd.f32 %v2903, %v3015
        %3017 = vmatmul.f32.gmra.mxu0 %v1775
        %v3018 = vpop.f32.mrf.mxu0
        %v3019 = vadd.f32 %v2906, %v3018
        %3020 = vmatmul.f32.gmra.mxu0 %v1779
        %v3021 = vpop.f32.mrf.mxu0
        %v3022 = vadd.f32 %v2909, %v3021
        %3023 = vmatmul.f32.gmra.mxu0 %v1783
        %v3024 = vpop.f32.mrf.mxu0
        %v3025 = vadd.f32 %v2912, %v3024
        %3026 = vmatmul.f32.gmra.mxu0 %v1787
        %v3027 = vpop.f32.mrf.mxu0
        %v3028 = vadd.f32 %v2915, %v3027
        %3029 = vmatmul.f32.gmra.mxu0 %v1791
        %v3030 = vpop.f32.mrf.mxu0
        %v3031 = vadd.f32 %v2918, %v3030
        %3032 = vmatmul.f32.gmra.mxu0 %v1795
        %v3033 = vpop.f32.mrf.mxu0
        %v3034 = vadd.f32 %v2921, %v3033
        %3035 = vmatmul.f32.gmra.mxu0 %v1799
        %v3036 = vpop.f32.mrf.mxu0
        %v3037 = vadd.f32 %v2924, %v3036
        %3038 = vmatmul.f32.gmra.mxu0 %v1803
        %v3039 = vpop.f32.mrf.mxu0
        %v3040 = vadd.f32 %v2927, %v3039
        %3041 = vmatmul.f32.gmra.mxu0 %v1807
        %v3042 = vpop.f32.mrf.mxu0
        %v3043 = vadd.f32 %v2930, %v3042
        %3044 = vmatmul.f32.gmra.mxu0 %v1811
        %v3045 = vpop.f32.mrf.mxu0
        %v3046 = vadd.f32 %v2933, %v3045
        %3047 = vmatmul.f32.gmra.mxu0 %v1815
        %v3048 = vpop.f32.mrf.mxu0
        %v3049 = vadd.f32 %v2936, %v3048
        %3050 = vdwg.mxu0
        %3051 = vmatpush.msra.mxu0 %v2340
        %3052 = vmatpush.msra.mxu0 %v2338
        %3053 = vmatpush.msra.mxu0 %v2336
        %3054 = vmatpush.msra.mxu0 %v2334
        %3055 = vmatpush.msra.mxu0 %v2332
        %3056 = vmatpush.msra.mxu0 %v2330
        %3057 = vmatpush.msra.mxu0 %v2328
        %3058 = vmatpush.msra.mxu0 %v2326
        %3059 = vmatpush.msra.mxu0 %v2324
        %3060 = vmatpush.msra.mxu0 %v2322
        %3061 = vmatpush.msra.mxu0 %v2320
        %3062 = vmatpush.msra.mxu0 %v2318
        %3063 = vmatpush.msra.mxu0 %v2316
        %3064 = vmatpush.msra.mxu0 %v2314
        %3065 = vmatpush.msra.mxu0 %v2312
        %3066 = vmatpush.msra.mxu0 %v2310
        %3067 = vmatmul.f32.gmra.mxu0 %v1692
        %v3068 = vpop.f32.mrf.mxu0
        %v3069 = vadd.f32 %v2956, %v3068
        %3070 = vmatmul.f32.gmra.mxu0 %v1696
        %v3071 = vpop.f32.mrf.mxu0
        %v3072 = vadd.f32 %v2959, %v3071
        %3073 = vmatmul.f32.gmra.mxu0 %v1700
        %v3074 = vpop.f32.mrf.mxu0
        %v3075 = vadd.f32 %v2962, %v3074
        %3076 = vmatmul.f32.gmra.mxu0 %v1704
        %v3077 = vpop.f32.mrf.mxu0
        %v3078 = vadd.f32 %v2965, %v3077
        %3079 = vmatmul.f32.gmra.mxu0 %v1708
        %v3080 = vpop.f32.mrf.mxu0
        %v3081 = vadd.f32 %v2968, %v3080
        %3082 = vmatmul.f32.gmra.mxu0 %v1712
        %v3083 = vpop.f32.mrf.mxu0
        %v3084 = vadd.f32 %v2971, %v3083
        %3085 = vmatmul.f32.gmra.mxu0 %v1716
        %v3086 = vpop.f32.mrf.mxu0
        %v3087 = vadd.f32 %v2974, %v3086
        %3088 = vmatmul.f32.gmra.mxu0 %v1720
        %v3089 = vpop.f32.mrf.mxu0
        %v3090 = vadd.f32 %v2977, %v3089
        %3091 = vmatmul.f32.gmra.mxu0 %v1724
        %v3092 = vpop.f32.mrf.mxu0
        %v3093 = vadd.f32 %v2980, %v3092
        %3094 = vmatmul.f32.gmra.mxu0 %v1728
        %v3095 = vpop.f32.mrf.mxu0
        %v3096 = vadd.f32 %v2983, %v3095
        %3097 = vmatmul.f32.gmra.mxu0 %v1732
        %v3098 = vpop.f32.mrf.mxu0
        %v3099 = vadd.f32 %v2986, %v3098
        %3100 = vmatmul.f32.gmra.mxu0 %v1736
        %v3101 = vpop.f32.mrf.mxu0
        %v3102 = vadd.f32 %v2989, %v3101
        %3103 = vmatmul.f32.gmra.mxu0 %v1740
        %v3104 = vpop.f32.mrf.mxu0
        %v3105 = vadd.f32 %v2992, %v3104
        %3106 = vmatmul.f32.gmra.mxu0 %v1744
        %v3107 = vpop.f32.mrf.mxu0
        %v3108 = vadd.f32 %v2995, %v3107
        %3109 = vmatmul.f32.gmra.mxu0 %v1748
        %v3110 = vpop.f32.mrf.mxu0
        %v3111 = vadd.f32 %v2998, %v3110
        %3112 = vmatmul.f32.gmra.mxu0 %v1752
        %v3113 = vpop.f32.mrf.mxu0
        %v3114 = vadd.f32 %v3001, %v3113
        %3115 = vmatmul.f32.gmra.mxu0 %v1756
        %v3116 = vpop.f32.mrf.mxu0
        %v3117 = vadd.f32 %v3004, %v3116
        %3118 = vmatmul.f32.gmra.mxu0 %v1760
        %v3119 = vpop.f32.mrf.mxu0
        %v3120 = vadd.f32 %v3007, %v3119
        %3121 = vmatmul.f32.gmra.mxu0 %v1764
        %v3122 = vpop.f32.mrf.mxu0
        %v3123 = vadd.f32 %v3010, %v3122
        %3124 = vmatmul.f32.gmra.mxu0 %v1768
        %v3125 = vpop.f32.mrf.mxu0
        %v3126 = vadd.f32 %v3013, %v3125
        %3127 = vmatmul.f32.gmra.mxu0 %v1772
        %v3128 = vpop.f32.mrf.mxu0
        %v3129 = vadd.f32 %v3016, %v3128
        %3130 = vmatmul.f32.gmra.mxu0 %v1776
        %v3131 = vpop.f32.mrf.mxu0
        %v3132 = vadd.f32 %v3019, %v3131
        %3133 = vmatmul.f32.gmra.mxu0 %v1780
        %v3134 = vpop.f32.mrf.mxu0
        %v3135 = vadd.f32 %v3022, %v3134
        %3136 = vmatmul.f32.gmra.mxu0 %v1784
        %v3137 = vpop.f32.mrf.mxu0
        %v3138 = vadd.f32 %v3025, %v3137
        %3139 = vmatmul.f32.gmra.mxu0 %v1788
        %v3140 = vpop.f32.mrf.mxu0
        %v3141 = vadd.f32 %v3028, %v3140
        %3142 = vmatmul.f32.gmra.mxu0 %v1792
        %v3143 = vpop.f32.mrf.mxu0
        %v3144 = vadd.f32 %v3031, %v3143
        %3145 = vmatmul.f32.gmra.mxu0 %v1796
        %v3146 = vpop.f32.mrf.mxu0
        %v3147 = vadd.f32 %v3034, %v3146
        %3148 = vmatmul.f32.gmra.mxu0 %v1800
        %v3149 = vpop.f32.mrf.mxu0
        %v3150 = vadd.f32 %v3037, %v3149
        %3151 = vmatmul.f32.gmra.mxu0 %v1804
        %v3152 = vpop.f32.mrf.mxu0
        %v3153 = vadd.f32 %v3040, %v3152
        %3154 = vmatmul.f32.gmra.mxu0 %v1808
        %v3155 = vpop.f32.mrf.mxu0
        %v3156 = vadd.f32 %v3043, %v3155
        %3157 = vmatmul.f32.gmra.mxu0 %v1812
        %v3158 = vpop.f32.mrf.mxu0
        %v3159 = vadd.f32 %v3046, %v3158
        %3160 = vmatmul.f32.gmra.mxu0 %v1816
        %v3161 = vpop.f32.mrf.mxu0
        %v3162 = vadd.f32 %v3049, %v3161
        %3163 = vdwg.mxu0
        %3164 = vmatpush.msra.mxu0 %v2372
        %3165 = vmatpush.msra.mxu0 %v2370
        %3166 = vmatpush.msra.mxu0 %v2368
        %3167 = vmatpush.msra.mxu0 %v2366
        %3168 = vmatpush.msra.mxu0 %v2364
        %3169 = vmatpush.msra.mxu0 %v2362
        %3170 = vmatpush.msra.mxu0 %v2360
        %3171 = vmatpush.msra.mxu0 %v2358
        %3172 = vmatpush.msra.mxu0 %v2356
        %3173 = vmatpush.msra.mxu0 %v2354
        %3174 = vmatpush.msra.mxu0 %v2352
        %3175 = vmatpush.msra.mxu0 %v2350
        %3176 = vmatpush.msra.mxu0 %v2348
        %3177 = vmatpush.msra.mxu0 %v2346
        %3178 = vmatpush.msra.mxu0 %v2344
        %3179 = vmatpush.msra.mxu0 %v2342
        %3180 = vmatmul.f32.gmra.mxu0 %v1693
        %v3181 = vpop.f32.mrf.mxu0
        %v3182 = vadd.f32 %v3069, %v3181
        %3183 = vmatmul.f32.gmra.mxu0 %v1697
        %v3184 = vpop.f32.mrf.mxu0
        %v3185 = vadd.f32 %v3072, %v3184
        %3186 = vmatmul.f32.gmra.mxu0 %v1701
        %v3187 = vpop.f32.mrf.mxu0
        %v3188 = vadd.f32 %v3075, %v3187
        %3189 = vmatmul.f32.gmra.mxu0 %v1705
        %v3190 = vpop.f32.mrf.mxu0
        %v3191 = vadd.f32 %v3078, %v3190
        %3192 = vmatmul.f32.gmra.mxu0 %v1709
        %v3193 = vpop.f32.mrf.mxu0
        %v3194 = vadd.f32 %v3081, %v3193
        %3195 = vmatmul.f32.gmra.mxu0 %v1713
        %v3196 = vpop.f32.mrf.mxu0
        %v3197 = vadd.f32 %v3084, %v3196
        %3198 = vmatmul.f32.gmra.mxu0 %v1717
        %v3199 = vpop.f32.mrf.mxu0
        %v3200 = vadd.f32 %v3087, %v3199
        %3201 = vmatmul.f32.gmra.mxu0 %v1721
        %v3202 = vpop.f32.mrf.mxu0
        %v3203 = vadd.f32 %v3090, %v3202
        %3204 = vmatmul.f32.gmra.mxu0 %v1725
        %v3205 = vpop.f32.mrf.mxu0
        %v3206 = vadd.f32 %v3093, %v3205
        %3207 = vmatmul.f32.gmra.mxu0 %v1729
        %v3208 = vpop.f32.mrf.mxu0
        %v3209 = vadd.f32 %v3096, %v3208
        %3210 = vmatmul.f32.gmra.mxu0 %v1733
        %v3211 = vpop.f32.mrf.mxu0
        %v3212 = vadd.f32 %v3099, %v3211
        %3213 = vmatmul.f32.gmra.mxu0 %v1737
        %v3214 = vpop.f32.mrf.mxu0
        %v3215 = vadd.f32 %v3102, %v3214
        %3216 = vmatmul.f32.gmra.mxu0 %v1741
        %v3217 = vpop.f32.mrf.mxu0
        %v3218 = vadd.f32 %v3105, %v3217
        %3219 = vmatmul.f32.gmra.mxu0 %v1745
        %v3220 = vpop.f32.mrf.mxu0
        %v3221 = vadd.f32 %v3108, %v3220
        %3222 = vmatmul.f32.gmra.mxu0 %v1749
        %v3223 = vpop.f32.mrf.mxu0
        %v3224 = vadd.f32 %v3111, %v3223
        %3225 = vmatmul.f32.gmra.mxu0 %v1753
        %v3226 = vpop.f32.mrf.mxu0
        %v3227 = vadd.f32 %v3114, %v3226
        %3228 = vmatmul.f32.gmra.mxu0 %v1757
        %v3229 = vpop.f32.mrf.mxu0
        %v3230 = vadd.f32 %v3117, %v3229
        %3231 = vmatmul.f32.gmra.mxu0 %v1761
        %v3232 = vpop.f32.mrf.mxu0
        %v3233 = vadd.f32 %v3120, %v3232
        %3234 = vmatmul.f32.gmra.mxu0 %v1765
        %v3235 = vpop.f32.mrf.mxu0
        %v3236 = vadd.f32 %v3123, %v3235
        %3237 = vmatmul.f32.gmra.mxu0 %v1769
        %v3238 = vpop.f32.mrf.mxu0
        %v3239 = vadd.f32 %v3126, %v3238
        %3240 = vmatmul.f32.gmra.mxu0 %v1773
        %v3241 = vpop.f32.mrf.mxu0
        %v3242 = vadd.f32 %v3129, %v3241
        %3243 = vmatmul.f32.gmra.mxu0 %v1777
        %v3244 = vpop.f32.mrf.mxu0
        %v3245 = vadd.f32 %v3132, %v3244
        %3246 = vmatmul.f32.gmra.mxu0 %v1781
        %v3247 = vpop.f32.mrf.mxu0
        %v3248 = vadd.f32 %v3135, %v3247
        %3249 = vmatmul.f32.gmra.mxu0 %v1785
        %v3250 = vpop.f32.mrf.mxu0
        %v3251 = vadd.f32 %v3138, %v3250
        %3252 = vmatmul.f32.gmra.mxu0 %v1789
        %v3253 = vpop.f32.mrf.mxu0
        %v3254 = vadd.f32 %v3141, %v3253
        %3255 = vmatmul.f32.gmra.mxu0 %v1793
        %v3256 = vpop.f32.mrf.mxu0
        %v3257 = vadd.f32 %v3144, %v3256
        %3258 = vmatmul.f32.gmra.mxu0 %v1797
        %v3259 = vpop.f32.mrf.mxu0
        %v3260 = vadd.f32 %v3147, %v3259
        %3261 = vmatmul.f32.gmra.mxu0 %v1801
        %v3262 = vpop.f32.mrf.mxu0
        %v3263 = vadd.f32 %v3150, %v3262
        %3264 = vmatmul.f32.gmra.mxu0 %v1805
        %v3265 = vpop.f32.mrf.mxu0
        %v3266 = vadd.f32 %v3153, %v3265
        %3267 = vmatmul.f32.gmra.mxu0 %v1809
        %v3268 = vpop.f32.mrf.mxu0
        %v3269 = vadd.f32 %v3156, %v3268
        %3270 = vmatmul.f32.gmra.mxu0 %v1813
        %v3271 = vpop.f32.mrf.mxu0
        %v3272 = vadd.f32 %v3159, %v3271
        %3273 = vmatmul.f32.gmra.mxu0 %v1817
        %v3274 = vpop.f32.mrf.mxu0
        %v3275 = vadd.f32 %v3162, %v3274
        %3276 = vdwg.mxu0
        %v3277 = vadd.f32 %v2181, %v2730
        %v3278 = vadd.f32 %v2182, %v3182
        %v3279 = vadd.f32 %v2183, %v2733
        %v3280 = vadd.f32 %v2184, %v3185
        %v3281 = vadd.f32 %v2185, %v2736
        %v3282 = vadd.f32 %v2186, %v3188
        %v3283 = vadd.f32 %v2187, %v2739
        %v3284 = vadd.f32 %v2188, %v3191
        %v3285 = vadd.f32 %v2189, %v2742
        %v3286 = vadd.f32 %v2190, %v3194
        %v3287 = vadd.f32 %v2191, %v2745
        %v3288 = vadd.f32 %v2192, %v3197
        %v3289 = vadd.f32 %v2193, %v2748
        %v3290 = vadd.f32 %v2194, %v3200
        %v3291 = vadd.f32 %v2195, %v2751
        %v3292 = vadd.f32 %v2196, %v3203
        %v3293 = vadd.f32 %v2197, %v2754
        %v3294 = vadd.f32 %v2198, %v3206
        %v3295 = vadd.f32 %v2199, %v2757
        %v3296 = vadd.f32 %v2200, %v3209
        %v3297 = vadd.f32 %v2201, %v2760
        %v3298 = vadd.f32 %v2202, %v3212
        %v3299 = vadd.f32 %v2203, %v2763
        %v3300 = vadd.f32 %v2204, %v3215
        %v3301 = vadd.f32 %v2205, %v2766
        %v3302 = vadd.f32 %v2206, %v3218
        %v3303 = vadd.f32 %v2207, %v2769
        %v3304 = vadd.f32 %v2208, %v3221
        %v3305 = vadd.f32 %v2209, %v2772
        %v3306 = vadd.f32 %v2210, %v3224
        %v3307 = vadd.f32 %v2211, %v2775
        %v3308 = vadd.f32 %v2212, %v3227
        %v3309 = vadd.f32 %v2213, %v2778
        %v3310 = vadd.f32 %v2214, %v3230
        %v3311 = vadd.f32 %v2215, %v2781
        %v3312 = vadd.f32 %v2216, %v3233
        %v3313 = vadd.f32 %v2217, %v2784
        %v3314 = vadd.f32 %v2218, %v3236
        %v3315 = vadd.f32 %v2219, %v2787
        %v3316 = vadd.f32 %v2220, %v3239
        %v3317 = vadd.f32 %v2221, %v2790
        %v3318 = vadd.f32 %v2222, %v3242
        %v3319 = vadd.f32 %v2223, %v2793
        %v3320 = vadd.f32 %v2224, %v3245
        %v3321 = vadd.f32 %v2225, %v2796
        %v3322 = vadd.f32 %v2226, %v3248
        %v3323 = vadd.f32 %v2227, %v2799
        %v3324 = vadd.f32 %v2228, %v3251
        %v3325 = vadd.f32 %v2229, %v2802
        %v3326 = vadd.f32 %v2230, %v3254
        %v3327 = vadd.f32 %v2231, %v2805
        %v3328 = vadd.f32 %v2232, %v3257
        %v3329 = vadd.f32 %v2233, %v2808
        %v3330 = vadd.f32 %v2234, %v3260
        %v3331 = vadd.f32 %v2235, %v2811
        %v3332 = vadd.f32 %v2236, %v3263
        %v3333 = vadd.f32 %v2237, %v2814
        %v3334 = vadd.f32 %v2238, %v3266
        %v3335 = vadd.f32 %v2239, %v2817
        %v3336 = vadd.f32 %v2240, %v3269
        %v3337 = vadd.f32 %v2241, %v2820
        %v3338 = vadd.f32 %v2242, %v3272
        %v3339 = vadd.f32 %v2243, %v2823
        %v3340 = vadd.f32 %v2244, %v3275
        %3341 = vst [vmem:[#allocation2] sm:$0xff] %v3277
        %3342 = vst [vmem:[#allocation2 + $0x8] sm:$0xff] %v3278
        %3343 = vst [vmem:[#allocation2 + $0x10] sm:$0xff] %v3279
        %3344 = vst [vmem:[#allocation2 + $0x18] sm:$0xff] %v3280
        %3345 = vst [vmem:[#allocation2 + $0x20] sm:$0xff] %v3281
        %3346 = vst [vmem:[#allocation2 + $0x28] sm:$0xff] %v3282
        %3347 = vst [vmem:[#allocation2 + $0x30] sm:$0xff] %v3283
        %3348 = vst [vmem:[#allocation2 + $0x38] sm:$0xff] %v3284
        %3349 = vst [vmem:[#allocation2 + $0x40] sm:$0xff] %v3285
        %3350 = vst [vmem:[#allocation2 + $0x48] sm:$0xff] %v3286
        %3351 = vst [vmem:[#allocation2 + $0x50] sm:$0xff] %v3287
        %3352 = vst [vmem:[#allocation2 + $0x58] sm:$0xff] %v3288
        %3353 = vst [vmem:[#allocation2 + $0x60] sm:$0xff] %v3289
        %3354 = vst [vmem:[#allocation2 + $0x68] sm:$0xff] %v3290
        %3355 = vst [vmem:[#allocation2 + $0x70] sm:$0xff] %v3291
        %3356 = vst [vmem:[#allocation2 + $0x78] sm:$0xff] %v3292
        %3357 = vst [vmem:[#allocation2 + $0x80] sm:$0xff] %v3293
        %3358 = vst [vmem:[#allocation2 + $0x88] sm:$0xff] %v3294
        %3359 = vst [vmem:[#allocation2 + $0x90] sm:$0xff] %v3295
        %3360 = vst [vmem:[#allocation2 + $0x98] sm:$0xff] %v3296
        %3361 = vst [vmem:[#allocation2 + $0xa0] sm:$0xff] %v3297
        %3362 = vst [vmem:[#allocation2 + $0xa8] sm:$0xff] %v3298
        %3363 = vst [vmem:[#allocation2 + $0xb0] sm:$0xff] %v3299
        %3364 = vst [vmem:[#allocation2 + $0xb8] sm:$0xff] %v3300
        %3365 = vst [vmem:[#allocation2 + $0xc0] sm:$0xff] %v3301
        %3366 = vst [vmem:[#allocation2 + $0xc8] sm:$0xff] %v3302
        %3367 = vst [vmem:[#allocation2 + $0xd0] sm:$0xff] %v3303
        %3368 = vst [vmem:[#allocation2 + $0xd8] sm:$0xff] %v3304
        %3369 = vst [vmem:[#allocation2 + $0xe0] sm:$0xff] %v3305
        %3370 = vst [vmem:[#allocation2 + $0xe8] sm:$0xff] %v3306
        %3371 = vst [vmem:[#allocation2 + $0xf0] sm:$0xff] %v3307
        %3372 = vst [vmem:[#allocation2 + $0xf8] sm:$0xff] %v3308
        %3373 = vst [vmem:[#allocation2 + $0x100] sm:$0xff] %v3309
        %3374 = vst [vmem:[#allocation2 + $0x108] sm:$0xff] %v3310
        %3375 = vst [vmem:[#allocation2 + $0x110] sm:$0xff] %v3311
        %3376 = vst [vmem:[#allocation2 + $0x118] sm:$0xff] %v3312
        %3377 = vst [vmem:[#allocation2 + $0x120] sm:$0xff] %v3313
        %3378 = vst [vmem:[#allocation2 + $0x128] sm:$0xff] %v3314
        %3379 = vst [vmem:[#allocation2 + $0x130] sm:$0xff] %v3315
        %3380 = vst [vmem:[#allocation2 + $0x138] sm:$0xff] %v3316
        %3381 = vst [vmem:[#allocation2 + $0x140] sm:$0xff] %v3317
        %3382 = vst [vmem:[#allocation2 + $0x148] sm:$0xff] %v3318
        %3383 = vst [vmem:[#allocation2 + $0x150] sm:$0xff] %v3319
        %3384 = vst [vmem:[#allocation2 + $0x158] sm:$0xff] %v3320
        %3385 = vst [vmem:[#allocation2 + $0x160] sm:$0xff] %v3321
        %3386 = vst [vmem:[#allocation2 + $0x168] sm:$0xff] %v3322
        %3387 = vst [vmem:[#allocation2 + $0x170] sm:$0xff] %v3323
        %3388 = vst [vmem:[#allocation2 + $0x178] sm:$0xff] %v3324
        %3389 = vst [vmem:[#allocation2 + $0x180] sm:$0xff] %v3325
        %3390 = vst [vmem:[#allocation2 + $0x188] sm:$0xff] %v3326
        %3391 = vst [vmem:[#allocation2 + $0x190] sm:$0xff] %v3327
        %3392 = vst [vmem:[#allocation2 + $0x198] sm:$0xff] %v3328
        %3393 = vst [vmem:[#allocation2 + $0x1a0] sm:$0xff] %v3329
        %3394 = vst [vmem:[#allocation2 + $0x1a8] sm:$0xff] %v3330
        %3395 = vst [vmem:[#allocation2 + $0x1b0] sm:$0xff] %v3331
        %3396 = vst [vmem:[#allocation2 + $0x1b8] sm:$0xff] %v3332
        %3397 = vst [vmem:[#allocation2 + $0x1c0] sm:$0xff] %v3333
        %3398 = vst [vmem:[#allocation2 + $0x1c8] sm:$0xff] %v3334
        %3399 = vst [vmem:[#allocation2 + $0x1d0] sm:$0xff] %v3335
        %3400 = vst [vmem:[#allocation2 + $0x1d8] sm:$0xff] %v3336
        %3401 = vst [vmem:[#allocation2 + $0x1e0] sm:$0xff] %v3337
        %3402 = vst [vmem:[#allocation2 + $0x1e8] sm:$0xff] %v3338
        %3403 = vst [vmem:[#allocation2 + $0x1f0] sm:$0xff] %v3339
        %3404 = vst [vmem:[#allocation2 + $0x1f8] sm:$0xff] %v3340
        %p3405 = scmp.eq.s32.totalorder %s43, 1
        // Predicated region
        $region65: #{tpu_custom_call.1} parent=39 // pred_check
          %p3406 = pneg %p3405
        $region66: #{tpu_custom_call.1} parent=39 // pred_check_branch
          %3408 = sbr.rel (%p3406) target = $region68
        $region67: #{tpu_custom_call.1} parent=39 // pred_region
          %v3409 = vld [vmem:[#allocation2] sm:$0xff]
          %v3410 = vld [vmem:[#allocation2 + $0x8] sm:$0xff]
          %v3411 = vld [vmem:[#allocation2 + $0x10] sm:$0xff]
          %v3412 = vld [vmem:[#allocation2 + $0x18] sm:$0xff]
          %v3413 = vld [vmem:[#allocation2 + $0x20] sm:$0xff]
          %v3414 = vld [vmem:[#allocation2 + $0x28] sm:$0xff]
          %v3415 = vld [vmem:[#allocation2 + $0x30] sm:$0xff]
          %v3416 = vld [vmem:[#allocation2 + $0x38] sm:$0xff]
          %v3417 = vld [vmem:[#allocation2 + $0x40] sm:$0xff]
          %v3418 = vld [vmem:[#allocation2 + $0x48] sm:$0xff]
          %v3419 = vld [vmem:[#allocation2 + $0x50] sm:$0xff]
          %v3420 = vld [vmem:[#allocation2 + $0x58] sm:$0xff]
          %v3421 = vld [vmem:[#allocation2 + $0x60] sm:$0xff]
          %v3422 = vld [vmem:[#allocation2 + $0x68] sm:$0xff]
          %v3423 = vld [vmem:[#allocation2 + $0x70] sm:$0xff]
          %v3424 = vld [vmem:[#allocation2 + $0x78] sm:$0xff]
          %v3425 = vld [vmem:[#allocation2 + $0x80] sm:$0xff]
          %v3426 = vld [vmem:[#allocation2 + $0x88] sm:$0xff]
          %v3427 = vld [vmem:[#allocation2 + $0x90] sm:$0xff]
          %v3428 = vld [vmem:[#allocation2 + $0x98] sm:$0xff]
          %v3429 = vld [vmem:[#allocation2 + $0xa0] sm:$0xff]
          %v3430 = vld [vmem:[#allocation2 + $0xa8] sm:$0xff]
          %v3431 = vld [vmem:[#allocation2 + $0xb0] sm:$0xff]
          %v3432 = vld [vmem:[#allocation2 + $0xb8] sm:$0xff]
          %v3433 = vld [vmem:[#allocation2 + $0xc0] sm:$0xff]
          %v3434 = vld [vmem:[#allocation2 + $0xc8] sm:$0xff]
          %v3435 = vld [vmem:[#allocation2 + $0xd0] sm:$0xff]
          %v3436 = vld [vmem:[#allocation2 + $0xd8] sm:$0xff]
          %v3437 = vld [vmem:[#allocation2 + $0xe0] sm:$0xff]
          %v3438 = vld [vmem:[#allocation2 + $0xe8] sm:$0xff]
          %v3439 = vld [vmem:[#allocation2 + $0xf0] sm:$0xff]
          %v3440 = vld [vmem:[#allocation2 + $0xf8] sm:$0xff]
          %v3441 = vld [vmem:[#allocation2 + $0x100] sm:$0xff]
          %v3442 = vld [vmem:[#allocation2 + $0x108] sm:$0xff]
          %v3443 = vld [vmem:[#allocation2 + $0x110] sm:$0xff]
          %v3444 = vld [vmem:[#allocation2 + $0x118] sm:$0xff]
          %v3445 = vld [vmem:[#allocation2 + $0x120] sm:$0xff]
          %v3446 = vld [vmem:[#allocation2 + $0x128] sm:$0xff]
          %v3447 = vld [vmem:[#allocation2 + $0x130] sm:$0xff]
          %v3448 = vld [vmem:[#allocation2 + $0x138] sm:$0xff]
          %v3449 = vld [vmem:[#allocation2 + $0x140] sm:$0xff]
          %v3450 = vld [vmem:[#allocation2 + $0x148] sm:$0xff]
          %v3451 = vld [vmem:[#allocation2 + $0x150] sm:$0xff]
          %v3452 = vld [vmem:[#allocation2 + $0x158] sm:$0xff]
          %v3453 = vld [vmem:[#allocation2 + $0x160] sm:$0xff]
          %v3454 = vld [vmem:[#allocation2 + $0x168] sm:$0xff]
          %v3455 = vld [vmem:[#allocation2 + $0x170] sm:$0xff]
          %v3456 = vld [vmem:[#allocation2 + $0x178] sm:$0xff]
          %v3457 = vld [vmem:[#allocation2 + $0x180] sm:$0xff]
          %v3458 = vld [vmem:[#allocation2 + $0x188] sm:$0xff]
          %v3459 = vld [vmem:[#allocation2 + $0x190] sm:$0xff]
          %v3460 = vld [vmem:[#allocation2 + $0x198] sm:$0xff]
          %v3461 = vld [vmem:[#allocation2 + $0x1a0] sm:$0xff]
          %v3462 = vld [vmem:[#allocation2 + $0x1a8] sm:$0xff]
          %v3463 = vld [vmem:[#allocation2 + $0x1b0] sm:$0xff]
          %v3464 = vld [vmem:[#allocation2 + $0x1b8] sm:$0xff]
          %v3465 = vld [vmem:[#allocation2 + $0x1c0] sm:$0xff]
          %v3466 = vld [vmem:[#allocation2 + $0x1c8] sm:$0xff]
          %v3467 = vld [vmem:[#allocation2 + $0x1d0] sm:$0xff]
          %v3468 = vld [vmem:[#allocation2 + $0x1d8] sm:$0xff]
          %v3469 = vld [vmem:[#allocation2 + $0x1e0] sm:$0xff]
          %v3470 = vld [vmem:[#allocation2 + $0x1e8] sm:$0xff]
          %v3471 = vld [vmem:[#allocation2 + $0x1f0] sm:$0xff]
          %v3472 = vld [vmem:[#allocation2 + $0x1f8] sm:$0xff]
          %v3473 = vadd.f32 %v3409, %v580
          %v3474 = vadd.f32 %v3410, %v581
          %v3475 = vadd.f32 %v3411, %v580
          %v3476 = vadd.f32 %v3412, %v581
          %v3477 = vadd.f32 %v3413, %v580
          %v3478 = vadd.f32 %v3414, %v581
          %v3479 = vadd.f32 %v3415, %v580
          %v3480 = vadd.f32 %v3416, %v581
          %v3481 = vadd.f32 %v3417, %v580
          %v3482 = vadd.f32 %v3418, %v581
          %v3483 = vadd.f32 %v3419, %v580
          %v3484 = vadd.f32 %v3420, %v581
          %v3485 = vadd.f32 %v3421, %v580
          %v3486 = vadd.f32 %v3422, %v581
          %v3487 = vadd.f32 %v3423, %v580
          %v3488 = vadd.f32 %v3424, %v581
          %v3489 = vadd.f32 %v3425, %v580
          %v3490 = vadd.f32 %v3426, %v581
          %v3491 = vadd.f32 %v3427, %v580
          %v3492 = vadd.f32 %v3428, %v581
          %v3493 = vadd.f32 %v3429, %v580
          %v3494 = vadd.f32 %v3430, %v581
          %v3495 = vadd.f32 %v3431, %v580
          %v3496 = vadd.f32 %v3432, %v581
          %v3497 = vadd.f32 %v3433, %v580
          %v3498 = vadd.f32 %v3434, %v581
          %v3499 = vadd.f32 %v3435, %v580
          %v3500 = vadd.f32 %v3436, %v581
          %v3501 = vadd.f32 %v3437, %v580
          %v3502 = vadd.f32 %v3438, %v581
          %v3503 = vadd.f32 %v3439, %v580
          %v3504 = vadd.f32 %v3440, %v581
          %v3505 = vadd.f32 %v3441, %v580
          %v3506 = vadd.f32 %v3442, %v581
          %v3507 = vadd.f32 %v3443, %v580
          %v3508 = vadd.f32 %v3444, %v581
          %v3509 = vadd.f32 %v3445, %v580
          %v3510 = vadd.f32 %v3446, %v581
          %v3511 = vadd.f32 %v3447, %v580
          %v3512 = vadd.f32 %v3448, %v581
          %v3513 = vadd.f32 %v3449, %v580
          %v3514 = vadd.f32 %v3450, %v581
          %v3515 = vadd.f32 %v3451, %v580
          %v3516 = vadd.f32 %v3452, %v581
          %v3517 = vadd.f32 %v3453, %v580
          %v3518 = vadd.f32 %v3454, %v581
          %v3519 = vadd.f32 %v3455, %v580
          %v3520 = vadd.f32 %v3456, %v581
          %v3521 = vadd.f32 %v3457, %v580
          %v3522 = vadd.f32 %v3458, %v581
          %v3523 = vadd.f32 %v3459, %v580
          %v3524 = vadd.f32 %v3460, %v581
          %v3525 = vadd.f32 %v3461, %v580
          %v3526 = vadd.f32 %v3462, %v581
          %v3527 = vadd.f32 %v3463, %v580
          %v3528 = vadd.f32 %v3464, %v581
          %v3529 = vadd.f32 %v3465, %v580
          %v3530 = vadd.f32 %v3466, %v581
          %v3531 = vadd.f32 %v3467, %v580
          %v3532 = vadd.f32 %v3468, %v581
          %v3533 = vadd.f32 %v3469, %v580
          %v3534 = vadd.f32 %v3470, %v581
          %v3535 = vadd.f32 %v3471, %v580
          %v3536 = vadd.f32 %v3472, %v581
          %3537 = vst [vmem:[%s484] sm:$0xff] %v3473
          %3538 = vst [vmem:[%s484 + $0x8] sm:$0xff] %v3474
          %3539 = vst [vmem:[%s484 + $0x10] sm:$0xff] %v3475
          %3540 = vst [vmem:[%s484 + $0x18] sm:$0xff] %v3476
          %3541 = vst [vmem:[%s484 + $0x20] sm:$0xff] %v3477
          %3542 = vst [vmem:[%s484 + $0x28] sm:$0xff] %v3478
          %3543 = vst [vmem:[%s484 + $0x30] sm:$0xff] %v3479
          %3544 = vst [vmem:[%s484 + $0x38] sm:$0xff] %v3480
          %3545 = vst [vmem:[%s484 + $0x40] sm:$0xff] %v3481
          %3546 = vst [vmem:[%s484 + $0x48] sm:$0xff] %v3482
          %3547 = vst [vmem:[%s484 + $0x50] sm:$0xff] %v3483
          %3548 = vst [vmem:[%s484 + $0x58] sm:$0xff] %v3484
          %3549 = vst [vmem:[%s484 + $0x60] sm:$0xff] %v3485
          %3550 = vst [vmem:[%s484 + $0x68] sm:$0xff] %v3486
          %3551 = vst [vmem:[%s484 + $0x70] sm:$0xff] %v3487
          %3552 = vst [vmem:[%s484 + $0x78] sm:$0xff] %v3488
          %3553 = vst [vmem:[%s484 + $0x80] sm:$0xff] %v3489
          %3554 = vst [vmem:[%s484 + $0x88] sm:$0xff] %v3490
          %3555 = vst [vmem:[%s484 + $0x90] sm:$0xff] %v3491
          %3556 = vst [vmem:[%s484 + $0x98] sm:$0xff] %v3492
          %3557 = vst [vmem:[%s484 + $0xa0] sm:$0xff] %v3493
          %3558 = vst [vmem:[%s484 + $0xa8] sm:$0xff] %v3494
          %3559 = vst [vmem:[%s484 + $0xb0] sm:$0xff] %v3495
          %3560 = vst [vmem:[%s484 + $0xb8] sm:$0xff] %v3496
          %3561 = vst [vmem:[%s484 + $0xc0] sm:$0xff] %v3497
          %3562 = vst [vmem:[%s484 + $0xc8] sm:$0xff] %v3498
          %3563 = vst [vmem:[%s484 + $0xd0] sm:$0xff] %v3499
          %3564 = vst [vmem:[%s484 + $0xd8] sm:$0xff] %v3500
          %3565 = vst [vmem:[%s484 + $0xe0] sm:$0xff] %v3501
          %3566 = vst [vmem:[%s484 + $0xe8] sm:$0xff] %v3502
          %3567 = vst [vmem:[%s484 + $0xf0] sm:$0xff] %v3503
          %3568 = vst [vmem:[%s484 + $0xf8] sm:$0xff] %v3504
          %3569 = vst [vmem:[%s484 + $0x100] sm:$0xff] %v3505
          %3570 = vst [vmem:[%s484 + $0x108] sm:$0xff] %v3506
          %3571 = vst [vmem:[%s484 + $0x110] sm:$0xff] %v3507
          %3572 = vst [vmem:[%s484 + $0x118] sm:$0xff] %v3508
          %3573 = vst [vmem:[%s484 + $0x120] sm:$0xff] %v3509
          %3574 = vst [vmem:[%s484 + $0x128] sm:$0xff] %v3510
          %3575 = vst [vmem:[%s484 + $0x130] sm:$0xff] %v3511
          %3576 = vst [vmem:[%s484 + $0x138] sm:$0xff] %v3512
          %3577 = vst [vmem:[%s484 + $0x140] sm:$0xff] %v3513
          %3578 = vst [vmem:[%s484 + $0x148] sm:$0xff] %v3514
          %3579 = vst [vmem:[%s484 + $0x150] sm:$0xff] %v3515
          %3580 = vst [vmem:[%s484 + $0x158] sm:$0xff] %v3516
          %3581 = vst [vmem:[%s484 + $0x160] sm:$0xff] %v3517
          %3582 = vst [vmem:[%s484 + $0x168] sm:$0xff] %v3518
          %3583 = vst [vmem:[%s484 + $0x170] sm:$0xff] %v3519
          %3584 = vst [vmem:[%s484 + $0x178] sm:$0xff] %v3520
          %3585 = vst [vmem:[%s484 + $0x180] sm:$0xff] %v3521
          %3586 = vst [vmem:[%s484 + $0x188] sm:$0xff] %v3522
          %3587 = vst [vmem:[%s484 + $0x190] sm:$0xff] %v3523
          %3588 = vst [vmem:[%s484 + $0x198] sm:$0xff] %v3524
          %3589 = vst [vmem:[%s484 + $0x1a0] sm:$0xff] %v3525
          %3590 = vst [vmem:[%s484 + $0x1a8] sm:$0xff] %v3526
          %3591 = vst [vmem:[%s484 + $0x1b0] sm:$0xff] %v3527
          %3592 = vst [vmem:[%s484 + $0x1b8] sm:$0xff] %v3528
          %3593 = vst [vmem:[%s484 + $0x1c0] sm:$0xff] %v3529
          %3594 = vst [vmem:[%s484 + $0x1c8] sm:$0xff] %v3530
          %3595 = vst [vmem:[%s484 + $0x1d0] sm:$0xff] %v3531
          %3596 = vst [vmem:[%s484 + $0x1d8] sm:$0xff] %v3532
          %3597 = vst [vmem:[%s484 + $0x1e0] sm:$0xff] %v3533
          %3598 = vst [vmem:[%s484 + $0x1e8] sm:$0xff] %v3534
          %3599 = vst [vmem:[%s484 + $0x1f0] sm:$0xff] %v3535
          %3600 = vst [vmem:[%s484 + $0x1f8] sm:$0xff] %v3536
          %v3601 = vsub.f32 %v3473, %v514
          %v3602 = vsub.f32 %v3474, %v515
          %v3603 = vsub.f32 %v3475, %v516
          %v3604 = vsub.f32 %v3476, %v517
          %v3605 = vsub.f32 %v3477, %v518
          %v3606 = vsub.f32 %v3478, %v519
          %v3607 = vsub.f32 %v3479, %v520
          %v3608 = vsub.f32 %v3480, %v521
          %v3609 = vsub.f32 %v3481, %v522
          %v3610 = vsub.f32 %v3482, %v523
          %v3611 = vsub.f32 %v3483, %v524
          %v3612 = vsub.f32 %v3484, %v525
          %v3613 = vsub.f32 %v3485, %v526
          %v3614 = vsub.f32 %v3486, %v527
          %v3615 = vsub.f32 %v3487, %v528
          %v3616 = vsub.f32 %v3488, %v529
          %v3617 = vsub.f32 %v3489, %v530
          %v3618 = vsub.f32 %v3490, %v531
          %v3619 = vsub.f32 %v3491, %v532
          %v3620 = vsub.f32 %v3492, %v533
          %v3621 = vsub.f32 %v3493, %v534
          %v3622 = vsub.f32 %v3494, %v535
          %v3623 = vsub.f32 %v3495, %v536
          %v3624 = vsub.f32 %v3496, %v537
          %v3625 = vsub.f32 %v3497, %v538
          %v3626 = vsub.f32 %v3498, %v539
          %v3627 = vsub.f32 %v3499, %v540
          %v3628 = vsub.f32 %v3500, %v541
          %v3629 = vsub.f32 %v3501, %v542
          %v3630 = vsub.f32 %v3502, %v543
          %v3631 = vsub.f32 %v3503, %v544
          %v3632 = vsub.f32 %v3504, %v545
          %v3633 = vsub.f32 %v3505, %v546
          %v3634 = vsub.f32 %v3506, %v547
          %v3635 = vsub.f32 %v3507, %v548
          %v3636 = vsub.f32 %v3508, %v549
          %v3637 = vsub.f32 %v3509, %v550
          %v3638 = vsub.f32 %v3510, %v551
          %v3639 = vsub.f32 %v3511, %v552
          %v3640 = vsub.f32 %v3512, %v553
          %v3641 = vsub.f32 %v3513, %v554
          %v3642 = vsub.f32 %v3514, %v555
          %v3643 = vsub.f32 %v3515, %v556
          %v3644 = vsub.f32 %v3516, %v557
          %v3645 = vsub.f32 %v3517, %v558
          %v3646 = vsub.f32 %v3518, %v559
          %v3647 = vsub.f32 %v3519, %v560
          %v3648 = vsub.f32 %v3520, %v561
          %v3649 = vsub.f32 %v3521, %v562
          %v3650 = vsub.f32 %v3522, %v563
          %v3651 = vsub.f32 %v3523, %v564
          %v3652 = vsub.f32 %v3524, %v565
          %v3653 = vsub.f32 %v3525, %v566
          %v3654 = vsub.f32 %v3526, %v567
          %v3655 = vsub.f32 %v3527, %v568
          %v3656 = vsub.f32 %v3528, %v569
          %v3657 = vsub.f32 %v3529, %v570
          %v3658 = vsub.f32 %v3530, %v571
          %v3659 = vsub.f32 %v3531, %v572
          %v3660 = vsub.f32 %v3532, %v573
          %v3661 = vsub.f32 %v3533, %v574
          %v3662 = vsub.f32 %v3534, %v575
          %v3663 = vsub.f32 %v3535, %v576
          %v3664 = vsub.f32 %v3536, %v577
          %v3665 = vmul.f32 %v3601, %v3601
          %v3666 = vmul.f32 %v3602, %v3602
          %v3667 = vmul.f32 %v3603, %v3603
          %v3668 = vmul.f32 %v3604, %v3604
          %v3669 = vmul.f32 %v3605, %v3605
          %v3670 = vmul.f32 %v3606, %v3606
          %v3671 = vmul.f32 %v3607, %v3607
          %v3672 = vmul.f32 %v3608, %v3608
          %v3673 = vmul.f32 %v3609, %v3609
          %v3674 = vmul.f32 %v3610, %v3610
          %v3675 = vmul.f32 %v3611, %v3611
          %v3676 = vmul.f32 %v3612, %v3612
          %v3677 = vmul.f32 %v3613, %v3613
          %v3678 = vmul.f32 %v3614, %v3614
          %v3679 = vmul.f32 %v3615, %v3615
          %v3680 = vmul.f32 %v3616, %v3616
          %v3681 = vmul.f32 %v3617, %v3617
          %v3682 = vmul.f32 %v3618, %v3618
          %v3683 = vmul.f32 %v3619, %v3619
          %v3684 = vmul.f32 %v3620, %v3620
          %v3685 = vmul.f32 %v3621, %v3621
          %v3686 = vmul.f32 %v3622, %v3622
          %v3687 = vmul.f32 %v3623, %v3623
          %v3688 = vmul.f32 %v3624, %v3624
          %v3689 = vmul.f32 %v3625, %v3625
          %v3690 = vmul.f32 %v3626, %v3626
          %v3691 = vmul.f32 %v3627, %v3627
          %v3692 = vmul.f32 %v3628, %v3628
          %v3693 = vmul.f32 %v3629, %v3629
          %v3694 = vmul.f32 %v3630, %v3630
          %v3695 = vmul.f32 %v3631, %v3631
          %v3696 = vmul.f32 %v3632, %v3632
          %v3697 = vmul.f32 %v3633, %v3633
          %v3698 = vmul.f32 %v3634, %v3634
          %v3699 = vmul.f32 %v3635, %v3635
          %v3700 = vmul.f32 %v3636, %v3636
          %v3701 = vmul.f32 %v3637, %v3637
          %v3702 = vmul.f32 %v3638, %v3638
          %v3703 = vmul.f32 %v3639, %v3639
          %v3704 = vmul.f32 %v3640, %v3640
          %v3705 = vmul.f32 %v3641, %v3641
          %v3706 = vmul.f32 %v3642, %v3642
          %v3707 = vmul.f32 %v3643, %v3643
          %v3708 = vmul.f32 %v3644, %v3644
          %v3709 = vmul.f32 %v3645, %v3645
          %v3710 = vmul.f32 %v3646, %v3646
          %v3711 = vmul.f32 %v3647, %v3647
          %v3712 = vmul.f32 %v3648, %v3648
          %v3713 = vmul.f32 %v3649, %v3649
          %v3714 = vmul.f32 %v3650, %v3650
          %v3715 = vmul.f32 %v3651, %v3651
          %v3716 = vmul.f32 %v3652, %v3652
          %v3717 = vmul.f32 %v3653, %v3653
          %v3718 = vmul.f32 %v3654, %v3654
          %v3719 = vmul.f32 %v3655, %v3655
          %v3720 = vmul.f32 %v3656, %v3656
          %v3721 = vmul.f32 %v3657, %v3657
          %v3722 = vmul.f32 %v3658, %v3658
          %v3723 = vmul.f32 %v3659, %v3659
          %v3724 = vmul.f32 %v3660, %v3660
          %v3725 = vmul.f32 %v3661, %v3661
          %v3726 = vmul.f32 %v3662, %v3662
          %v3727 = vmul.f32 %v3663, %v3663
          %v3728 = vmul.f32 %v3664, %v3664
          %v3729 = vadd.f32 %v3665, %v3667
          %v3730 = vadd.f32 %v3729, %v3669
          %v3731 = vadd.f32 %v3730, %v3671
          %v3732 = vadd.f32 %v3731, %v3673
          %v3733 = vadd.f32 %v3732, %v3675
          %v3734 = vadd.f32 %v3733, %v3677
          %v3735 = vadd.f32 %v3734, %v3679
          %v3736 = vadd.f32 %v3735, %v3681
          %v3737 = vadd.f32 %v3736, %v3683
          %v3738 = vadd.f32 %v3737, %v3685
          %v3739 = vadd.f32 %v3738, %v3687
          %v3740 = vadd.f32 %v3739, %v3689
          %v3741 = vadd.f32 %v3740, %v3691
          %v3742 = vadd.f32 %v3741, %v3693
          %v3743 = vadd.f32 %v3742, %v3695
          %v3744 = vadd.f32 %v3743, %v3697
          %v3745 = vadd.f32 %v3744, %v3699
          %v3746 = vadd.f32 %v3745, %v3701
          %v3747 = vadd.f32 %v3746, %v3703
          %v3748 = vadd.f32 %v3747, %v3705
          %v3749 = vadd.f32 %v3748, %v3707
          %v3750 = vadd.f32 %v3749, %v3709
          %v3751 = vadd.f32 %v3750, %v3711
          %v3752 = vadd.f32 %v3751, %v3713
          %v3753 = vadd.f32 %v3752, %v3715
          %v3754 = vadd.f32 %v3753, %v3717
          %v3755 = vadd.f32 %v3754, %v3719
          %v3756 = vadd.f32 %v3755, %v3721
          %v3757 = vadd.f32 %v3756, %v3723
          %v3758 = vadd.f32 %v3757, %v3725
          %v3759 = vadd.f32 %v3758, %v3727
          %v3760 = vrot.slane %v3759, 4
          %v3761 = vadd.f32 %v3759, %v3760
          %v3762 = vrot.slane %v3761, 2
          %v3763 = vadd.f32 %v3761, %v3762
          %v3764 = vrot.slane %v3763, 1
          %v3765 = vadd.f32 %v3763, %v3764
          %v3766 = vadd.f32 %v3666, %v3668
          %v3767 = vadd.f32 %v3766, %v3670
          %v3768 = vadd.f32 %v3767, %v3672
          %v3769 = vadd.f32 %v3768, %v3674
          %v3770 = vadd.f32 %v3769, %v3676
          %v3771 = vadd.f32 %v3770, %v3678
          %v3772 = vadd.f32 %v3771, %v3680
          %v3773 = vadd.f32 %v3772, %v3682
          %v3774 = vadd.f32 %v3773, %v3684
          %v3775 = vadd.f32 %v3774, %v3686
          %v3776 = vadd.f32 %v3775, %v3688
          %v3777 = vadd.f32 %v3776, %v3690
          %v3778 = vadd.f32 %v3777, %v3692
          %v3779 = vadd.f32 %v3778, %v3694
          %v3780 = vadd.f32 %v3779, %v3696
          %v3781 = vadd.f32 %v3780, %v3698
          %v3782 = vadd.f32 %v3781, %v3700
          %v3783 = vadd.f32 %v3782, %v3702
          %v3784 = vadd.f32 %v3783, %v3704
          %v3785 = vadd.f32 %v3784, %v3706
          %v3786 = vadd.f32 %v3785, %v3708
          %v3787 = vadd.f32 %v3786, %v3710
          %v3788 = vadd.f32 %v3787, %v3712
          %v3789 = vadd.f32 %v3788, %v3714
          %v3790 = vadd.f32 %v3789, %v3716
          %v3791 = vadd.f32 %v3790, %v3718
          %v3792 = vadd.f32 %v3791, %v3720
          %v3793 = vadd.f32 %v3792, %v3722
          %v3794 = vadd.f32 %v3793, %v3724
          %v3795 = vadd.f32 %v3794, %v3726
          %v3796 = vadd.f32 %v3795, %v3728
          %v3797 = vrot.slane %v3796, 4
          %v3798 = vadd.f32 %v3796, %v3797
          %v3799 = vrot.slane %v3798, 2
          %v3800 = vadd.f32 %v3798, %v3799
          %v3801 = vrot.slane %v3800, 1
          %v3802 = vadd.f32 %v3800, %v3801
          %v3805 = vrot.slane %v3802, 7
          %v3806 = vsel %vm2101, %v3765, %v3805
          %vm3808 = vcmp.lt.s32.totalorder %v2108, 256
          %vm3809 = vmand %vm2109, %vm3808
          %3810 = vst.msk [vmem:[%s498] sm:$0x3] %vm3809, %v3806
        $region68: #{tpu_custom_call.1} parent=39 // pred_fallthru
          _
        %s3811 = sand.u32 %s183, 1
        %s3812 = scalar_lea.sflag [#allocation5], %s3811
        %s3813 = sand.u32 %s183, 1
        %s3814 = smul.addr %s3813, 512
        %s3815 = scalar_lea.vmem [#allocation12], %s3814
        %s3816 = sand.u32 %s38, 1
        %s3817 = scalar_lea.sflag [#allocation14], %s3816
        %s3818 = sand.u32 %s211, 1
        %s3819 = smul.addr %s3818, 1024
        %s3820 = scalar_lea.vmem [#allocation13], %s3819
        %s3821 = sand.u32 %s38, 1
        %s3822 = scalar_lea.sflag [#allocation14], %s3821
        %s3823 = sand.u32 %s237, 1
        %s3824 = smul.addr %s3823, 2
        %s3825 = scalar_lea.vmem [#allocation15], %s3824
        %s3826 = sand.u32 %s265, 1
        %s3827 = scalar_lea.sflag [#allocation17], %s3826
        %s3828 = sand.u32 %s265, 1
        %s3829 = smul.addr %s3828, 4
        %s3830 = scalar_lea.vmem [#allocation16], %s3829
        // Predicated region
        $region69: #{tpu_custom_call.1} parent=39 // pred_check
          %p3831 = pneg %p193
        $region70: #{tpu_custom_call.1} parent=39 // pred_check_branch
          %3833 = sbr.rel (%p3831) target = $region72
        $region71: #{tpu_custom_call.1} parent=39 // pred_region
          %s3834 = smul.u32 32, %s42
          %3836 = vsyncadd %s3812, 0
          %s3837 = smul.addr %s3834, 2
          %s3838 = smul.addr %s3837, 8
          %s3839 = scalar_lea.hbm %s5, %s3838
          %s3840 = sshll.u32 %s3815, 4
          %s3841 = int_to_ptr.vmem [resolvable:$true] %s3840
          %s3842 = sshll.u32 %s3839, 4
          %s3843 = int_to_ptr.hbm [resolvable:$true] %s3842
          %3848 = dma.vmem_to_hbm [thread:$0]  %s3841, 8192, %s3843, %s3812, 256, 256, 16
        $region72: #{tpu_custom_call.1} parent=39 // pred_fallthru
          _
        // Predicated region
        $region73: #{tpu_custom_call.1} parent=39 // pred_check
          %p3849 = pneg %p221
        $region74: #{tpu_custom_call.1} parent=39 // pred_check_branch
          %3851 = sbr.rel (%p3849) target = $region76
        $region75: #{tpu_custom_call.1} parent=39 // pred_region
          %s3852 = smul.u32 32, %s42
          %s3853 = smul.u32 4, %s43
          %3855 = vsyncadd %s3817, 0
          %s3856 = smul.addr %s3852, 8
          %s3857 = sadd.s32 %s3853, %s3856
          %s3858 = smul.addr %s3857, 8
          %s3859 = scalar_lea.hbm %s6, %s3858
          %s3860 = sshll.u32 %s3820, 4
          %s3861 = int_to_ptr.vmem [resolvable:$true] %s3860
          %s3862 = sshll.u32 %s3859, 4
          %s3863 = int_to_ptr.hbm [resolvable:$true] %s3862
          %3868 = dma.vmem_to_hbm [thread:$0]  %s3861, 16384, %s3863, %s3817, 512, 1024, 32
        $region76: #{tpu_custom_call.1} parent=39 // pred_fallthru
          _
        // Predicated region
        $region77: #{tpu_custom_call.1} parent=39 // pred_check
          %p3869 = pneg %p247
        $region78: #{tpu_custom_call.1} parent=39 // pred_check_branch
          %3871 = sbr.rel (%p3869) target = $region80
        $region79: #{tpu_custom_call.1} parent=39 // pred_region
          %3873 = vsyncadd %s3822, 0
          %s3874 = smul.addr %s42, 2
          %s3875 = scalar_lea.hbm %s7, %s3874
          %s3877 = sshll.u32 %s3825, 4
          %s3878 = int_to_ptr.vmem [resolvable:$true] %s3877
          %s3879 = sshll.u32 %s3875, 4
          %s3880 = int_to_ptr.hbm [resolvable:$true] %s3879
          %3882 = dma.vmem_to_hbm [thread:$0]  %s3878, 32, %s3880, %s3822
        $region80: #{tpu_custom_call.1} parent=39 // pred_fallthru
          _
        // Predicated region
        $region81: #{tpu_custom_call.1} parent=39 // pred_check
          %p3883 = pneg %p275
        $region82: #{tpu_custom_call.1} parent=39 // pred_check_branch
          %3885 = sbr.rel (%p3883) target = $region84
        $region83: #{tpu_custom_call.1} parent=39 // pred_region
          %s3886 = smul.u32 4, %s43
          %3888 = vsyncadd %s3827, 0
          %s3889 = smul.addr %s42, 8
          %s3890 = sadd.s32 %s3886, %s3889
          %s3891 = scalar_lea.hbm %s8, %s3890
          %s3893 = sshll.u32 %s3830, 4
          %s3894 = int_to_ptr.vmem [resolvable:$true] %s3893
          %s3895 = sshll.u32 %s3891, 4
          %s3896 = int_to_ptr.hbm [resolvable:$true] %s3895
          %3898 = dma.vmem_to_hbm [thread:$0]  %s3894, 64, %s3896, %s3827
        $region84: #{tpu_custom_call.1} parent=39 // pred_fallthru
          _
      $region40: #{tpu_custom_call.1} parent=5 // pred_fallthru
        _
      %p3899 = scmp.le.s32.totalorder 2, %s33
      // Predicated region
      $region85: #{tpu_custom_call.1} parent=5 // pred_check
        %p3900 = pneg %p3899
      $region86: #{tpu_custom_call.1} parent=5 // pred_check_branch
        %3902 = sbr.rel (%p3900) target = $region88
      $region87: #{tpu_custom_call.1} parent=5 // pred_region
        %s3903 = ssub.s32 %s33, 2
        // Predicated region
        $region89: #{tpu_custom_call.1} parent=87 // pred_check
          %p3904 = pneg %p199
        $region90: #{tpu_custom_call.1} parent=87 // pred_check_branch
          %3906 = sbr.rel (%p3904) target = $region92
        $region91: #{tpu_custom_call.1} parent=87 // pred_region
          %s3907 = sand.u32 %s184, 1
          %s3908 = scalar_lea.sflag [#allocation5], %s3907
          %s3909 = sand.u32 %s184, 1
          %s3910 = smul.addr %s3909, 512
          %s3911 = scalar_lea.vmem [#allocation12], %s3910
          %3913 = dma.done %s3908, 8192
        $region92: #{tpu_custom_call.1} parent=87 // pred_fallthru
          _
        // Predicated region
        $region93: #{tpu_custom_call.1} parent=87 // pred_check
          %p3914 = pneg %p227
        $region94: #{tpu_custom_call.1} parent=87 // pred_check_branch
          %3916 = sbr.rel (%p3914) target = $region96
        $region95: #{tpu_custom_call.1} parent=87 // pred_region
          %s3917 = sand.u32 %s39, 1
          %s3918 = scalar_lea.sflag [#allocation14], %s3917
          %s3919 = sand.u32 %s212, 1
          %s3920 = smul.addr %s3919, 1024
          %s3921 = scalar_lea.vmem [#allocation13], %s3920
          %3923 = dma.done %s3918, 16384
        $region96: #{tpu_custom_call.1} parent=87 // pred_fallthru
          _
        // Predicated region
        $region97: #{tpu_custom_call.1} parent=87 // pred_check
          %p3924 = pneg %p253
        $region98: #{tpu_custom_call.1} parent=87 // pred_check_branch
          %3926 = sbr.rel (%p3924) target = $region100
        $region99: #{tpu_custom_call.1} parent=87 // pred_region
          %s3927 = sand.u32 %s39, 1
          %s3928 = scalar_lea.sflag [#allocation14], %s3927
          %s3929 = sand.u32 %s238, 1
          %s3930 = smul.addr %s3929, 2
          %s3931 = scalar_lea.vmem [#allocation15], %s3930
          %3933 = dma.done %s3928, 32
        $region100: #{tpu_custom_call.1} parent=87 // pred_fallthru
          _
        // Predicated region
        $region101: #{tpu_custom_call.1} parent=87 // pred_check
          %p3934 = pneg %p281
        $region102: #{tpu_custom_call.1} parent=87 // pred_check_branch
          %3936 = sbr.rel (%p3934) target = $region104
        $region103: #{tpu_custom_call.1} parent=87 // pred_region
          %s3937 = sand.u32 %s266, 1
          %s3938 = scalar_lea.sflag [#allocation17], %s3937
          %s3939 = sand.u32 %s266, 1
          %s3940 = smul.addr %s3939, 4
          %s3941 = scalar_lea.vmem [#allocation16], %s3940
          %3943 = dma.done %s3938, 64
        $region104: #{tpu_custom_call.1} parent=87 // pred_fallthru
          _
      $region88: #{tpu_custom_call.1} parent=5 // pred_fallthru
        _
    $region6: #{tpu_custom_call.1} parent=1 // loop_footer
      %s37 = sadd.s32 1, %s33
    $region7: #{tpu_custom_call.1} parent=1 // loop_footer_branch
      %32 = sbr.rel target = $region3
    $region8: #{tpu_custom_call.1} parent=1 // loop_exit
      _
    %3944 = vsyncpa [#allocation4], 1
    %s3945 = scalar_lea.sflag [#allocation4], 1
    %3946 = vsyncpa %s3945, 1
    %3947 = vsyncpa [#allocation7], 1
    %s3948 = scalar_lea.sflag [#allocation7], 1
    %3949 = vsyncpa %s3948, 1
    %3950 = vsyncpa [#allocation10], 1
    %s3951 = scalar_lea.sflag [#allocation10], 1
    %3952 = vsyncpa %s3951, 1
    %3953 = vsyncpa [#allocation5], 1
    %s3954 = scalar_lea.sflag [#allocation5], 1
    %3955 = vsyncpa %s3954, 1
    %3956 = vsyncpa [#allocation14], 1
    %s3957 = scalar_lea.sflag [#allocation14], 1
    %3958 = vsyncpa %s3957, 1
    %3959 = vsyncpa [#allocation17], 1
    %s3960 = scalar_lea.sflag [#allocation17], 1
    %3961 = vsyncpa %s3960, 1

</llo_original>
